<compile_context>
chip_gen: v5e
topology: v5e:2x2
jax: 0.10.0
libtpu: 0.0.40
codegen_flags: <defaults>
</compile_context>

<pallas_src>
import functools
import math

import jax
import jax.numpy as jnp
from jax.experimental import pallas as pl
from jax.experimental.pallas import tpu as pltpu

COMPUTE_DTYPE = jnp.bfloat16   # MXU operand dtype; accumulation is always f32
LN_EPS = 1e-5


# ----------------------------- in-kernel helpers ---------------------------- #

def _layernorm(x, g, b, eps=LN_EPS):
    """x: (M, D) f32, g/b: (1, D) f32."""
    mu = jnp.mean(x, axis=-1, keepdims=True)
    xc = x - mu
    var = jnp.mean(xc * xc, axis=-1, keepdims=True)
    return xc * jax.lax.rsqrt(var + eps) * g + b


# ------------------------------- Pallas kernels ----------------------------- #

def _embed_kernel(patches_ref, convw_ref, cls_ref, pos_ref, g_ref, b_ref, o_ref,
                  *, compute_dtype):
    """Fused: patch-embed matmul + class token + positional embedding + ln_pre."""
    p = patches_ref[0].astype(compute_dtype)                   # (Np, C*P*P)
    tok = jnp.dot(p, convw_ref[...], preferred_element_type=jnp.float32)  # (Np, D) f32
    xseq = jnp.concatenate([cls_ref[...], tok], axis=0) + pos_ref[...]    # (S, D)
    y = _layernorm(xseq, g_ref[...], b_ref[...])
    o_ref[0] = y.astype(o_ref.dtype)


def _block_kernel(x_ref, ln1g, ln1b, wqkv, bqkv, wo, bo, ln2g, ln2b,
                  wfc, bfc, wpr, bpr, o_ref, *, heads, compute_dtype):
    """One fused transformer block; residual stream lives in o_ref across the layer axis."""
    layer = pl.program_id(1)

    @pl.when(layer == 0)
    def _():                                   # load residual stream on first layer
        o_ref[...] = x_ref[...]

    xb = o_ref[0].astype(jnp.float32)          # (S, D) residual stream
    S, D = xb.shape
    hd = D // heads
    scale = 1.0 / math.sqrt(hd)

    # ---------------- multi-head self-attention ---------------- #
    h = _layernorm(xb, ln1g[0], ln1b[0])
    qkv = jnp.dot(h.astype(compute_dtype), wqkv[0],
                  preferred_element_type=jnp.float32) + bqkv[0]           # (S, 3D) f32

    head_outs = []
    for hh in range(heads):                    # static unrolled head loop
        qh = (qkv[:, hh * hd:(hh + 1) * hd] * scale).astype(compute_dtype)
        kh = qkv[:, D + hh * hd:D + (hh + 1) * hd].astype(compute_dtype)
        vh = qkv[:, 2 * D + hh * hd:2 * D + (hh + 1) * hd].astype(compute_dtype)
        s = jax.lax.dot_general(qh, kh, (((1,), (1,)), ((), ())),
                                preferred_element_type=jnp.float32)       # (S, S)
        s = s - jnp.max(s, axis=-1, keepdims=True)
        p = jnp.exp(s)
        p = p * pl.reciprocal(jnp.sum(p, axis=-1, keepdims=True), approx=True)
        head_outs.append(jnp.dot(p.astype(compute_dtype), vh,
                                 preferred_element_type=jnp.float32))     # (S, hd)
    attn = jnp.concatenate(head_outs, axis=-1)                            # (S, D) lane-dense
    attn = jnp.dot(attn.astype(compute_dtype), wo[0],
                   preferred_element_type=jnp.float32) + bo[0]
    xb = xb + attn

    # ---------------------- MLP (QuickGELU) --------------------- #
    h2 = _layernorm(xb, ln2g[0], ln2b[0])
    f = jnp.dot(h2.astype(compute_dtype), wfc[0],
                preferred_element_type=jnp.float32) + bfc[0]              # (S, mlp)
    f = f * jax.nn.sigmoid(1.702 * f)                                     # CLIP QuickGELU
    m = jnp.dot(f.astype(compute_dtype), wpr[0],
                preferred_element_type=jnp.float32) + bpr[0]              # (S, D)
    xb = xb + m

    o_ref[0] = xb.astype(o_ref.dtype)


def _head_kernel(x_ref, g_ref, b_ref, w_ref, bias_ref, o_ref, *, compute_dtype):
    """Fused ln_post + classifier head (lane-dense, zero-padded output width)."""
    x = x_ref[...].astype(jnp.float32)                                    # (B, D)
    h = _layernorm(x, g_ref[...], b_ref[...])
    y = jnp.dot(h.astype(compute_dtype), w_ref[...],
                preferred_element_type=jnp.float32) + bias_ref[...]
    o_ref[...] = y.astype(o_ref.dtype)


# ------------------------------- host wrappers ------------------------------ #

def pallas_embed(patches, conv_w, cls_emb, pos_emb, ln_g, ln_b):
    B, Np, CPP = patches.shape
    D = conv_w.shape[1]
    S = Np + 1
    return pl.pallas_call(
        functools.partial(_embed_kernel, compute_dtype=COMPUTE_DTYPE),
        out_shape=jax.ShapeDtypeStruct((B, S, D), jnp.float32),
        grid=(B,),
        in_specs=[pl.BlockSpec((1, Np, CPP), lambda b: (b, 0, 0)),
                  pl.BlockSpec((CPP, D), lambda b: (0, 0)),
                  pl.BlockSpec((1, D), lambda b: (0, 0)),
                  pl.BlockSpec((S, D), lambda b: (0, 0)),
                  pl.BlockSpec((1, D), lambda b: (0, 0)),
                  pl.BlockSpec((1, D), lambda b: (0, 0))],
        out_specs=pl.BlockSpec((1, S, D), lambda b: (b, 0, 0)),
        compiler_params=pltpu.CompilerParams(dimension_semantics=("parallel",)),
    )(patches, conv_w, cls_emb, pos_emb, ln_g, ln_b)


_BLOCK_KEYS = ("ln1_g", "ln1_b", "in_proj_w", "in_proj_b", "out_proj_w", "out_proj_b",
               "ln2_g", "ln2_b", "fc_w", "fc_b", "proj_w", "proj_b")


def pallas_transformer(x, blk, *, heads):
    """All transformer layers in one pallas_call: grid = (batch, layer)."""
    B, S, D = x.shape
    L = blk["in_proj_w"].shape[0]

    def wspec(a):   # per-layer weight slab, streamed along the layer axis
        return pl.BlockSpec((1,) + a.shape[1:], lambda b, l: (l, 0, 0))

    return pl.pallas_call(
        functools.partial(_block_kernel, heads=heads, compute_dtype=COMPUTE_DTYPE),
        out_shape=jax.ShapeDtypeStruct((B, S, D), jnp.float32),
        grid=(B, L),
        in_specs=[pl.BlockSpec((1, S, D), lambda b, l: (b, 0, 0))]
                 + [wspec(blk[k]) for k in _BLOCK_KEYS],
        out_specs=pl.BlockSpec((1, S, D), lambda b, l: (b, 0, 0)),
        compiler_params=pltpu.CompilerParams(
            dimension_semantics=("parallel", "arbitrary")),
    )(x, *[blk[k] for k in _BLOCK_KEYS])


def pallas_head(feat, g, b, w_pad, b_pad):
    B, D = feat.shape
    NP = w_pad.shape[1]
    return pl.pallas_call(
        functools.partial(_head_kernel, compute_dtype=COMPUTE_DTYPE),
        out_shape=jax.ShapeDtypeStruct((B, NP), jnp.float32),
        grid=(1,),
        in_specs=[pl.BlockSpec((B, D), lambda i: (0, 0)),
                  pl.BlockSpec((1, D), lambda i: (0, 0)),
                  pl.BlockSpec((1, D), lambda i: (0, 0)),
                  pl.BlockSpec((D, NP), lambda i: (0, 0)),
                  pl.BlockSpec((1, NP), lambda i: (0, 0))],
        out_specs=pl.BlockSpec((B, NP), lambda i: (0, 0)),
    )(feat, g, b, w_pad, b_pad)


# ------------------------------ parameter init ------------------------------ #

def init_params(key, *, C, P, D, heads, layers, mlp_dim, num_patches, num_classes,
                compute_dtype=COMPUTE_DTYPE):
    S = num_patches + 1
    ks = jax.random.split(key, 6 + layers)

    def nrm(k, shape, std=0.02):
        return (std * jax.random.normal(k, shape)).astype(jnp.float32)

    nc_pad = max(128, ((num_classes + 127) // 128) * 128)     # lane-dense head output
    head_w = nrm(ks[3], (D, num_classes))
    head_w_pad = jnp.zeros((D, nc_pad), jnp.float32).at[:, :num_classes].set(head_w)

    params = {
        "conv_w": nrm(ks[0], (C * P * P, D)).astype(compute_dtype),   # conv1, no bias in CLIP
        "class_embedding": nrm(ks[1], (1, D)),
        "pos_embedding": nrm(ks[2], (S, D)),
        "ln_pre_g": jnp.ones((1, D), jnp.float32),
        "ln_pre_b": jnp.zeros((1, D), jnp.float32),
        "ln_post_g": jnp.ones((1, D), jnp.float32),
        "ln_post_b": jnp.zeros((1, D), jnp.float32),
        "head_w": head_w_pad.astype(compute_dtype),
        "head_b": jnp.zeros((1, nc_pad), jnp.float32),
    }

    blk_keys = [jax.random.split(ks[6 + li], 4) for li in range(layers)]

    def stack(fn):
        return jnp.stack([fn(li) for li in range(layers)], axis=0)

    params["blocks"] = {
        "ln1_g": jnp.ones((layers, 1, D), jnp.float32),
        "ln1_b": jnp.zeros((layers, 1, D), jnp.float32),
        "in_proj_w": stack(lambda li: nrm(blk_keys[li][0], (D, 3 * D))).astype(compute_dtype),
        "in_proj_b": jnp.zeros((layers, 1, 3 * D), jnp.float32),
        "out_proj_w": stack(lambda li: nrm(blk_keys[li][1], (D, D))).astype(compute_dtype),
        "out_proj_b": jnp.zeros((layers, 1, D), jnp.float32),
        "ln2_g": jnp.ones((layers, 1, D), jnp.float32),
        "ln2_b": jnp.zeros((layers, 1, D), jnp.float32),
        "fc_w": stack(lambda li: nrm(blk_keys[li][2], (D, mlp_dim))).astype(compute_dtype),
        "fc_b": jnp.zeros((layers, 1, mlp_dim), jnp.float32),
        "proj_w": stack(lambda li: nrm(blk_keys[li][3], (mlp_dim, D))).astype(compute_dtype),
        "proj_b": jnp.zeros((layers, 1, D), jnp.float32),
    }
    return params


# ---------------------------------- forward --------------------------------- #

def ts_model_forward(params, x, *, P, heads, num_classes):
    B, C, H, W = x.shape
    gh, gw = H // P, W // P
    Np = gh * gw

    # conv1 (stride = kernel = P) expressed as patch extraction (layout glue) + fused embed kernel
    patches = (x.reshape(B, C, gh, P, gw, P)
                .transpose(0, 2, 4, 1, 3, 5)
                .reshape(B, Np, C * P * P))

    xf = pallas_embed(patches, params["conv_w"], params["class_embedding"],
                      params["pos_embedding"], params["ln_pre_g"], params["ln_pre_b"])

    xf = pallas_transformer(xf, params["blocks"], heads=heads)   # all layers, one call

    cls_tok = xf[:, 0, :]                                        # (B, D)
    out_pad = pallas_head(cls_tok, params["ln_post_g"], params["ln_post_b"],
                          params["head_w"], params["head_b"])
    return out_pad[:, :num_classes]


# ------------------------------------ main ----------------------------------- #

if __name__ == "__main__":
    # small-but-structurally-faithful CLIP-ViT config
    B, C, H, W = 2, 3, 64, 64        # NCHW image input (PyTorch convention)
    P = 16                            # patch size -> 4x4 = 16 patches, seq = 17
    D = 128                           # width (real CLIP ViT-B/32 uses 768)
    heads = 4
    layers = 2                        # real model has 12 transformer blocks
    mlp_dim = 4 * D
    num_classes = 2

    key = jax.random.PRNGKey(0)
    k_params, k_x = jax.random.split(key)
    params = init_params(k_params, C=C, P=P, D=D, heads=heads, layers=layers,
                         mlp_dim=mlp_dim, num_patches=(H // P) * (W // P),
                         num_classes=num_classes)
    x = jax.random.normal(k_x, (B, C, H, W), dtype=jnp.float32)

    fwd = jax.jit(functools.partial(ts_model_forward, P=P, heads=heads,
                                    num_classes=num_classes))
    out = fwd(params, x)
    jax.block_until_ready(out)
    assert out.shape == (B, num_classes) and out.dtype == jnp.float32
    print("KERNEL_OK")
</pallas_src>

<mosaic_0001>
module attributes {stable_mosaic.version = 11 : i64} {
  func.func @_embed_kernel(%arg0: i32, %arg1: memref<1x16x768xf32, #tpu.memory_space<vmem>>, %arg2: memref<768x128xbf16, #tpu.memory_space<vmem>>, %arg3: memref<1x128xf32, #tpu.memory_space<vmem>>, %arg4: memref<17x128xf32, #tpu.memory_space<vmem>>, %arg5: memref<1x128xf32, #tpu.memory_space<vmem>>, %arg6: memref<1x128xf32, #tpu.memory_space<vmem>>, %arg7: memref<1x17x128xf32, #tpu.memory_space<vmem>>) attributes {dimension_semantics = [#tpu.dimension_semantics<parallel>], iteration_bounds = array<i64: 2>, scalar_prefetch = 0 : i64, scratch_operands = 0 : i64, tpu.core_type = #tpu.core_type<tc>, window_params = [{transform_indices = @transform_0, window_bounds = array<i64: 1, 16, 768>}, {pipeline_mode = #tpu.pipeline_mode<synchronous>, transform_indices = @transform_1, window_bounds = array<i64: 768, 128>}, {pipeline_mode = #tpu.pipeline_mode<synchronous>, transform_indices = @transform_2, window_bounds = array<i64: 1, 128>}, {pipeline_mode = #tpu.pipeline_mode<synchronous>, transform_indices = @transform_3, window_bounds = array<i64: 17, 128>}, {pipeline_mode = #tpu.pipeline_mode<synchronous>, transform_indices = @transform_4, window_bounds = array<i64: 1, 128>}, {pipeline_mode = #tpu.pipeline_mode<synchronous>, transform_indices = @transform_5, window_bounds = array<i64: 1, 128>}, {transform_indices = @transform_6, window_bounds = array<i64: 1, 17, 128>}]} {
    %c0 = arith.constant 0 : index
    %c0_0 = arith.constant 0 : index
    %c0_1 = arith.constant 0 : index
    %0 = vector.load %arg1[%c0, %c0_0, %c0_1] : memref<1x16x768xf32, #tpu.memory_space<vmem>>, vector<1x16x768xf32>
    %1 = vector.shape_cast %0 : vector<1x16x768xf32> to vector<16x768xf32>
    %2 = arith.truncf %1 : vector<16x768xf32> to vector<16x768xbf16>
    %c0_2 = arith.constant 0 : index
    %c0_3 = arith.constant 0 : index
    %3 = vector.load %arg2[%c0_2, %c0_3] : memref<768x128xbf16, #tpu.memory_space<vmem>>, vector<768x128xbf16>
    %cst = arith.constant dense<0.000000e+00> : vector<16x128xf32>
    %4 = tpu.matmul %2, %3, %cst {dimension_numbers = #tpu.dot_dimension_numbers<[1], [0], [0], [1], [0, 0, 1, 1], [], []>} : vector<16x768xbf16>, vector<768x128xbf16>, vector<16x128xf32> -> vector<16x128xf32>
    %c0_4 = arith.constant 0 : index
    %c0_5 = arith.constant 0 : index
    %5 = vector.load %arg3[%c0_4, %c0_5] : memref<1x128xf32, #tpu.memory_space<vmem>>, vector<1x128xf32>
    %6 = tpu.concatenate %5, %4 in 0 : vector<1x128xf32>, vector<16x128xf32> -> vector<17x128xf32>
    %c0_6 = arith.constant 0 : index
    %c0_7 = arith.constant 0 : index
    %7 = vector.load %arg4[%c0_6, %c0_7] : memref<17x128xf32, #tpu.memory_space<vmem>>, vector<17x128xf32>
    %8 = arith.addf %6, %7 : vector<17x128xf32>
    %c0_8 = arith.constant 0 : index
    %c0_9 = arith.constant 0 : index
    %9 = vector.load %arg5[%c0_8, %c0_9] : memref<1x128xf32, #tpu.memory_space<vmem>>, vector<1x128xf32>
    %c0_10 = arith.constant 0 : index
    %c0_11 = arith.constant 0 : index
    %10 = vector.load %arg6[%c0_10, %c0_11] : memref<1x128xf32, #tpu.memory_space<vmem>>, vector<1x128xf32>
    %cst_12 = arith.constant dense<0.000000e+00> : vector<17xf32>
    %11 = vector.multi_reduction <add>, %8, %cst_12 [1] : vector<17x128xf32> to vector<17xf32>
    %12 = vector.shape_cast %11 : vector<17xf32> to vector<17x1xf32>
    %cst_13 = arith.constant 1.280000e+02 : f32
    %13 = vector.broadcast %cst_13 : f32 to vector<17x1xf32>
    %14 = arith.divf %12, %13 : vector<17x1xf32>
    %15 = vector.broadcast %14 : vector<17x1xf32> to vector<17x128xf32>
    %16 = arith.subf %8, %15 : vector<17x128xf32>
    %17 = arith.mulf %16, %16 : vector<17x128xf32>
    %cst_14 = arith.constant dense<0.000000e+00> : vector<17xf32>
    %18 = vector.multi_reduction <add>, %17, %cst_14 [1] : vector<17x128xf32> to vector<17xf32>
    %19 = vector.shape_cast %18 : vector<17xf32> to vector<17x1xf32>
    %cst_15 = arith.constant 1.280000e+02 : f32
    %20 = vector.broadcast %cst_15 : f32 to vector<17x1xf32>
    %21 = arith.divf %19, %20 : vector<17x1xf32>
    %cst_16 = arith.constant 9.99999974E-6 : f32
    %22 = vector.broadcast %cst_16 : f32 to vector<17x1xf32>
    %23 = arith.addf %21, %22 : vector<17x1xf32>
    %24 = math.rsqrt %23 : vector<17x1xf32>
    %25 = vector.broadcast %24 : vector<17x1xf32> to vector<17x128xf32>
    %26 = arith.mulf %16, %25 : vector<17x128xf32>
    %27 = vector.broadcast %9 : vector<1x128xf32> to vector<17x128xf32>
    %28 = arith.mulf %26, %27 : vector<17x128xf32>
    %29 = vector.broadcast %10 : vector<1x128xf32> to vector<17x128xf32>
    %30 = arith.addf %28, %29 : vector<17x128xf32>
    %c0_17 = arith.constant 0 : index
    %c0_18 = arith.constant 0 : index
    %c0_19 = arith.constant 0 : index
    %31 = vector.load %arg7[%c0_17, %c0_18, %c0_19] : memref<1x17x128xf32, #tpu.memory_space<vmem>>, vector<1x17x128xf32>
    %32 = vector.shape_cast %31 : vector<1x17x128xf32> to vector<17x128xf32>
    %33 = vector.shape_cast %30 : vector<17x128xf32> to vector<1x17x128xf32>
    tpu.vector_store %arg7[%c0_17, %c0_18, %c0_19], %33 {strides = array<i32>} : memref<1x17x128xf32, #tpu.memory_space<vmem>>, vector<1x17x128xf32>,
    return
  }
  func.func @transform_0(%arg0: i32) -> (i32, i32, i32) {
    %c0_i32 = arith.constant 0 : i32
    %c0_i32_0 = arith.constant 0 : i32
    %c0_i32_1 = arith.constant 0 : i32
    return %arg0, %c0_i32, %c0_i32_0 : i32, i32, i32
  }
  func.func @transform_1(%arg0: i32) -> (i32, i32) {
    %c0_i32 = arith.constant 0 : i32
    %c0_i32_0 = arith.constant 0 : i32
    %c0_i32_1 = arith.constant 0 : i32
    return %c0_i32, %c0_i32_0 : i32, i32
  }
  func.func @transform_2(%arg0: i32) -> (i32, i32) {
    %c0_i32 = arith.constant 0 : i32
    %c0_i32_0 = arith.constant 0 : i32
    %c0_i32_1 = arith.constant 0 : i32
    return %c0_i32, %c0_i32_0 : i32, i32
  }
  func.func @transform_3(%arg0: i32) -> (i32, i32) {
    %c0_i32 = arith.constant 0 : i32
    %c0_i32_0 = arith.constant 0 : i32
    %c0_i32_1 = arith.constant 0 : i32
    return %c0_i32, %c0_i32_0 : i32, i32
  }
  func.func @transform_4(%arg0: i32) -> (i32, i32) {
    %c0_i32 = arith.constant 0 : i32
    %c0_i32_0 = arith.constant 0 : i32
    %c0_i32_1 = arith.constant 0 : i32
    return %c0_i32, %c0_i32_0 : i32, i32
  }
  func.func @transform_5(%arg0: i32) -> (i32, i32) {
    %c0_i32 = arith.constant 0 : i32
    %c0_i32_0 = arith.constant 0 : i32
    %c0_i32_1 = arith.constant 0 : i32
    return %c0_i32, %c0_i32_0 : i32, i32
  }
  func.func @transform_6(%arg0: i32) -> (i32, i32, i32) {
    %c0_i32 = arith.constant 0 : i32
    %c0_i32_0 = arith.constant 0 : i32
    %c0_i32_1 = arith.constant 0 : i32
    return %arg0, %c0_i32, %c0_i32_0 : i32, i32, i32
  }
}

module attributes {stable_mosaic.version = 11 : i64} {
  func.func @_block_kernel(%arg0: i32, %arg1: i32, %arg2: memref<1x17x128xf32, #tpu.memory_space<vmem>>, %arg3: memref<1x1x128xf32, #tpu.memory_space<vmem>>, %arg4: memref<1x1x128xf32, #tpu.memory_space<vmem>>, %arg5: memref<1x128x384xbf16, #tpu.memory_space<vmem>>, %arg6: memref<1x1x384xf32, #tpu.memory_space<vmem>>, %arg7: memref<1x128x128xbf16, #tpu.memory_space<vmem>>, %arg8: memref<1x1x128xf32, #tpu.memory_space<vmem>>, %arg9: memref<1x1x128xf32, #tpu.memory_space<vmem>>, %arg10: memref<1x1x128xf32, #tpu.memory_space<vmem>>, %arg11: memref<1x128x512xbf16, #tpu.memory_space<vmem>>, %arg12: memref<1x1x512xf32, #tpu.memory_space<vmem>>, %arg13: memref<1x512x128xbf16, #tpu.memory_space<vmem>>, %arg14: memref<1x1x128xf32, #tpu.memory_space<vmem>>, %arg15: memref<1x17x128xf32, #tpu.memory_space<vmem>>) attributes {dimension_semantics = [#tpu.dimension_semantics<parallel>, #tpu.dimension_semantics<arbitrary>], iteration_bounds = array<i64: 2, 2>, scalar_prefetch = 0 : i64, scratch_operands = 0 : i64, tpu.core_type = #tpu.core_type<tc>, window_params = [{transform_indices = @transform_0, window_bounds = array<i64: 1, 17, 128>}, {transform_indices = @transform_1, window_bounds = array<i64: 1, 1, 128>}, {transform_indices = @transform_2, window_bounds = array<i64: 1, 1, 128>}, {transform_indices = @transform_3, window_bounds = array<i64: 1, 128, 384>}, {transform_indices = @transform_4, window_bounds = array<i64: 1, 1, 384>}, {transform_indices = @transform_5, window_bounds = array<i64: 1, 128, 128>}, {transform_indices = @transform_6, window_bounds = array<i64: 1, 1, 128>}, {transform_indices = @transform_7, window_bounds = array<i64: 1, 1, 128>}, {transform_indices = @transform_8, window_bounds = array<i64: 1, 1, 128>}, {transform_indices = @transform_9, window_bounds = array<i64: 1, 128, 512>}, {transform_indices = @transform_10, window_bounds = array<i64: 1, 1, 512>}, {transform_indices = @transform_11, window_bounds = array<i64: 1, 512, 128>}, {transform_indices = @transform_12, window_bounds = array<i64: 1, 1, 128>}, {transform_indices = @transform_13, window_bounds = array<i64: 1, 17, 128>}]} {
    %c0_i32 = arith.constant 0 : i32
    %0 = arith.cmpi eq, %arg1, %c0_i32 : i32
    %1 = arith.extui %0 : i1 to i32
    %c0_i32_0 = arith.constant 0 : i32
    %2 = arith.cmpi ne, %1, %c0_i32_0 : i32
    scf.if %2 {
      %c0_77 = arith.constant 0 : index
      %c0_78 = arith.constant 0 : index
      %c0_79 = arith.constant 0 : index
      %183 = vector.load %arg2[%c0_77, %c0_78, %c0_79] : memref<1x17x128xf32, #tpu.memory_space<vmem>>, vector<1x17x128xf32>
      %c0_80 = arith.constant 0 : index
      %c0_81 = arith.constant 0 : index
      %c0_82 = arith.constant 0 : index
      %184 = vector.load %arg15[%c0_80, %c0_81, %c0_82] : memref<1x17x128xf32, #tpu.memory_space<vmem>>, vector<1x17x128xf32>
      tpu.vector_store %arg15[%c0_80, %c0_81, %c0_82], %183 {strides = array<i32>} : memref<1x17x128xf32, #tpu.memory_space<vmem>>, vector<1x17x128xf32>,
    } else {
    }
    %c0 = arith.constant 0 : index
    %c0_1 = arith.constant 0 : index
    %c0_2 = arith.constant 0 : index
    %3 = vector.load %arg15[%c0, %c0_1, %c0_2] : memref<1x17x128xf32, #tpu.memory_space<vmem>>, vector<1x17x128xf32>
    %4 = vector.shape_cast %3 : vector<1x17x128xf32> to vector<17x128xf32>
    %c0_3 = arith.constant 0 : index
    %c0_4 = arith.constant 0 : index
    %c0_5 = arith.constant 0 : index
    %5 = vector.load %arg3[%c0_3, %c0_4, %c0_5] : memref<1x1x128xf32, #tpu.memory_space<vmem>>, vector<1x1x128xf32>
    %6 = vector.shape_cast %5 : vector<1x1x128xf32> to vector<1x128xf32>
    %c0_6 = arith.constant 0 : index
    %c0_7 = arith.constant 0 : index
    %c0_8 = arith.constant 0 : index
    %7 = vector.load %arg4[%c0_6, %c0_7, %c0_8] : memref<1x1x128xf32, #tpu.memory_space<vmem>>, vector<1x1x128xf32>
    %8 = vector.shape_cast %7 : vector<1x1x128xf32> to vector<1x128xf32>
    %cst = arith.constant dense<0.000000e+00> : vector<17xf32>
    %9 = vector.multi_reduction <add>, %4, %cst [1] : vector<17x128xf32> to vector<17xf32>
    %10 = vector.shape_cast %9 : vector<17xf32> to vector<17x1xf32>
    %cst_9 = arith.constant 1.280000e+02 : f32
    %11 = vector.broadcast %cst_9 : f32 to vector<17x1xf32>
    %12 = arith.divf %10, %11 : vector<17x1xf32>
    %13 = vector.broadcast %12 : vector<17x1xf32> to vector<17x128xf32>
    %14 = arith.subf %4, %13 : vector<17x128xf32>
    %15 = arith.mulf %14, %14 : vector<17x128xf32>
    %cst_10 = arith.constant dense<0.000000e+00> : vector<17xf32>
    %16 = vector.multi_reduction <add>, %15, %cst_10 [1] : vector<17x128xf32> to vector<17xf32>
    %17 = vector.shape_cast %16 : vector<17xf32> to vector<17x1xf32>
    %cst_11 = arith.constant 1.280000e+02 : f32
    %18 = vector.broadcast %cst_11 : f32 to vector<17x1xf32>
    %19 = arith.divf %17, %18 : vector<17x1xf32>
    %cst_12 = arith.constant 9.99999974E-6 : f32
    %20 = vector.broadcast %cst_12 : f32 to vector<17x1xf32>
    %21 = arith.addf %19, %20 : vector<17x1xf32>
    %22 = math.rsqrt %21 : vector<17x1xf32>
    %23 = vector.broadcast %22 : vector<17x1xf32> to vector<17x128xf32>
    %24 = arith.mulf %14, %23 : vector<17x128xf32>
    %25 = vector.broadcast %6 : vector<1x128xf32> to vector<17x128xf32>
    %26 = arith.mulf %24, %25 : vector<17x128xf32>
    %27 = vector.broadcast %8 : vector<1x128xf32> to vector<17x128xf32>
    %28 = arith.addf %26, %27 : vector<17x128xf32>
    %29 = arith.truncf %28 : vector<17x128xf32> to vector<17x128xbf16>
    %c0_13 = arith.constant 0 : index
    %c0_14 = arith.constant 0 : index
    %c0_15 = arith.constant 0 : index
    %30 = vector.load %arg5[%c0_13, %c0_14, %c0_15] : memref<1x128x384xbf16, #tpu.memory_space<vmem>>, vector<1x128x384xbf16>
    %31 = vector.shape_cast %30 : vector<1x128x384xbf16> to vector<128x384xbf16>
    %cst_16 = arith.constant dense<0.000000e+00> : vector<17x384xf32>
    %32 = tpu.matmul %29, %31, %cst_16 {dimension_numbers = #tpu.dot_dimension_numbers<[1], [0], [0], [1], [0, 0, 1, 1], [], []>} : vector<17x128xbf16>, vector<128x384xbf16>, vector<17x384xf32> -> vector<17x384xf32>
    %c0_17 = arith.constant 0 : index
    %c0_18 = arith.constant 0 : index
    %c0_19 = arith.constant 0 : index
    %33 = vector.load %arg6[%c0_17, %c0_18, %c0_19] : memref<1x1x384xf32, #tpu.memory_space<vmem>>, vector<1x1x384xf32>
    %34 = vector.shape_cast %33 : vector<1x1x384xf32> to vector<1x384xf32>
    %35 = vector.broadcast %34 : vector<1x384xf32> to vector<17x384xf32>
    %36 = arith.addf %32, %35 : vector<17x384xf32>
    %37 = vector.extract_strided_slice %36 {offsets = [0, 0], sizes = [17, 32], strides = [1, 1]} : vector<17x384xf32> to vector<17x32xf32>
    %cst_20 = arith.constant 0.176776692 : f32
    %38 = vector.broadcast %cst_20 : f32 to vector<17x32xf32>
    %39 = arith.mulf %37, %38 : vector<17x32xf32>
    %40 = arith.truncf %39 : vector<17x32xf32> to vector<17x32xbf16>
    %41 = vector.extract_strided_slice %36 {offsets = [0, 128], sizes = [17, 32], strides = [1, 1]} : vector<17x384xf32> to vector<17x32xf32>
    %42 = arith.truncf %41 : vector<17x32xf32> to vector<17x32xbf16>
    %43 = vector.extract_strided_slice %36 {offsets = [0, 256], sizes = [17, 32], strides = [1, 1]} : vector<17x384xf32> to vector<17x32xf32>
    %44 = arith.truncf %43 : vector<17x32xf32> to vector<17x32xbf16>
    %cst_21 = arith.constant dense<0.000000e+00> : vector<17x17xf32>
    %45 = tpu.matmul %40, %42, %cst_21 {dimension_numbers = #tpu.dot_dimension_numbers<[1], [1], [0], [0], [0, 0, 1, 0], [], []>} : vector<17x32xbf16>, vector<17x32xbf16>, vector<17x17xf32> -> vector<17x17xf32>
    %cst_22 = arith.constant dense<0xFF800000> : vector<17xf32>
    %46 = vector.multi_reduction <maximumf>, %45, %cst_22 [1] : vector<17x17xf32> to vector<17xf32>
    %47 = vector.shape_cast %46 : vector<17xf32> to vector<17x1xf32>
    %48 = vector.broadcast %47 : vector<17x1xf32> to vector<17x17xf32>
    %49 = arith.subf %45, %48 : vector<17x17xf32>
    %50 = math.exp %49 : vector<17x17xf32>
    %cst_23 = arith.constant dense<0.000000e+00> : vector<17xf32>
    %51 = vector.multi_reduction <add>, %50, %cst_23 [1] : vector<17x17xf32> to vector<17xf32>
    %52 = vector.shape_cast %51 : vector<17xf32> to vector<17x1xf32>
    %53 = tpu.reciprocal %52 {approx = true} : vector<17x1xf32> -> vector<17x1xf32>
    %54 = vector.broadcast %53 : vector<17x1xf32> to vector<17x17xf32>
    %55 = arith.mulf %50, %54 : vector<17x17xf32>
    %56 = arith.truncf %55 : vector<17x17xf32> to vector<17x17xbf16>
    %cst_24 = arith.constant dense<0.000000e+00> : vector<17x32xf32>
    %57 = tpu.matmul %56, %44, %cst_24 {dimension_numbers = #tpu.dot_dimension_numbers<[1], [0], [0], [1], [0, 0, 1, 1], [], []>} : vector<17x17xbf16>, vector<17x32xbf16>, vector<17x32xf32> -> vector<17x32xf32>
    %58 = vector.extract_strided_slice %36 {offsets = [0, 32], sizes = [17, 32], strides = [1, 1]} : vector<17x384xf32> to vector<17x32xf32>
    %cst_25 = arith.constant 0.176776692 : f32
    %59 = vector.broadcast %cst_25 : f32 to vector<17x32xf32>
    %60 = arith.mulf %58, %59 : vector<17x32xf32>
    %61 = arith.truncf %60 : vector<17x32xf32> to vector<17x32xbf16>
    %62 = vector.extract_strided_slice %36 {offsets = [0, 160], sizes = [17, 32], strides = [1, 1]} : vector<17x384xf32> to vector<17x32xf32>
    %63 = arith.truncf %62 : vector<17x32xf32> to vector<17x32xbf16>
    %64 = vector.extract_strided_slice %36 {offsets = [0, 288], sizes = [17, 32], strides = [1, 1]} : vector<17x384xf32> to vector<17x32xf32>
    %65 = arith.truncf %64 : vector<17x32xf32> to vector<17x32xbf16>
    %cst_26 = arith.constant dense<0.000000e+00> : vector<17x17xf32>
    %66 = tpu.matmul %61, %63, %cst_26 {dimension_numbers = #tpu.dot_dimension_numbers<[1], [1], [0], [0], [0, 0, 1, 0], [], []>} : vector<17x32xbf16>, vector<17x32xbf16>, vector<17x17xf32> -> vector<17x17xf32>
    %cst_27 = arith.constant dense<0xFF800000> : vector<17xf32>
    %67 = vector.multi_reduction <maximumf>, %66, %cst_27 [1] : vector<17x17xf32> to vector<17xf32>
    %68 = vector.shape_cast %67 : vector<17xf32> to vector<17x1xf32>
    %69 = vector.broadcast %68 : vector<17x1xf32> to vector<17x17xf32>
    %70 = arith.subf %66, %69 : vector<17x17xf32>
    %71 = math.exp %70 : vector<17x17xf32>
    %cst_28 = arith.constant dense<0.000000e+00> : vector<17xf32>
    %72 = vector.multi_reduction <add>, %71, %cst_28 [1] : vector<17x17xf32> to vector<17xf32>
    %73 = vector.shape_cast %72 : vector<17xf32> to vector<17x1xf32>
    %74 = tpu.reciprocal %73 {approx = true} : vector<17x1xf32> -> vector<17x1xf32>
    %75 = vector.broadcast %74 : vector<17x1xf32> to vector<17x17xf32>
    %76 = arith.mulf %71, %75 : vector<17x17xf32>
    %77 = arith.truncf %76 : vector<17x17xf32> to vector<17x17xbf16>
    %cst_29 = arith.constant dense<0.000000e+00> : vector<17x32xf32>
    %78 = tpu.matmul %77, %65, %cst_29 {dimension_numbers = #tpu.dot_dimension_numbers<[1], [0], [0], [1], [0, 0, 1, 1], [], []>} : vector<17x17xbf16>, vector<17x32xbf16>, vector<17x32xf32> -> vector<17x32xf32>
    %79 = vector.extract_strided_slice %36 {offsets = [0, 64], sizes = [17, 32], strides = [1, 1]} : vector<17x384xf32> to vector<17x32xf32>
    %cst_30 = arith.constant 0.176776692 : f32
    %80 = vector.broadcast %cst_30 : f32 to vector<17x32xf32>
    %81 = arith.mulf %79, %80 : vector<17x32xf32>
    %82 = arith.truncf %81 : vector<17x32xf32> to vector<17x32xbf16>
    %83 = vector.extract_strided_slice %36 {offsets = [0, 192], sizes = [17, 32], strides = [1, 1]} : vector<17x384xf32> to vector<17x32xf32>
    %84 = arith.truncf %83 : vector<17x32xf32> to vector<17x32xbf16>
    %85 = vector.extract_strided_slice %36 {offsets = [0, 320], sizes = [17, 32], strides = [1, 1]} : vector<17x384xf32> to vector<17x32xf32>
    %86 = arith.truncf %85 : vector<17x32xf32> to vector<17x32xbf16>
    %cst_31 = arith.constant dense<0.000000e+00> : vector<17x17xf32>
    %87 = tpu.matmul %82, %84, %cst_31 {dimension_numbers = #tpu.dot_dimension_numbers<[1], [1], [0], [0], [0, 0, 1, 0], [], []>} : vector<17x32xbf16>, vector<17x32xbf16>, vector<17x17xf32> -> vector<17x17xf32>
    %cst_32 = arith.constant dense<0xFF800000> : vector<17xf32>
    %88 = vector.multi_reduction <maximumf>, %87, %cst_32 [1] : vector<17x17xf32> to vector<17xf32>
    %89 = vector.shape_cast %88 : vector<17xf32> to vector<17x1xf32>
    %90 = vector.broadcast %89 : vector<17x1xf32> to vector<17x17xf32>
    %91 = arith.subf %87, %90 : vector<17x17xf32>
    %92 = math.exp %91 : vector<17x17xf32>
    %cst_33 = arith.constant dense<0.000000e+00> : vector<17xf32>
    %93 = vector.multi_reduction <add>, %92, %cst_33 [1] : vector<17x17xf32> to vector<17xf32>
    %94 = vector.shape_cast %93 : vector<17xf32> to vector<17x1xf32>
    %95 = tpu.reciprocal %94 {approx = true} : vector<17x1xf32> -> vector<17x1xf32>
    %96 = vector.broadcast %95 : vector<17x1xf32> to vector<17x17xf32>
    %97 = arith.mulf %92, %96 : vector<17x17xf32>
    %98 = arith.truncf %97 : vector<17x17xf32> to vector<17x17xbf16>
    %cst_34 = arith.constant dense<0.000000e+00> : vector<17x32xf32>
    %99 = tpu.matmul %98, %86, %cst_34 {dimension_numbers = #tpu.dot_dimension_numbers<[1], [0], [0], [1], [0, 0, 1, 1], [], []>} : vector<17x17xbf16>, vector<17x32xbf16>, vector<17x32xf32> -> vector<17x32xf32>
    %100 = vector.extract_strided_slice %36 {offsets = [0, 96], sizes = [17, 32], strides = [1, 1]} : vector<17x384xf32> to vector<17x32xf32>
    %cst_35 = arith.constant 0.176776692 : f32
    %101 = vector.broadcast %cst_35 : f32 to vector<17x32xf32>
    %102 = arith.mulf %100, %101 : vector<17x32xf32>
    %103 = arith.truncf %102 : vector<17x32xf32> to vector<17x32xbf16>
    %104 = vector.extract_strided_slice %36 {offsets = [0, 224], sizes = [17, 32], strides = [1, 1]} : vector<17x384xf32> to vector<17x32xf32>
    %105 = arith.truncf %104 : vector<17x32xf32> to vector<17x32xbf16>
    %106 = vector.extract_strided_slice %36 {offsets = [0, 352], sizes = [17, 32], strides = [1, 1]} : vector<17x384xf32> to vector<17x32xf32>
    %107 = arith.truncf %106 : vector<17x32xf32> to vector<17x32xbf16>
    %cst_36 = arith.constant dense<0.000000e+00> : vector<17x17xf32>
    %108 = tpu.matmul %103, %105, %cst_36 {dimension_numbers = #tpu.dot_dimension_numbers<[1], [1], [0], [0], [0, 0, 1, 0], [], []>} : vector<17x32xbf16>, vector<17x32xbf16>, vector<17x17xf32> -> vector<17x17xf32>
    %cst_37 = arith.constant dense<0xFF800000> : vector<17xf32>
    %109 = vector.multi_reduction <maximumf>, %108, %cst_37 [1] : vector<17x17xf32> to vector<17xf32>
    %110 = vector.shape_cast %109 : vector<17xf32> to vector<17x1xf32>
    %111 = vector.broadcast %110 : vector<17x1xf32> to vector<17x17xf32>
    %112 = arith.subf %108, %111 : vector<17x17xf32>
    %113 = math.exp %112 : vector<17x17xf32>
    %cst_38 = arith.constant dense<0.000000e+00> : vector<17xf32>
    %114 = vector.multi_reduction <add>, %113, %cst_38 [1] : vector<17x17xf32> to vector<17xf32>
    %115 = vector.shape_cast %114 : vector<17xf32> to vector<17x1xf32>
    %116 = tpu.reciprocal %115 {approx = true} : vector<17x1xf32> -> vector<17x1xf32>
    %117 = vector.broadcast %116 : vector<17x1xf32> to vector<17x17xf32>
    %118 = arith.mulf %113, %117 : vector<17x17xf32>
    %119 = arith.truncf %118 : vector<17x17xf32> to vector<17x17xbf16>
    %cst_39 = arith.constant dense<0.000000e+00> : vector<17x32xf32>
    %120 = tpu.matmul %119, %107, %cst_39 {dimension_numbers = #tpu.dot_dimension_numbers<[1], [0], [0], [1], [0, 0, 1, 1], [], []>} : vector<17x17xbf16>, vector<17x32xbf16>, vector<17x32xf32> -> vector<17x32xf32>
    %121 = tpu.concatenate %57, %78, %99, %120 in 1 : vector<17x32xf32>, vector<17x32xf32>, vector<17x32xf32>, vector<17x32xf32> -> vector<17x128xf32>
    %122 = arith.truncf %121 : vector<17x128xf32> to vector<17x128xbf16>
    %c0_40 = arith.constant 0 : index
    %c0_41 = arith.constant 0 : index
    %c0_42 = arith.constant 0 : index
    %123 = vector.load %arg7[%c0_40, %c0_41, %c0_42] : memref<1x128x128xbf16, #tpu.memory_space<vmem>>, vector<1x128x128xbf16>
    %124 = vector.shape_cast %123 : vector<1x128x128xbf16> to vector<128x128xbf16>
    %cst_43 = arith.constant dense<0.000000e+00> : vector<17x128xf32>
    %125 = tpu.matmul %122, %124, %cst_43 {dimension_numbers = #tpu.dot_dimension_numbers<[1], [0], [0], [1], [0, 0, 1, 1], [], []>} : vector<17x128xbf16>, vector<128x128xbf16>, vector<17x128xf32> -> vector<17x128xf32>
    %c0_44 = arith.constant 0 : index
    %c0_45 = arith.constant 0 : index
    %c0_46 = arith.constant 0 : index
    %126 = vector.load %arg8[%c0_44, %c0_45, %c0_46] : memref<1x1x128xf32, #tpu.memory_space<vmem>>, vector<1x1x128xf32>
    %127 = vector.shape_cast %126 : vector<1x1x128xf32> to vector<1x128xf32>
    %128 = vector.broadcast %127 : vector<1x128xf32> to vector<17x128xf32>
    %129 = arith.addf %125, %128 : vector<17x128xf32>
    %130 = arith.addf %4, %129 : vector<17x128xf32>
    %c0_47 = arith.constant 0 : index
    %c0_48 = arith.constant 0 : index
    %c0_49 = arith.constant 0 : index
    %131 = vector.load %arg9[%c0_47, %c0_48, %c0_49] : memref<1x1x128xf32, #tpu.memory_space<vmem>>, vector<1x1x128xf32>
    %132 = vector.shape_cast %131 : vector<1x1x128xf32> to vector<1x128xf32>
    %c0_50 = arith.constant 0 : index
    %c0_51 = arith.constant 0 : index
    %c0_52 = arith.constant 0 : index
    %133 = vector.load %arg10[%c0_50, %c0_51, %c0_52] : memref<1x1x128xf32, #tpu.memory_space<vmem>>, vector<1x1x128xf32>
    %134 = vector.shape_cast %133 : vector<1x1x128xf32> to vector<1x128xf32>
    %cst_53 = arith.constant dense<0.000000e+00> : vector<17xf32>
    %135 = vector.multi_reduction <add>, %130, %cst_53 [1] : vector<17x128xf32> to vector<17xf32>
    %136 = vector.shape_cast %135 : vector<17xf32> to vector<17x1xf32>
    %cst_54 = arith.constant 1.280000e+02 : f32
    %137 = vector.broadcast %cst_54 : f32 to vector<17x1xf32>
    %138 = arith.divf %136, %137 : vector<17x1xf32>
    %139 = vector.broadcast %138 : vector<17x1xf32> to vector<17x128xf32>
    %140 = arith.subf %130, %139 : vector<17x128xf32>
    %141 = arith.mulf %140, %140 : vector<17x128xf32>
    %cst_55 = arith.constant dense<0.000000e+00> : vector<17xf32>
    %142 = vector.multi_reduction <add>, %141, %cst_55 [1] : vector<17x128xf32> to vector<17xf32>
    %143 = vector.shape_cast %142 : vector<17xf32> to vector<17x1xf32>
    %cst_56 = arith.constant 1.280000e+02 : f32
    %144 = vector.broadcast %cst_56 : f32 to vector<17x1xf32>
    %145 = arith.divf %143, %144 : vector<17x1xf32>
    %cst_57 = arith.constant 9.99999974E-6 : f32
    %146 = vector.broadcast %cst_57 : f32 to vector<17x1xf32>
    %147 = arith.addf %145, %146 : vector<17x1xf32>
    %148 = math.rsqrt %147 : vector<17x1xf32>
    %149 = vector.broadcast %148 : vector<17x1xf32> to vector<17x128xf32>
    %150 = arith.mulf %140, %149 : vector<17x128xf32>
    %151 = vector.broadcast %132 : vector<1x128xf32> to vector<17x128xf32>
    %152 = arith.mulf %150, %151 : vector<17x128xf32>
    %153 = vector.broadcast %134 : vector<1x128xf32> to vector<17x128xf32>
    %154 = arith.addf %152, %153 : vector<17x128xf32>
    %155 = arith.truncf %154 : vector<17x128xf32> to vector<17x128xbf16>
    %c0_58 = arith.constant 0 : index
    %c0_59 = arith.constant 0 : index
    %c0_60 = arith.constant 0 : index
    %156 = vector.load %arg11[%c0_58, %c0_59, %c0_60] : memref<1x128x512xbf16, #tpu.memory_space<vmem>>, vector<1x128x512xbf16>
    %157 = vector.shape_cast %156 : vector<1x128x512xbf16> to vector<128x512xbf16>
    %cst_61 = arith.constant dense<0.000000e+00> : vector<17x512xf32>
    %158 = tpu.matmul %155, %157, %cst_61 {dimension_numbers = #tpu.dot_dimension_numbers<[1], [0], [0], [1], [0, 0, 1, 1], [], []>} : vector<17x128xbf16>, vector<128x512xbf16>, vector<17x512xf32> -> vector<17x512xf32>
    %c0_62 = arith.constant 0 : index
    %c0_63 = arith.constant 0 : index
    %c0_64 = arith.constant 0 : index
    %159 = vector.load %arg12[%c0_62, %c0_63, %c0_64] : memref<1x1x512xf32, #tpu.memory_space<vmem>>, vector<1x1x512xf32>
    %160 = vector.shape_cast %159 : vector<1x1x512xf32> to vector<1x512xf32>
    %161 = vector.broadcast %160 : vector<1x512xf32> to vector<17x512xf32>
    %162 = arith.addf %158, %161 : vector<17x512xf32>
    %cst_65 = arith.constant 1.702000e+00 : f32
    %163 = vector.broadcast %cst_65 : f32 to vector<17x512xf32>
    %164 = arith.mulf %163, %162 : vector<17x512xf32>
    %165 = arith.negf %164 : vector<17x512xf32>
    %166 = math.exp %165 : vector<17x512xf32>
    %cst_66 = arith.constant 1.000000e+00 : f32
    %167 = vector.broadcast %cst_66 : f32 to vector<17x512xf32>
    %168 = arith.addf %167, %166 : vector<17x512xf32>
    %169 = arith.divf %167, %168 : vector<17x512xf32>
    %170 = arith.mulf %162, %169 : vector<17x512xf32>
    %171 = arith.truncf %170 : vector<17x512xf32> to vector<17x512xbf16>
    %c0_67 = arith.constant 0 : index
    %c0_68 = arith.constant 0 : index
    %c0_69 = arith.constant 0 : index
    %172 = vector.load %arg13[%c0_67, %c0_68, %c0_69] : memref<1x512x128xbf16, #tpu.memory_space<vmem>>, vector<1x512x128xbf16>
    %173 = vector.shape_cast %172 : vector<1x512x128xbf16> to vector<512x128xbf16>
    %cst_70 = arith.constant dense<0.000000e+00> : vector<17x128xf32>
    %174 = tpu.matmul %171, %173, %cst_70 {dimension_numbers = #tpu.dot_dimension_numbers<[1], [0], [0], [1], [0, 0, 1, 1], [], []>} : vector<17x512xbf16>, vector<512x128xbf16>, vector<17x128xf32> -> vector<17x128xf32>
    %c0_71 = arith.constant 0 : index
    %c0_72 = arith.constant 0 : index
    %c0_73 = arith.constant 0 : index
    %175 = vector.load %arg14[%c0_71, %c0_72, %c0_73] : memref<1x1x128xf32, #tpu.memory_space<vmem>>, vector<1x1x128xf32>
    %176 = vector.shape_cast %175 : vector<1x1x128xf32> to vector<1x128xf32>
    %177 = vector.broadcast %176 : vector<1x128xf32> to vector<17x128xf32>
    %178 = arith.addf %174, %177 : vector<17x128xf32>
    %179 = arith.addf %130, %178 : vector<17x128xf32>
    %c0_74 = arith.constant 0 : index
    %c0_75 = arith.constant 0 : index
    %c0_76 = arith.constant 0 : index
    %180 = vector.load %arg15[%c0_74, %c0_75, %c0_76] : memref<1x17x128xf32, #tpu.memory_space<vmem>>, vector<1x17x128xf32>
    %181 = vector.shape_cast %180 : vector<1x17x128xf32> to vector<17x128xf32>
    %182 = vector.shape_cast %179 : vector<17x128xf32> to vector<1x17x128xf32>
    tpu.vector_store %arg15[%c0_74, %c0_75, %c0_76], %182 {strides = array<i32>} : memref<1x17x128xf32, #tpu.memory_space<vmem>>, vector<1x17x128xf32>,
    return
  }
  func.func @transform_0(%arg0: i32, %arg1: i32) -> (i32, i32, i32) {
    %c0_i32 = arith.constant 0 : i32
    %c0_i32_0 = arith.constant 0 : i32
    %c0_i32_1 = arith.constant 0 : i32
    return %arg0, %c0_i32, %c0_i32_0 : i32, i32, i32
  }
  func.func @transform_1(%arg0: i32, %arg1: i32) -> (i32, i32, i32) {
    %c0_i32 = arith.constant 0 : i32
    %c0_i32_0 = arith.constant 0 : i32
    %c0_i32_1 = arith.constant 0 : i32
    return %arg1, %c0_i32, %c0_i32_0 : i32, i32, i32
  }
  func.func @transform_2(%arg0: i32, %arg1: i32) -> (i32, i32, i32) {
    %c0_i32 = arith.constant 0 : i32
    %c0_i32_0 = arith.constant 0 : i32
    %c0_i32_1 = arith.constant 0 : i32
    return %arg1, %c0_i32, %c0_i32_0 : i32, i32, i32
  }
  func.func @transform_3(%arg0: i32, %arg1: i32) -> (i32, i32, i32) {
    %c0_i32 = arith.constant 0 : i32
    %c0_i32_0 = arith.constant 0 : i32
    %c0_i32_1 = arith.constant 0 : i32
    return %arg1, %c0_i32, %c0_i32_0 : i32, i32, i32
  }
  func.func @transform_4(%arg0: i32, %arg1: i32) -> (i32, i32, i32) {
    %c0_i32 = arith.constant 0 : i32
    %c0_i32_0 = arith.constant 0 : i32
    %c0_i32_1 = arith.constant 0 : i32
    return %arg1, %c0_i32, %c0_i32_0 : i32, i32, i32
  }
  func.func @transform_5(%arg0: i32, %arg1: i32) -> (i32, i32, i32) {
    %c0_i32 = arith.constant 0 : i32
    %c0_i32_0 = arith.constant 0 : i32
    %c0_i32_1 = arith.constant 0 : i32
    return %arg1, %c0_i32, %c0_i32_0 : i32, i32, i32
  }
  func.func @transform_6(%arg0: i32, %arg1: i32) -> (i32, i32, i32) {
    %c0_i32 = arith.constant 0 : i32
    %c0_i32_0 = arith.constant 0 : i32
    %c0_i32_1 = arith.constant 0 : i32
    return %arg1, %c0_i32, %c0_i32_0 : i32, i32, i32
  }
  func.func @transform_7(%arg0: i32, %arg1: i32) -> (i32, i32, i32) {
    %c0_i32 = arith.constant 0 : i32
    %c0_i32_0 = arith.constant 0 : i32
    %c0_i32_1 = arith.constant 0 : i32
    return %arg1, %c0_i32, %c0_i32_0 : i32, i32, i32
  }
  func.func @transform_8(%arg0: i32, %arg1: i32) -> (i32, i32, i32) {
    %c0_i32 = arith.constant 0 : i32
    %c0_i32_0 = arith.constant 0 : i32
    %c0_i32_1 = arith.constant 0 : i32
    return %arg1, %c0_i32, %c0_i32_0 : i32, i32, i32
  }
  func.func @transform_9(%arg0: i32, %arg1: i32) -> (i32, i32, i32) {
    %c0_i32 = arith.constant 0 : i32
    %c0_i32_0 = arith.constant 0 : i32
    %c0_i32_1 = arith.constant 0 : i32
    return %arg1, %c0_i32, %c0_i32_0 : i32, i32, i32
  }
  func.func @transform_10(%arg0: i32, %arg1: i32) -> (i32, i32, i32) {
    %c0_i32 = arith.constant 0 : i32
    %c0_i32_0 = arith.constant 0 : i32
    %c0_i32_1 = arith.constant 0 : i32
    return %arg1, %c0_i32, %c0_i32_0 : i32, i32, i32
  }
  func.func @transform_11(%arg0: i32, %arg1: i32) -> (i32, i32, i32) {
    %c0_i32 = arith.constant 0 : i32
    %c0_i32_0 = arith.constant 0 : i32
    %c0_i32_1 = arith.constant 0 : i32
    return %arg1, %c0_i32, %c0_i32_0 : i32, i32, i32
  }
  func.func @transform_12(%arg0: i32, %arg1: i32) -> (i32, i32, i32) {
    %c0_i32 = arith.constant 0 : i32
    %c0_i32_0 = arith.constant 0 : i32
    %c0_i32_1 = arith.constant 0 : i32
    return %arg1, %c0_i32, %c0_i32_0 : i32, i32, i32
  }
  func.func @transform_13(%arg0: i32, %arg1: i32) -> (i32, i32, i32) {
    %c0_i32 = arith.constant 0 : i32
    %c0_i32_0 = arith.constant 0 : i32
    %c0_i32_1 = arith.constant 0 : i32
    return %arg0, %c0_i32, %c0_i32_0 : i32, i32, i32
  }
}

module attributes {stable_mosaic.version = 11 : i64} {
  func.func @_head_kernel(%arg0: i32, %arg1: memref<2x128xf32, #tpu.memory_space<vmem>>, %arg2: memref<1x128xf32, #tpu.memory_space<vmem>>, %arg3: memref<1x128xf32, #tpu.memory_space<vmem>>, %arg4: memref<128x128xbf16, #tpu.memory_space<vmem>>, %arg5: memref<1x128xf32, #tpu.memory_space<vmem>>, %arg6: memref<2x128xf32, #tpu.memory_space<vmem>>) attributes {dimension_semantics = [#tpu.dimension_semantics<arbitrary>], iteration_bounds = array<i64: 1>, scalar_prefetch = 0 : i64, scratch_operands = 0 : i64, tpu.core_type = #tpu.core_type<tc>, window_params = [{pipeline_mode = #tpu.pipeline_mode<synchronous>, transform_indices = @transform_0, window_bounds = array<i64: 2, 128>}, {pipeline_mode = #tpu.pipeline_mode<synchronous>, transform_indices = @transform_1, window_bounds = array<i64: 1, 128>}, {pipeline_mode = #tpu.pipeline_mode<synchronous>, transform_indices = @transform_2, window_bounds = array<i64: 1, 128>}, {pipeline_mode = #tpu.pipeline_mode<synchronous>, transform_indices = @transform_3, window_bounds = array<i64: 128, 128>}, {pipeline_mode = #tpu.pipeline_mode<synchronous>, transform_indices = @transform_4, window_bounds = array<i64: 1, 128>}, {pipeline_mode = #tpu.pipeline_mode<synchronous>, transform_indices = @transform_5, window_bounds = array<i64: 2, 128>}]} {
    %c0 = arith.constant 0 : index
    %c0_0 = arith.constant 0 : index
    %0 = vector.load %arg1[%c0, %c0_0] : memref<2x128xf32, #tpu.memory_space<vmem>>, vector<2x128xf32>
    %c0_1 = arith.constant 0 : index
    %c0_2 = arith.constant 0 : index
    %1 = vector.load %arg2[%c0_1, %c0_2] : memref<1x128xf32, #tpu.memory_space<vmem>>, vector<1x128xf32>
    %c0_3 = arith.constant 0 : index
    %c0_4 = arith.constant 0 : index
    %2 = vector.load %arg3[%c0_3, %c0_4] : memref<1x128xf32, #tpu.memory_space<vmem>>, vector<1x128xf32>
    %cst = arith.constant dense<0.000000e+00> : vector<2xf32>
    %3 = vector.multi_reduction <add>, %0, %cst [1] : vector<2x128xf32> to vector<2xf32>
    %4 = vector.shape_cast %3 : vector<2xf32> to vector<2x1xf32>
    %cst_5 = arith.constant 1.280000e+02 : f32
    %5 = vector.broadcast %cst_5 : f32 to vector<2x1xf32>
    %6 = arith.divf %4, %5 : vector<2x1xf32>
    %7 = vector.broadcast %6 : vector<2x1xf32> to vector<2x128xf32>
    %8 = arith.subf %0, %7 : vector<2x128xf32>
    %9 = arith.mulf %8, %8 : vector<2x128xf32>
    %cst_6 = arith.constant dense<0.000000e+00> : vector<2xf32>
    %10 = vector.multi_reduction <add>, %9, %cst_6 [1] : vector<2x128xf32> to vector<2xf32>
    %11 = vector.shape_cast %10 : vector<2xf32> to vector<2x1xf32>
    %cst_7 = arith.constant 1.280000e+02 : f32
    %12 = vector.broadcast %cst_7 : f32 to vector<2x1xf32>
    %13 = arith.divf %11, %12 : vector<2x1xf32>
    %cst_8 = arith.constant 9.99999974E-6 : f32
    %14 = vector.broadcast %cst_8 : f32 to vector<2x1xf32>
    %15 = arith.addf %13, %14 : vector<2x1xf32>
    %16 = math.rsqrt %15 : vector<2x1xf32>
    %17 = vector.broadcast %16 : vector<2x1xf32> to vector<2x128xf32>
    %18 = arith.mulf %8, %17 : vector<2x128xf32>
    %19 = vector.broadcast %1 : vector<1x128xf32> to vector<2x128xf32>
    %20 = arith.mulf %18, %19 : vector<2x128xf32>
    %21 = vector.broadcast %2 : vector<1x128xf32> to vector<2x128xf32>
    %22 = arith.addf %20, %21 : vector<2x128xf32>
    %23 = arith.truncf %22 : vector<2x128xf32> to vector<2x128xbf16>
    %c0_9 = arith.constant 0 : index
    %c0_10 = arith.constant 0 : index
    %24 = vector.load %arg4[%c0_9, %c0_10] : memref<128x128xbf16, #tpu.memory_space<vmem>>, vector<128x128xbf16>
    %cst_11 = arith.constant dense<0.000000e+00> : vector<2x128xf32>
    %25 = tpu.matmul %23, %24, %cst_11 {dimension_numbers = #tpu.dot_dimension_numbers<[1], [0], [0], [1], [0, 0, 1, 1], [], []>} : vector<2x128xbf16>, vector<128x128xbf16>, vector<2x128xf32> -> vector<2x128xf32>
    %c0_12 = arith.constant 0 : index
    %c0_13 = arith.constant 0 : index
    %26 = vector.load %arg5[%c0_12, %c0_13] : memref<1x128xf32, #tpu.memory_space<vmem>>, vector<1x128xf32>
    %27 = vector.broadcast %26 : vector<1x128xf32> to vector<2x128xf32>
    %28 = arith.addf %25, %27 : vector<2x128xf32>
    %c0_14 = arith.constant 0 : index
    %c0_15 = arith.constant 0 : index
    %29 = vector.load %arg6[%c0_14, %c0_15] : memref<2x128xf32, #tpu.memory_space<vmem>>, vector<2x128xf32>
    tpu.vector_store %arg6[%c0_14, %c0_15], %28 {strides = array<i32>} : memref<2x128xf32, #tpu.memory_space<vmem>>, vector<2x128xf32>,
    return
  }
  func.func @transform_0(%arg0: i32) -> (i32, i32) {
    %c0_i32 = arith.constant 0 : i32
    %c0_i32_0 = arith.constant 0 : i32
    %c0_i32_1 = arith.constant 0 : i32
    return %c0_i32, %c0_i32_0 : i32, i32
  }
  func.func @transform_1(%arg0: i32) -> (i32, i32) {
    %c0_i32 = arith.constant 0 : i32
    %c0_i32_0 = arith.constant 0 : i32
    %c0_i32_1 = arith.constant 0 : i32
    return %c0_i32, %c0_i32_0 : i32, i32
  }
  func.func @transform_2(%arg0: i32) -> (i32, i32) {
    %c0_i32 = arith.constant 0 : i32
    %c0_i32_0 = arith.constant 0 : i32
    %c0_i32_1 = arith.constant 0 : i32
    return %c0_i32, %c0_i32_0 : i32, i32
  }
  func.func @transform_3(%arg0: i32) -> (i32, i32) {
    %c0_i32 = arith.constant 0 : i32
    %c0_i32_0 = arith.constant 0 : i32
    %c0_i32_1 = arith.constant 0 : i32
    return %c0_i32, %c0_i32_0 : i32, i32
  }
  func.func @transform_4(%arg0: i32) -> (i32, i32) {
    %c0_i32 = arith.constant 0 : i32
    %c0_i32_0 = arith.constant 0 : i32
    %c0_i32_1 = arith.constant 0 : i32
    return %c0_i32, %c0_i32_0 : i32, i32
  }
  func.func @transform_5(%arg0: i32) -> (i32, i32) {
    %c0_i32 = arith.constant 0 : i32
    %c0_i32_0 = arith.constant 0 : i32
    %c0_i32_1 = arith.constant 0 : i32
    return %c0_i32, %c0_i32_0 : i32, i32
  }
}

</mosaic_0001>

<llo_original>
// kernel: ts_model_forward.3
$region0: #{ts_model_forward.3}
  #allocation0 [shape = 'u32[]', space=smem, size = 0x4, offset = 0x4, fixed_abs, tag = 'smem constant byte address 0x4 - core index']
  #allocation1 [shape = 'u32[72,128]{1,0:T(1,128)}', space=vmem, size = 0x9000, scoped, tag = 'internal scratch']
  %s0 = inlined_call_operand.vmem [shape: f32[2,16,768], index: 0, kind: input, shape index: {}]
  %s1 = inlined_call_operand.vmem [shape: bf16[768,128], index: 1, kind: input, shape index: {}]
  %s2 = inlined_call_operand.vmem [shape: f32[1,128], index: 2, kind: input, shape index: {}]
  %s3 = inlined_call_operand.vmem [shape: f32[17,128], index: 3, kind: input, shape index: {}]
  %s4 = inlined_call_operand.vmem [shape: f32[1,128], index: 4, kind: input, shape index: {}]
  %s5 = inlined_call_operand.vmem [shape: f32[1,128], index: 5, kind: input, shape index: {}]
  %s6 = inlined_call_operand.vmem [shape: f32[2,17,128], index: 6, kind: output, shape index: {}]
  %s7 = sld [smem:[#allocation0]]
  $region57: #{ts_model_forward.3} parent=0
    _
  %s9 = ssub.s32 1, %s7
  %s10 = scalar_select 0, %s9, %s7
  loop: start=0, step=1, limit=4
  $region2: #{ts_model_forward.3} parent=0 // loop_pre_header
    _
  $region3: #{ts_model_forward.3} parent=0 // loop_header
    %s12 = sphi 0, %s16
    %p13 = scmp.ge.s32.totalorder %s12, 4
    %s22 = sphi 0, %s24
    %s25 = sphi 0, %s22
    %s26 = sphi 0, %s25
    %s42 = sphi 0, %s26
    %s46 = sphi 0, %s46
    %s48 = sphi 0, %s46
    %s49 = sphi 0, %s48
    %s63 = sphi 0, %s49
    %s67 = sphi 0, %s67
    %s69 = sphi 0, %s67
    %s70 = sphi 0, %s69
    %s84 = sphi 0, %s70
    %s88 = sphi 0, %s88
    %s90 = sphi 0, %s88
    %s91 = sphi 0, %s90
    %s105 = sphi 0, %s91
    %s109 = sphi 0, %s109
    %s111 = sphi 0, %s109
    %s112 = sphi 0, %s111
    %s126 = sphi 0, %s112
    %s130 = sphi 0, %s130
    %s132 = sphi 0, %s130
    %s133 = sphi 0, %s132
    %s147 = sphi 0, %s133
    %s153 = sphi 0, %s155
    %s156 = sphi 0, %s153
    %s157 = sphi 0, %s156
    %s173 = sphi 0, %s157
  $region4: #{ts_model_forward.3} parent=0 // loop_header_branch
    %15 = sbr.rel (%p13) target = $region8
  $region5: #{ts_model_forward.3} parent=0 // loop_body
    %s17 = ssub.s32 %s12, 1
    %s18 = ssub.s32 %s12, 2
    %s19 = sadd.s32 %s12, 1
    %s20 = ssub.s32 %s12, %s19
    %p21 = scmp.eq.s32.totalorder %s20, 0
    %s23 = sadd.s32 %s22, 1
    %s24 = scalar_select %p21, %s22, %s23
    %p27 = pneg %p21
    %p28 = scmp.eq.s32.totalorder %s12, 1
    %p29 = por %p27, %p28
    %p30 = scmp.ne.s32.totalorder %s22, %s25
    %p31 = scmp.eq.s32.totalorder %s12, 0
    %p32 = por %p30, %p31
    %p33 = scmp.ne.s32.totalorder %s22, %s25
    %p34 = scmp.eq.s32.totalorder %s17, 1
    %p35 = por %p33, %p34
    %p36 = scmp.ne.s32.totalorder %s25, %s26
    %p37 = scmp.eq.s32.totalorder %s17, 0
    %p38 = por %p36, %p37
    %p39 = scmp.ne.s32.totalorder %s25, %s26
    %p40 = scmp.eq.s32.totalorder %s18, 1
    %p41 = por %p39, %p40
    %p43 = scmp.ne.s32.totalorder %s26, %s42
    %p44 = scmp.eq.s32.totalorder %s18, 0
    %p45 = por %p43, %p44
    %s47 = sadd.s32 %s46, 1
    %p50 = scmp.eq.s32.totalorder %s12, 1
    %p51 = scmp.ne.s32.totalorder %s46, %s48
    %p52 = scmp.eq.s32.totalorder %s12, 0
    %p53 = por %p51, %p52
    %p54 = scmp.ne.s32.totalorder %s46, %s48
    %p55 = scmp.eq.s32.totalorder %s17, 1
    %p56 = por %p54, %p55
    %p57 = scmp.ne.s32.totalorder %s48, %s49
    %p58 = scmp.eq.s32.totalorder %s17, 0
    %p59 = por %p57, %p58
    %p60 = scmp.ne.s32.totalorder %s48, %s49
    %p61 = scmp.eq.s32.totalorder %s18, 1
    %p62 = por %p60, %p61
    %p64 = scmp.ne.s32.totalorder %s49, %s63
    %p65 = scmp.eq.s32.totalorder %s18, 0
    %p66 = por %p64, %p65
    %s68 = sadd.s32 %s67, 1
    %p71 = scmp.eq.s32.totalorder %s12, 1
    %p72 = scmp.ne.s32.totalorder %s67, %s69
    %p73 = scmp.eq.s32.totalorder %s12, 0
    %p74 = por %p72, %p73
    %p75 = scmp.ne.s32.totalorder %s67, %s69
    %p76 = scmp.eq.s32.totalorder %s17, 1
    %p77 = por %p75, %p76
    %p78 = scmp.ne.s32.totalorder %s69, %s70
    %p79 = scmp.eq.s32.totalorder %s17, 0
    %p80 = por %p78, %p79
    %p81 = scmp.ne.s32.totalorder %s69, %s70
    %p82 = scmp.eq.s32.totalorder %s18, 1
    %p83 = por %p81, %p82
    %p85 = scmp.ne.s32.totalorder %s70, %s84
    %p86 = scmp.eq.s32.totalorder %s18, 0
    %p87 = por %p85, %p86
    %s89 = sadd.s32 %s88, 1
    %p92 = scmp.eq.s32.totalorder %s12, 1
    %p93 = scmp.ne.s32.totalorder %s88, %s90
    %p94 = scmp.eq.s32.totalorder %s12, 0
    %p95 = por %p93, %p94
    %p96 = scmp.ne.s32.totalorder %s88, %s90
    %p97 = scmp.eq.s32.totalorder %s17, 1
    %p98 = por %p96, %p97
    %p99 = scmp.ne.s32.totalorder %s90, %s91
    %p100 = scmp.eq.s32.totalorder %s17, 0
    %p101 = por %p99, %p100
    %p102 = scmp.ne.s32.totalorder %s90, %s91
    %p103 = scmp.eq.s32.totalorder %s18, 1
    %p104 = por %p102, %p103
    %p106 = scmp.ne.s32.totalorder %s91, %s105
    %p107 = scmp.eq.s32.totalorder %s18, 0
    %p108 = por %p106, %p107
    %s110 = sadd.s32 %s109, 1
    %p113 = scmp.eq.s32.totalorder %s12, 1
    %p114 = scmp.ne.s32.totalorder %s109, %s111
    %p115 = scmp.eq.s32.totalorder %s12, 0
    %p116 = por %p114, %p115
    %p117 = scmp.ne.s32.totalorder %s109, %s111
    %p118 = scmp.eq.s32.totalorder %s17, 1
    %p119 = por %p117, %p118
    %p120 = scmp.ne.s32.totalorder %s111, %s112
    %p121 = scmp.eq.s32.totalorder %s17, 0
    %p122 = por %p120, %p121
    %p123 = scmp.ne.s32.totalorder %s111, %s112
    %p124 = scmp.eq.s32.totalorder %s18, 1
    %p125 = por %p123, %p124
    %p127 = scmp.ne.s32.totalorder %s112, %s126
    %p128 = scmp.eq.s32.totalorder %s18, 0
    %p129 = por %p127, %p128
    %s131 = sadd.s32 %s130, 1
    %p134 = scmp.eq.s32.totalorder %s12, 1
    %p135 = scmp.ne.s32.totalorder %s130, %s132
    %p136 = scmp.eq.s32.totalorder %s12, 0
    %p137 = por %p135, %p136
    %p138 = scmp.ne.s32.totalorder %s130, %s132
    %p139 = scmp.eq.s32.totalorder %s17, 1
    %p140 = por %p138, %p139
    %p141 = scmp.ne.s32.totalorder %s132, %s133
    %p142 = scmp.eq.s32.totalorder %s17, 0
    %p143 = por %p141, %p142
    %p144 = scmp.ne.s32.totalorder %s132, %s133
    %p145 = scmp.eq.s32.totalorder %s18, 1
    %p146 = por %p144, %p145
    %p148 = scmp.ne.s32.totalorder %s133, %s147
    %p149 = scmp.eq.s32.totalorder %s18, 0
    %p150 = por %p148, %p149
    %s151 = ssub.s32 %s12, %s19
    %p152 = scmp.eq.s32.totalorder %s151, 0
    %s154 = sadd.s32 %s153, 1
    %s155 = scalar_select %p152, %s153, %s154
    %p158 = pneg %p152
    %p159 = scmp.eq.s32.totalorder %s12, 1
    %p160 = por %p158, %p159
    %p161 = scmp.ne.s32.totalorder %s153, %s156
    %p162 = scmp.eq.s32.totalorder %s12, 0
    %p163 = por %p161, %p162
    %p164 = scmp.ne.s32.totalorder %s153, %s156
    %p165 = scmp.eq.s32.totalorder %s17, 1
    %p166 = por %p164, %p165
    %p167 = scmp.ne.s32.totalorder %s156, %s157
    %p168 = scmp.eq.s32.totalorder %s17, 0
    %p169 = por %p167, %p168
    %p170 = scmp.ne.s32.totalorder %s156, %s157
    %p171 = scmp.eq.s32.totalorder %s18, 1
    %p172 = por %p170, %p171
    %p174 = scmp.ne.s32.totalorder %s157, %s173
    %p175 = scmp.eq.s32.totalorder %s18, 0
    %p176 = por %p174, %p175
    %p177 = scmp.le.s32.totalorder 1, %s12
    %p178 = scmp.lt.s32.totalorder %s12, 3
    %p179 = pnand %p177, %p178
    %p180 = pneg %p179
    // Predicated region
    $region9: #{ts_model_forward.3} parent=5 // pred_check
      _
    $region10: #{ts_model_forward.3} parent=5 // pred_check_branch
      %182 = sbr.rel (%p179) target = $region12
    $region11: #{ts_model_forward.3} parent=5 // pred_region
      %s183 = ssub.s32 %s12, 1
      // Predicated region
      $region13: #{ts_model_forward.3} parent=11 // pred_check
        %p184 = pneg %p59
      $region14: #{ts_model_forward.3} parent=11 // pred_check_branch
        %186 = sbr.rel (%p184) target = $region16
      $region15: #{ts_model_forward.3} parent=11 // pred_region
        _
      $region16: #{ts_model_forward.3} parent=11 // pred_fallthru
        _
      // Predicated region
      $region17: #{ts_model_forward.3} parent=11 // pred_check
        %p187 = pneg %p80
      $region18: #{ts_model_forward.3} parent=11 // pred_check_branch
        %189 = sbr.rel (%p187) target = $region20
      $region19: #{ts_model_forward.3} parent=11 // pred_region
        _
      $region20: #{ts_model_forward.3} parent=11 // pred_fallthru
        _
      // Predicated region
      $region21: #{ts_model_forward.3} parent=11 // pred_check
        %p190 = pneg %p101
      $region22: #{ts_model_forward.3} parent=11 // pred_check_branch
        %192 = sbr.rel (%p190) target = $region24
      $region23: #{ts_model_forward.3} parent=11 // pred_region
        _
      $region24: #{ts_model_forward.3} parent=11 // pred_fallthru
        _
      // Predicated region
      $region25: #{ts_model_forward.3} parent=11 // pred_check
        %p193 = pneg %p122
      $region26: #{ts_model_forward.3} parent=11 // pred_check_branch
        %195 = sbr.rel (%p193) target = $region28
      $region27: #{ts_model_forward.3} parent=11 // pred_region
        _
      $region28: #{ts_model_forward.3} parent=11 // pred_fallthru
        _
      // Predicated region
      $region29: #{ts_model_forward.3} parent=11 // pred_check
        %p196 = pneg %p143
      $region30: #{ts_model_forward.3} parent=11 // pred_check_branch
        %198 = sbr.rel (%p196) target = $region32
      $region31: #{ts_model_forward.3} parent=11 // pred_region
        _
      $region32: #{ts_model_forward.3} parent=11 // pred_fallthru
        _
    $region12: #{ts_model_forward.3} parent=5 // pred_fallthru
      _
    %p199 = scmp.lt.s32.totalorder %s12, 2
    // Predicated region
    $region33: #{ts_model_forward.3} parent=5 // pred_check
      %p200 = pneg %p199
    $region34: #{ts_model_forward.3} parent=5 // pred_check_branch
      %202 = sbr.rel (%p200) target = $region36
    $region35: #{ts_model_forward.3} parent=5 // pred_region
      // Predicated region
      $region37: #{ts_model_forward.3} parent=35 // pred_check
        %p203 = pneg %p32
      $region38: #{ts_model_forward.3} parent=35 // pred_check_branch
        %205 = sbr.rel (%p203) target = $region40
      $region39: #{ts_model_forward.3} parent=35 // pred_region
        %p206 = scmp.lt.s32.totalorder %s12, 1
        %s207 = scalar_select %p206, %s12, 1
        %s208 = smul.addr %s207, 12
        %s209 = smul.addr %s208, 8
        %s210 = scalar_lea.vmem %s0, %s209
      $region40: #{ts_model_forward.3} parent=35 // pred_fallthru
        _
    $region36: #{ts_model_forward.3} parent=5 // pred_fallthru
      _
    %p211 = scmp.le.s32.totalorder 1, %s12
    %p212 = scmp.lt.s32.totalorder %s12, 3
    %p213 = pnand %p211, %p212
    %p214 = pneg %p213
    // Predicated region
    $region41: #{ts_model_forward.3} parent=5 // pred_check
      _
    $region42: #{ts_model_forward.3} parent=5 // pred_check_branch
      %216 = sbr.rel (%p213) target = $region44
    $region43: #{ts_model_forward.3} parent=5 // pred_region
      %s217 = ssub.s32 %s12, 1
      %p218 = scmp.lt.s32.totalorder %s17, 1
      %s219 = scalar_select %p218, %s17, 1
      %s220 = smul.addr %s219, 12
      %s221 = smul.addr %s220, 8
      %s222 = scalar_lea.vmem %s0, %s221
      %p223 = pneg %p38
      %p224 = pneg %p35
      %p225 = pneg %p59
      %p226 = pneg %p56
      %p227 = pneg %p80
      %p228 = pneg %p77
      %p229 = pneg %p101
      %p230 = pneg %p98
      %p231 = pneg %p122
      %p232 = pneg %p119
      %p233 = pneg %p143
      %p234 = pneg %p140
      %p235 = pneg %p169
      %p236 = pneg %p166
      %p237 = scmp.lt.s32.totalorder %s17, 1
      %s238 = scalar_select %p237, %s17, 1
      %s239 = smul.addr %s238, 3
      %s240 = smul.addr %s239, 8
      %s241 = scalar_lea.vmem %s6, %s240
      %p242 = scmp.lt.s32.totalorder %s17, 1
      %s243 = scalar_select %p242, %s17, 1
      %s244 = smul.addr %s243, 12
      %s245 = smul.addr %s244, 8
      %s246 = scalar_lea.vmem %s0, %s245
      %p247 = scmp.lt.s32.totalorder %s17, 1
      %s248 = scalar_select %p247, %s17, 1
      %s249 = smul.addr %s248, 3
      %s250 = smul.addr %s249, 8
      %s251 = scalar_lea.vmem %s6, %s250
      %v252 = vld [vmem:[%s246] sm:$0xff]
      %v253 = vld [vmem:[%s246 + $0x8] sm:$0xff]
      %v254 = vld [vmem:[%s246 + $0x10] sm:$0xff]
      %v255 = vld [vmem:[%s246 + $0x18] sm:$0xff]
      %v256 = vld [vmem:[%s246 + $0x20] sm:$0xff]
      %v257 = vld [vmem:[%s246 + $0x28] sm:$0xff]
      %v258 = vld [vmem:[%s246 + $0x30] sm:$0xff]
      %v259 = vld [vmem:[%s246 + $0x38] sm:$0xff]
      %v260 = vld [vmem:[%s246 + $0x40] sm:$0xff]
      %v261 = vld [vmem:[%s246 + $0x48] sm:$0xff]
      %v262 = vld [vmem:[%s246 + $0x50] sm:$0xff]
      %v263 = vld [vmem:[%s246 + $0x58] sm:$0xff]
      %v264 = vpack.c.bf16 %v258, %v252
      %v265 = vpack.c.bf16 %v259, %v253
      %v266 = vpack.c.bf16 %v260, %v254
      %v267 = vpack.c.bf16 %v261, %v255
      %v268 = vpack.c.bf16 %v262, %v256
      %v269 = vpack.c.bf16 %v263, %v257
      %v270 = vld [vmem:[%s1] sm:$0xf]
      %v271 = vld [vmem:[%s1 + $0x4] sm:$0xf]
      %v272 = vld [vmem:[%s1 + $0x8] sm:$0xf]
      %v273 = vld [vmem:[%s1 + $0xc] sm:$0xf]
      %v274 = vld [vmem:[%s1 + $0x10] sm:$0xf]
      %v275 = vld [vmem:[%s1 + $0x14] sm:$0xf]
      %v276 = vld [vmem:[%s1 + $0x18] sm:$0xf]
      %v277 = vld [vmem:[%s1 + $0x1c] sm:$0xf]
      %v278 = vld [vmem:[%s1 + $0x20] sm:$0xf]
      %v279 = vld [vmem:[%s1 + $0x24] sm:$0xf]
      %v280 = vld [vmem:[%s1 + $0x28] sm:$0xf]
      %v281 = vld [vmem:[%s1 + $0x2c] sm:$0xf]
      %v282 = vld [vmem:[%s1 + $0x30] sm:$0xf]
      %v283 = vld [vmem:[%s1 + $0x34] sm:$0xf]
      %v284 = vld [vmem:[%s1 + $0x38] sm:$0xf]
      %v285 = vld [vmem:[%s1 + $0x3c] sm:$0xf]
      %v286 = vld [vmem:[%s1 + $0x40] sm:$0xf]
      %v287 = vld [vmem:[%s1 + $0x44] sm:$0xf]
      %v288 = vld [vmem:[%s1 + $0x48] sm:$0xf]
      %v289 = vld [vmem:[%s1 + $0x4c] sm:$0xf]
      %v290 = vld [vmem:[%s1 + $0x50] sm:$0xf]
      %v291 = vld [vmem:[%s1 + $0x54] sm:$0xf]
      %v292 = vld [vmem:[%s1 + $0x58] sm:$0xf]
      %v293 = vld [vmem:[%s1 + $0x5c] sm:$0xf]
      %v294 = vld [vmem:[%s1 + $0x60] sm:$0xf]
      %v295 = vld [vmem:[%s1 + $0x64] sm:$0xf]
      %v296 = vld [vmem:[%s1 + $0x68] sm:$0xf]
      %v297 = vld [vmem:[%s1 + $0x6c] sm:$0xf]
      %v298 = vld [vmem:[%s1 + $0x70] sm:$0xf]
      %v299 = vld [vmem:[%s1 + $0x74] sm:$0xf]
      %v300 = vld [vmem:[%s1 + $0x78] sm:$0xf]
      %v301 = vld [vmem:[%s1 + $0x7c] sm:$0xf]
      %v302 = vld [vmem:[%s1 + $0x80] sm:$0xf]
      %v303 = vld [vmem:[%s1 + $0x84] sm:$0xf]
      %v304 = vld [vmem:[%s1 + $0x88] sm:$0xf]
      %v305 = vld [vmem:[%s1 + $0x8c] sm:$0xf]
      %v306 = vld [vmem:[%s1 + $0x90] sm:$0xf]
      %v307 = vld [vmem:[%s1 + $0x94] sm:$0xf]
      %v308 = vld [vmem:[%s1 + $0x98] sm:$0xf]
      %v309 = vld [vmem:[%s1 + $0x9c] sm:$0xf]
      %v310 = vld [vmem:[%s1 + $0xa0] sm:$0xf]
      %v311 = vld [vmem:[%s1 + $0xa4] sm:$0xf]
      %v312 = vld [vmem:[%s1 + $0xa8] sm:$0xf]
      %v313 = vld [vmem:[%s1 + $0xac] sm:$0xf]
      %v314 = vld [vmem:[%s1 + $0xb0] sm:$0xf]
      %v315 = vld [vmem:[%s1 + $0xb4] sm:$0xf]
      %v316 = vld [vmem:[%s1 + $0xb8] sm:$0xf]
      %v317 = vld [vmem:[%s1 + $0xbc] sm:$0xf]
      %v318 = vld [vmem:[%s1 + $0xc0] sm:$0xf]
      %v319 = vld [vmem:[%s1 + $0xc4] sm:$0xf]
      %v320 = vld [vmem:[%s1 + $0xc8] sm:$0xf]
      %v321 = vld [vmem:[%s1 + $0xcc] sm:$0xf]
      %v322 = vld [vmem:[%s1 + $0xd0] sm:$0xf]
      %v323 = vld [vmem:[%s1 + $0xd4] sm:$0xf]
      %v324 = vld [vmem:[%s1 + $0xd8] sm:$0xf]
      %v325 = vld [vmem:[%s1 + $0xdc] sm:$0xf]
      %v326 = vld [vmem:[%s1 + $0xe0] sm:$0xf]
      %v327 = vld [vmem:[%s1 + $0xe4] sm:$0xf]
      %v328 = vld [vmem:[%s1 + $0xe8] sm:$0xf]
      %v329 = vld [vmem:[%s1 + $0xec] sm:$0xf]
      %v330 = vld [vmem:[%s1 + $0xf0] sm:$0xf]
      %v331 = vld [vmem:[%s1 + $0xf4] sm:$0xf]
      %v332 = vld [vmem:[%s1 + $0xf8] sm:$0xf]
      %v333 = vld [vmem:[%s1 + $0xfc] sm:$0xf]
      %v334 = vld [vmem:[%s1 + $0x100] sm:$0xf]
      %v335 = vld [vmem:[%s1 + $0x104] sm:$0xf]
      %v336 = vld [vmem:[%s1 + $0x108] sm:$0xf]
      %v337 = vld [vmem:[%s1 + $0x10c] sm:$0xf]
      %v338 = vld [vmem:[%s1 + $0x110] sm:$0xf]
      %v339 = vld [vmem:[%s1 + $0x114] sm:$0xf]
      %v340 = vld [vmem:[%s1 + $0x118] sm:$0xf]
      %v341 = vld [vmem:[%s1 + $0x11c] sm:$0xf]
      %v342 = vld [vmem:[%s1 + $0x120] sm:$0xf]
      %v343 = vld [vmem:[%s1 + $0x124] sm:$0xf]
      %v344 = vld [vmem:[%s1 + $0x128] sm:$0xf]
      %v345 = vld [vmem:[%s1 + $0x12c] sm:$0xf]
      %v346 = vld [vmem:[%s1 + $0x130] sm:$0xf]
      %v347 = vld [vmem:[%s1 + $0x134] sm:$0xf]
      %v348 = vld [vmem:[%s1 + $0x138] sm:$0xf]
      %v349 = vld [vmem:[%s1 + $0x13c] sm:$0xf]
      %v350 = vld [vmem:[%s1 + $0x140] sm:$0xf]
      %v351 = vld [vmem:[%s1 + $0x144] sm:$0xf]
      %v352 = vld [vmem:[%s1 + $0x148] sm:$0xf]
      %v353 = vld [vmem:[%s1 + $0x14c] sm:$0xf]
      %v354 = vld [vmem:[%s1 + $0x150] sm:$0xf]
      %v355 = vld [vmem:[%s1 + $0x154] sm:$0xf]
      %v356 = vld [vmem:[%s1 + $0x158] sm:$0xf]
      %v357 = vld [vmem:[%s1 + $0x15c] sm:$0xf]
      %v358 = vld [vmem:[%s1 + $0x160] sm:$0xf]
      %v359 = vld [vmem:[%s1 + $0x164] sm:$0xf]
      %v360 = vld [vmem:[%s1 + $0x168] sm:$0xf]
      %v361 = vld [vmem:[%s1 + $0x16c] sm:$0xf]
      %v362 = vld [vmem:[%s1 + $0x170] sm:$0xf]
      %v363 = vld [vmem:[%s1 + $0x174] sm:$0xf]
      %v364 = vld [vmem:[%s1 + $0x178] sm:$0xf]
      %v365 = vld [vmem:[%s1 + $0x17c] sm:$0xf]
      %v462 = vunpack.c.l.b16 %v270
      %v463 = vunpack.c.l.b16 %v271
      %v464 = vunpack.c.l.b16 %v272
      %v465 = vunpack.c.l.b16 %v273
      %v466 = vunpack.c.l.b16 %v274
      %v467 = vunpack.c.l.b16 %v275
      %v468 = vunpack.c.l.b16 %v276
      %v469 = vunpack.c.l.b16 %v277
      %v470 = vunpack.c.l.b16 %v278
      %v471 = vunpack.c.l.b16 %v279
      %v472 = vunpack.c.l.b16 %v280
      %v473 = vunpack.c.l.b16 %v281
      %v474 = vunpack.c.l.b16 %v282
      %v475 = vunpack.c.l.b16 %v283
      %v476 = vunpack.c.l.b16 %v284
      %v477 = vunpack.c.l.b16 %v285
      %v478 = vunpack.c.l.b16 %v286
      %v479 = vunpack.c.l.b16 %v287
      %v480 = vunpack.c.l.b16 %v288
      %v481 = vunpack.c.l.b16 %v289
      %v482 = vunpack.c.l.b16 %v290
      %v483 = vunpack.c.l.b16 %v291
      %v484 = vunpack.c.l.b16 %v292
      %v485 = vunpack.c.l.b16 %v293
      %v486 = vunpack.c.l.b16 %v294
      %v487 = vunpack.c.l.b16 %v295
      %v488 = vunpack.c.l.b16 %v296
      %v489 = vunpack.c.l.b16 %v297
      %v490 = vunpack.c.l.b16 %v298
      %v491 = vunpack.c.l.b16 %v299
      %v492 = vunpack.c.l.b16 %v300
      %v493 = vunpack.c.l.b16 %v301
      %v494 = vunpack.c.l.b16 %v302
      %v495 = vunpack.c.l.b16 %v303
      %v496 = vunpack.c.l.b16 %v304
      %v497 = vunpack.c.l.b16 %v305
      %v498 = vunpack.c.l.b16 %v306
      %v499 = vunpack.c.l.b16 %v307
      %v500 = vunpack.c.l.b16 %v308
      %v501 = vunpack.c.l.b16 %v309
      %v502 = vunpack.c.l.b16 %v310
      %v503 = vunpack.c.l.b16 %v311
      %v504 = vunpack.c.l.b16 %v312
      %v505 = vunpack.c.l.b16 %v313
      %v506 = vunpack.c.l.b16 %v314
      %v507 = vunpack.c.l.b16 %v315
      %v508 = vunpack.c.l.b16 %v316
      %v509 = vunpack.c.l.b16 %v317
      %v510 = vunpack.c.l.b16 %v318
      %v511 = vunpack.c.l.b16 %v319
      %v512 = vunpack.c.l.b16 %v320
      %v513 = vunpack.c.l.b16 %v321
      %v514 = vunpack.c.l.b16 %v322
      %v515 = vunpack.c.l.b16 %v323
      %v516 = vunpack.c.l.b16 %v324
      %v517 = vunpack.c.l.b16 %v325
      %v518 = vunpack.c.l.b16 %v326
      %v519 = vunpack.c.l.b16 %v327
      %v520 = vunpack.c.l.b16 %v328
      %v521 = vunpack.c.l.b16 %v329
      %v522 = vunpack.c.l.b16 %v330
      %v523 = vunpack.c.l.b16 %v331
      %v524 = vunpack.c.l.b16 %v332
      %v525 = vunpack.c.l.b16 %v333
      %v526 = vunpack.c.l.b16 %v334
      %v527 = vunpack.c.l.b16 %v335
      %v528 = vunpack.c.l.b16 %v336
      %v529 = vunpack.c.l.b16 %v337
      %v530 = vunpack.c.l.b16 %v338
      %v531 = vunpack.c.l.b16 %v339
      %v532 = vunpack.c.l.b16 %v340
      %v533 = vunpack.c.l.b16 %v341
      %v534 = vunpack.c.l.b16 %v342
      %v535 = vunpack.c.l.b16 %v343
      %v536 = vunpack.c.l.b16 %v344
      %v537 = vunpack.c.l.b16 %v345
      %v538 = vunpack.c.l.b16 %v346
      %v539 = vunpack.c.l.b16 %v347
      %v540 = vunpack.c.l.b16 %v348
      %v541 = vunpack.c.l.b16 %v349
      %v542 = vunpack.c.l.b16 %v350
      %v543 = vunpack.c.l.b16 %v351
      %v544 = vunpack.c.l.b16 %v352
      %v545 = vunpack.c.l.b16 %v353
      %v546 = vunpack.c.l.b16 %v354
      %v547 = vunpack.c.l.b16 %v355
      %v548 = vunpack.c.l.b16 %v356
      %v549 = vunpack.c.l.b16 %v357
      %v550 = vunpack.c.l.b16 %v358
      %v551 = vunpack.c.l.b16 %v359
      %v552 = vunpack.c.l.b16 %v360
      %v553 = vunpack.c.l.b16 %v361
      %v554 = vunpack.c.l.b16 %v362
      %v555 = vunpack.c.l.b16 %v363
      %v556 = vunpack.c.l.b16 %v364
      %v557 = vunpack.c.l.b16 %v365
      %v558 = vpack.c.b16 %v463, %v462
      %v559 = vpack.c.b16 %v465, %v464
      %v560 = vpack.c.b16 %v467, %v466
      %v561 = vpack.c.b16 %v469, %v468
      %v562 = vpack.c.b16 %v471, %v470
      %v563 = vpack.c.b16 %v473, %v472
      %v564 = vpack.c.b16 %v475, %v474
      %v565 = vpack.c.b16 %v477, %v476
      %v566 = vpack.c.b16 %v479, %v478
      %v567 = vpack.c.b16 %v481, %v480
      %v568 = vpack.c.b16 %v483, %v482
      %v569 = vpack.c.b16 %v485, %v484
      %v570 = vpack.c.b16 %v487, %v486
      %v571 = vpack.c.b16 %v489, %v488
      %v572 = vpack.c.b16 %v491, %v490
      %v573 = vpack.c.b16 %v493, %v492
      %v574 = vpack.c.b16 %v495, %v494
      %v575 = vpack.c.b16 %v497, %v496
      %v576 = vpack.c.b16 %v499, %v498
      %v577 = vpack.c.b16 %v501, %v500
      %v578 = vpack.c.b16 %v503, %v502
      %v579 = vpack.c.b16 %v505, %v504
      %v580 = vpack.c.b16 %v507, %v506
      %v581 = vpack.c.b16 %v509, %v508
      %v582 = vpack.c.b16 %v511, %v510
      %v583 = vpack.c.b16 %v513, %v512
      %v584 = vpack.c.b16 %v515, %v514
      %v585 = vpack.c.b16 %v517, %v516
      %v586 = vpack.c.b16 %v519, %v518
      %v587 = vpack.c.b16 %v521, %v520
      %v588 = vpack.c.b16 %v523, %v522
      %v589 = vpack.c.b16 %v525, %v524
      %v590 = vpack.c.b16 %v527, %v526
      %v591 = vpack.c.b16 %v529, %v528
      %v592 = vpack.c.b16 %v531, %v530
      %v593 = vpack.c.b16 %v533, %v532
      %v594 = vpack.c.b16 %v535, %v534
      %v595 = vpack.c.b16 %v537, %v536
      %v596 = vpack.c.b16 %v539, %v538
      %v597 = vpack.c.b16 %v541, %v540
      %v598 = vpack.c.b16 %v543, %v542
      %v599 = vpack.c.b16 %v545, %v544
      %v600 = vpack.c.b16 %v547, %v546
      %v601 = vpack.c.b16 %v549, %v548
      %v602 = vpack.c.b16 %v551, %v550
      %v603 = vpack.c.b16 %v553, %v552
      %v604 = vpack.c.b16 %v555, %v554
      %v605 = vpack.c.b16 %v557, %v556
      %654 = vmatpush.bf16.msra.mxu0 %v565
      %655 = vmatpush.bf16.msra.mxu0 %v564
      %656 = vmatpush.bf16.msra.mxu0 %v563
      %657 = vmatpush.bf16.msra.mxu0 %v562
      %658 = vmatpush.bf16.msra.mxu0 %v561
      %659 = vmatpush.bf16.msra.mxu0 %v560
      %660 = vmatpush.bf16.msra.mxu0 %v559
      %661 = vmatpush.bf16.msra.mxu0 %v558
      %662 = vmatmul.bf16.gmra.mxu0 %v264
      %v663 = vpop.f32.mrf.mxu0
      %v664 = vadd.f32 0.0, %v663
      %v665 = vpop.f32.mrf.mxu0
      %v666 = vadd.f32 0.0, %v665
      %667 = vdwg.mxu0
      %668 = vmatpush.bf16.msra.mxu0 %v573
      %669 = vmatpush.bf16.msra.mxu0 %v572
      %670 = vmatpush.bf16.msra.mxu0 %v571
      %671 = vmatpush.bf16.msra.mxu0 %v570
      %672 = vmatpush.bf16.msra.mxu0 %v569
      %673 = vmatpush.bf16.msra.mxu0 %v568
      %674 = vmatpush.bf16.msra.mxu0 %v567
      %675 = vmatpush.bf16.msra.mxu0 %v566
      %676 = vmatmul.bf16.gmra.mxu0 %v265
      %v677 = vpop.f32.mrf.mxu0
      %v678 = vadd.f32 %v664, %v677
      %v679 = vpop.f32.mrf.mxu0
      %v680 = vadd.f32 %v666, %v679
      %681 = vdwg.mxu0
      %682 = vmatpush.bf16.msra.mxu0 %v581
      %683 = vmatpush.bf16.msra.mxu0 %v580
      %684 = vmatpush.bf16.msra.mxu0 %v579
      %685 = vmatpush.bf16.msra.mxu0 %v578
      %686 = vmatpush.bf16.msra.mxu0 %v577
      %687 = vmatpush.bf16.msra.mxu0 %v576
      %688 = vmatpush.bf16.msra.mxu0 %v575
      %689 = vmatpush.bf16.msra.mxu0 %v574
      %690 = vmatmul.bf16.gmra.mxu0 %v266
      %v691 = vpop.f32.mrf.mxu0
      %v692 = vadd.f32 %v678, %v691
      %v693 = vpop.f32.mrf.mxu0
      %v694 = vadd.f32 %v680, %v693
      %695 = vdwg.mxu0
      %696 = vmatpush.bf16.msra.mxu0 %v589
      %697 = vmatpush.bf16.msra.mxu0 %v588
      %698 = vmatpush.bf16.msra.mxu0 %v587
      %699 = vmatpush.bf16.msra.mxu0 %v586
      %700 = vmatpush.bf16.msra.mxu0 %v585
      %701 = vmatpush.bf16.msra.mxu0 %v584
      %702 = vmatpush.bf16.msra.mxu0 %v583
      %703 = vmatpush.bf16.msra.mxu0 %v582
      %704 = vmatmul.bf16.gmra.mxu0 %v267
      %v705 = vpop.f32.mrf.mxu0
      %v706 = vadd.f32 %v692, %v705
      %v707 = vpop.f32.mrf.mxu0
      %v708 = vadd.f32 %v694, %v707
      %709 = vdwg.mxu0
      %710 = vmatpush.bf16.msra.mxu0 %v597
      %711 = vmatpush.bf16.msra.mxu0 %v596
      %712 = vmatpush.bf16.msra.mxu0 %v595
      %713 = vmatpush.bf16.msra.mxu0 %v594
      %714 = vmatpush.bf16.msra.mxu0 %v593
      %715 = vmatpush.bf16.msra.mxu0 %v592
      %716 = vmatpush.bf16.msra.mxu0 %v591
      %717 = vmatpush.bf16.msra.mxu0 %v590
      %718 = vmatmul.bf16.gmra.mxu0 %v268
      %v719 = vpop.f32.mrf.mxu0
      %v720 = vadd.f32 %v706, %v719
      %v721 = vpop.f32.mrf.mxu0
      %v722 = vadd.f32 %v708, %v721
      %723 = vdwg.mxu0
      %724 = vmatpush.bf16.msra.mxu0 %v605
      %725 = vmatpush.bf16.msra.mxu0 %v604
      %726 = vmatpush.bf16.msra.mxu0 %v603
      %727 = vmatpush.bf16.msra.mxu0 %v602
      %728 = vmatpush.bf16.msra.mxu0 %v601
      %729 = vmatpush.bf16.msra.mxu0 %v600
      %730 = vmatpush.bf16.msra.mxu0 %v599
      %731 = vmatpush.bf16.msra.mxu0 %v598
      %732 = vmatmul.bf16.gmra.mxu0 %v269
      %v733 = vpop.f32.mrf.mxu0
      %v734 = vadd.f32 %v720, %v733
      %v735 = vpop.f32.mrf.mxu0
      %v736 = vadd.f32 %v722, %v735
      %737 = vdwg.mxu0
      %v738 = vld [vmem:[%s2] sm:$0x1]
      %vm741 = vcmask 1040384
      %v742 = vrot.slane %v734, 7
      %v743 = vrot.slane %v736, 7
      %v744 = vsel %vm741, %v742, %v743
      %v748 = vsel %vm741, %v738, %v742
      %v749 = vld [vmem:[%s3] sm:$0xff]
      %v750 = vld [vmem:[%s3 + $0x8] sm:$0xff]
      %v751 = vld [vmem:[%s3 + $0x10] sm:$0x1]
      %v752 = vadd.f32 %v748, %v749
      %v753 = vadd.f32 %v744, %v750
      %v754 = vadd.f32 %v743, %v751
      %v755 = vld [vmem:[%s4] sm:$0x1]
      %v756 = vld [vmem:[%s5] sm:$0x1]
      %757 = vadd.xlane.f32.xlu0 %v752
      %v758 = vpop.xlane.xlu0 %757
      %759 = vadd.xlane.f32.xlu0 %v753
      %v760 = vpop.xlane.xlu0 %759
      %v761 = vsel %vm741, %v754, 0.0
      %762 = vadd.xlane.f32.xlu0 %v761
      %v763 = vpop.xlane.xlu0 %762
      %v764 = vrcp.pop 128.0
      %v765 = vmul.f32 128.0, %v764
      %v766 = vsub.f32 1.0, %v765
      %v767 = vmul.f32 %v764, %v766
      %v768 = vadd.f32 %v764, %v767
      %vm769 = vweird.f32 %v764
      %v770 = vsel %vm769, %v764, %v768
      %v771 = vmul.f32 %v758, %v770
      %v772 = vmul.f32 %v760, %v770
      %v773 = vmul.f32 %v763, %v770
      %v774 = vsub.f32 %v752, %v771
      %v775 = vsub.f32 %v753, %v772
      %v776 = vsub.f32 %v754, %v773
      %v777 = vmul.f32 %v774, %v774
      %v778 = vmul.f32 %v775, %v775
      %v779 = vmul.f32 %v776, %v776
      %780 = vadd.xlane.f32.xlu0 %v777
      %v781 = vpop.xlane.xlu0 %780
      %782 = vadd.xlane.f32.xlu0 %v778
      %v783 = vpop.xlane.xlu0 %782
      %v784 = vsel %vm741, %v779, 0.0
      %785 = vadd.xlane.f32.xlu0 %v784
      %v786 = vpop.xlane.xlu0 %785
      %v787 = vmul.f32 %v781, %v770
      %v788 = vmul.f32 %v783, %v770
      %v789 = vmul.f32 %v786, %v770
      %v790 = vadd.f32 %v787, 1e-05
      %v791 = vadd.f32 %v788, 1e-05
      %v792 = vadd.f32 %v789, 1e-05
      %v793 = vrsqrt.pop %v790
      %v794 = vmul.f32 %v793, %v790
      %v795 = vmul.f32 %v794, %v793
      %v796 = vmul.f32 0.5, %v795
      %v797 = vsub.f32 1.5, %v796
      %v798 = vmul.f32 %v793, %v797
      %vm799 = vweird.f32 %v790
      %vm800 = vweird.f32 %v793
      %vm801 = vmor %vm799, %vm800
      %v802 = vsel %vm801, %v793, %v798
      %v803 = vrsqrt.pop %v791
      %v804 = vmul.f32 %v803, %v791
      %v805 = vmul.f32 %v804, %v803
      %v806 = vmul.f32 0.5, %v805
      %v807 = vsub.f32 1.5, %v806
      %v808 = vmul.f32 %v803, %v807
      %vm809 = vweird.f32 %v791
      %vm810 = vweird.f32 %v803
      %vm811 = vmor %vm809, %vm810
      %v812 = vsel %vm811, %v803, %v808
      %v813 = vrsqrt.pop %v792
      %v814 = vmul.f32 %v813, %v792
      %v815 = vmul.f32 %v814, %v813
      %v816 = vmul.f32 0.5, %v815
      %v817 = vsub.f32 1.5, %v816
      %v818 = vmul.f32 %v813, %v817
      %vm819 = vweird.f32 %v792
      %vm820 = vweird.f32 %v813
      %vm821 = vmor %vm819, %vm820
      %v822 = vsel %vm821, %v813, %v818
      %v823 = vmul.f32 %v774, %v802
      %v824 = vmul.f32 %v775, %v812
      %v825 = vmul.f32 %v776, %v822
      %v827 = vperm.slane %v755, 0
      %v829 = vmul.f32 %v823, %v827
      %v830 = vmul.f32 %v824, %v827
      %v831 = vmul.f32 %v825, %v827
      %v833 = vperm.slane %v756, 0
      %v835 = vadd.f32 %v829, %v833
      %v836 = vadd.f32 %v830, %v833
      %v837 = vadd.f32 %v831, %v833
      %838 = vst [vmem:[%s251] sm:$0xff] %v835
      %839 = vst [vmem:[%s251 + $0x8] sm:$0xff] %v836
      %840 = vst [vmem:[%s251 + $0x10] sm:$0x1] %v837
      %p841 = scmp.lt.s32.totalorder %s17, 1
      %s842 = scalar_select %p841, %s17, 1
      %s843 = smul.addr %s842, 3
      %s844 = smul.addr %s843, 8
      %s845 = scalar_lea.vmem %s6, %s844
      // Predicated region
      $region45: #{ts_model_forward.3} parent=43 // pred_check
        %p846 = pneg %p166
      $region46: #{ts_model_forward.3} parent=43 // pred_check_branch
        %848 = sbr.rel (%p846) target = $region48
      $region47: #{ts_model_forward.3} parent=43 // pred_region
        _
      $region48: #{ts_model_forward.3} parent=43 // pred_fallthru
        _
    $region44: #{ts_model_forward.3} parent=5 // pred_fallthru
      _
    %p849 = scmp.le.s32.totalorder 2, %s12
    // Predicated region
    $region49: #{ts_model_forward.3} parent=5 // pred_check
      %p850 = pneg %p849
    $region50: #{ts_model_forward.3} parent=5 // pred_check_branch
      %852 = sbr.rel (%p850) target = $region52
    $region51: #{ts_model_forward.3} parent=5 // pred_region
      %s853 = ssub.s32 %s12, 2
      // Predicated region
      $region53: #{ts_model_forward.3} parent=51 // pred_check
        %p854 = pneg %p172
      $region54: #{ts_model_forward.3} parent=51 // pred_check_branch
        %856 = sbr.rel (%p854) target = $region56
      $region55: #{ts_model_forward.3} parent=51 // pred_region
        %p857 = scmp.lt.s32.totalorder %s18, 1
        %s858 = scalar_select %p857, %s18, 1
        %s859 = smul.addr %s858, 3
        %s860 = smul.addr %s859, 8
        %s861 = scalar_lea.vmem %s6, %s860
      $region56: #{ts_model_forward.3} parent=51 // pred_fallthru
        _
    $region52: #{ts_model_forward.3} parent=5 // pred_fallthru
      _
  $region6: #{ts_model_forward.3} parent=0 // loop_footer
    %s16 = sadd.s32 1, %s12
  $region7: #{ts_model_forward.3} parent=0 // loop_footer_branch
    %11 = sbr.rel target = $region3
  $region8: #{ts_model_forward.3} parent=0 // loop_exit
    _

// kernel: ts_model_forward.5
$region0: #{ts_model_forward.5}
  #allocation0 [shape = 'u32[]', space=smem, size = 0x4, offset = 0x4, fixed_abs, tag = 'smem constant byte address 0x4 - core index']
  #allocation1 [shape = 'u32[72,128]{1,0:T(1,128)}', space=vmem, size = 0x9000, scoped, tag = 'internal scratch']
  %s0 = inlined_call_operand.vmem [shape: f32[2,128], index: 0, kind: input, shape index: {}]
  %s1 = inlined_call_operand.vmem [shape: f32[1,128], index: 1, kind: input, shape index: {}]
  %s2 = inlined_call_operand.vmem [shape: f32[1,128], index: 2, kind: input, shape index: {}]
  %s3 = inlined_call_operand.vmem [shape: bf16[128,128], index: 3, kind: input, shape index: {}]
  %s4 = inlined_call_operand.vmem [shape: f32[1,128], index: 4, kind: input, shape index: {}]
  %s5 = inlined_call_operand.hbm [shape: f32[2,128], index: 5, kind: output, shape index: {}]
  %s6 = sld [smem:[#allocation0]]
  $region30: #{ts_model_forward.5} parent=0
    _
  %s8 = ssub.s32 1, %s6
  %s9 = scalar_select 0, %s8, %s6
  $region1: #{ts_model_forward.5} parent=0
    #allocation2 [shape = 'u8[1024]{0}', space=vmem, size = 0x400, scoped, tag = 'output window, operand 0, single buffered']
    #allocation3 [shape = 's32[1]{0}', space=sflag, size = 0x4, scoped, tag = 'scoped memory for ts_model_forward.5']
    %10 = vsyncpa [#allocation3], 0
    // Predicated region
    $region2: #{ts_model_forward.5} parent=1 // pred_check
      _
    $region3: #{ts_model_forward.5} parent=1 // pred_check_branch
      %12 = sbr.rel (0) target = $region5
    $region4: #{ts_model_forward.5} parent=1 // pred_region
      _
    $region5: #{ts_model_forward.5} parent=1 // pred_fallthru
      _
    // Predicated region
    $region6: #{ts_model_forward.5} parent=1 // pred_check
      _
    $region7: #{ts_model_forward.5} parent=1 // pred_check_branch
      %14 = sbr.rel (0) target = $region9
    $region8: #{ts_model_forward.5} parent=1 // pred_region
      _
    $region9: #{ts_model_forward.5} parent=1 // pred_fallthru
      _
    // Predicated region
    $region10: #{ts_model_forward.5} parent=1 // pred_check
      _
    $region11: #{ts_model_forward.5} parent=1 // pred_check_branch
      %16 = sbr.rel (0) target = $region13
    $region12: #{ts_model_forward.5} parent=1 // pred_region
      _
    $region13: #{ts_model_forward.5} parent=1 // pred_fallthru
      _
    // Predicated region
    $region14: #{ts_model_forward.5} parent=1 // pred_check
      _
    $region15: #{ts_model_forward.5} parent=1 // pred_check_branch
      %18 = sbr.rel (0) target = $region17
    $region16: #{ts_model_forward.5} parent=1 // pred_region
      _
    $region17: #{ts_model_forward.5} parent=1 // pred_fallthru
      _
    // Predicated region
    $region18: #{ts_model_forward.5} parent=1 // pred_check
      _
    $region19: #{ts_model_forward.5} parent=1 // pred_check_branch
      %20 = sbr.rel (0) target = $region21
    $region20: #{ts_model_forward.5} parent=1 // pred_region
      _
    $region21: #{ts_model_forward.5} parent=1 // pred_fallthru
      _
    %v21 = vld [vmem:[%s0] sm:$0x3]
    %v22 = vld [vmem:[%s1] sm:$0x1]
    %v23 = vld [vmem:[%s2] sm:$0x1]
    %vm24 = vcmask 1041408
    %v25 = vsel %vm24, %v21, 0.0
    %26 = vadd.xlane.f32.xlu0 %v25
    %v27 = vpop.xlane.xlu0 %26
    %v28 = vrcp.pop 128.0
    %v29 = vmul.f32 128.0, %v28
    %v30 = vsub.f32 1.0, %v29
    %v31 = vmul.f32 %v28, %v30
    %v32 = vadd.f32 %v28, %v31
    %vm33 = vweird.f32 %v28
    %v34 = vsel %vm33, %v28, %v32
    %v35 = vmul.f32 %v27, %v34
    %v36 = vsub.f32 %v21, %v35
    %v37 = vmul.f32 %v36, %v36
    %v38 = vsel %vm24, %v37, 0.0
    %39 = vadd.xlane.f32.xlu0 %v38
    %v40 = vpop.xlane.xlu0 %39
    %v41 = vmul.f32 %v40, %v34
    %v42 = vadd.f32 %v41, 1e-05
    %v43 = vrsqrt.pop %v42
    %v44 = vmul.f32 %v43, %v42
    %v45 = vmul.f32 %v44, %v43
    %v46 = vmul.f32 0.5, %v45
    %v47 = vsub.f32 1.5, %v46
    %v48 = vmul.f32 %v43, %v47
    %vm49 = vweird.f32 %v42
    %vm50 = vweird.f32 %v43
    %vm51 = vmor %vm49, %vm50
    %v52 = vsel %vm51, %v43, %v48
    %v53 = vmul.f32 %v36, %v52
    %v55 = vperm.slane %v22, 0
    %v57 = vmul.f32 %v53, %v55
    %v59 = vperm.slane %v23, 0
    %v61 = vadd.f32 %v57, %v59
    %v62 = vpack.c.bf16 %v61, %v61
    %v63 = vld [vmem:[%s3] sm:$0xf]
    %v64 = vld [vmem:[%s3 + $0x4] sm:$0xf]
    %v65 = vld [vmem:[%s3 + $0x8] sm:$0xf]
    %v66 = vld [vmem:[%s3 + $0xc] sm:$0xf]
    %v67 = vld [vmem:[%s3 + $0x10] sm:$0xf]
    %v68 = vld [vmem:[%s3 + $0x14] sm:$0xf]
    %v69 = vld [vmem:[%s3 + $0x18] sm:$0xf]
    %v70 = vld [vmem:[%s3 + $0x1c] sm:$0xf]
    %v71 = vld [vmem:[%s3 + $0x20] sm:$0xf]
    %v72 = vld [vmem:[%s3 + $0x24] sm:$0xf]
    %v73 = vld [vmem:[%s3 + $0x28] sm:$0xf]
    %v74 = vld [vmem:[%s3 + $0x2c] sm:$0xf]
    %v75 = vld [vmem:[%s3 + $0x30] sm:$0xf]
    %v76 = vld [vmem:[%s3 + $0x34] sm:$0xf]
    %v77 = vld [vmem:[%s3 + $0x38] sm:$0xf]
    %v78 = vld [vmem:[%s3 + $0x3c] sm:$0xf]
    %v79 = vld [vmem:[%s4] sm:$0x1]
    %v81 = vperm.slane %v79, 0
    %v99 = vunpack.c.l.b16 %v63
    %v100 = vunpack.c.l.b16 %v64
    %v101 = vunpack.c.l.b16 %v65
    %v102 = vunpack.c.l.b16 %v66
    %v103 = vunpack.c.l.b16 %v67
    %v104 = vunpack.c.l.b16 %v68
    %v105 = vunpack.c.l.b16 %v69
    %v106 = vunpack.c.l.b16 %v70
    %v107 = vunpack.c.l.b16 %v71
    %v108 = vunpack.c.l.b16 %v72
    %v109 = vunpack.c.l.b16 %v73
    %v110 = vunpack.c.l.b16 %v74
    %v111 = vunpack.c.l.b16 %v75
    %v112 = vunpack.c.l.b16 %v76
    %v113 = vunpack.c.l.b16 %v77
    %v114 = vunpack.c.l.b16 %v78
    %v115 = vpack.c.b16 %v100, %v99
    %v116 = vpack.c.b16 %v102, %v101
    %v117 = vpack.c.b16 %v104, %v103
    %v118 = vpack.c.b16 %v106, %v105
    %v119 = vpack.c.b16 %v108, %v107
    %v120 = vpack.c.b16 %v110, %v109
    %v121 = vpack.c.b16 %v112, %v111
    %v122 = vpack.c.b16 %v114, %v113
    %131 = vmatpush.bf16.msra.mxu0 %v122
    %132 = vmatpush.bf16.msra.mxu0 %v121
    %133 = vmatpush.bf16.msra.mxu0 %v120
    %134 = vmatpush.bf16.msra.mxu0 %v119
    %135 = vmatpush.bf16.msra.mxu0 %v118
    %136 = vmatpush.bf16.msra.mxu0 %v117
    %137 = vmatpush.bf16.msra.mxu0 %v116
    %138 = vmatpush.bf16.msra.mxu0 %v115
    %139 = vmatmul.bf16.gmra.mxu0 %v62
    %v140 = vpop.f32.mrf.mxu0
    %v141 = vadd.f32 %v81, %v140
    %v142 = vpop.f32.mrf.mxu0
    %143 = vdwg.mxu0
    %144 = vst [vmem:[#allocation2] sm:$0x3] %v141
    // Predicated region
    $region22: #{ts_model_forward.5} parent=1 // pred_check
      _
    $region23: #{ts_model_forward.5} parent=1 // pred_check_branch
      %146 = sbr.rel (0) target = $region25
    $region24: #{ts_model_forward.5} parent=1 // pred_region
      %148 = vsyncadd [#allocation3], 0
      %s150 = sshll.u32 [#allocation2], 4
      %s151 = int_to_ptr.vmem [resolvable:$true] %s150
      %s152 = sshll.u32 %s5, 4
      %s153 = int_to_ptr.hbm [resolvable:$true] %s152
      %155 = dma.vmem_to_hbm [thread:$0]  %s151, 32, %s153, [#allocation3]
    $region25: #{ts_model_forward.5} parent=1 // pred_fallthru
      _
    // Predicated region
    $region26: #{ts_model_forward.5} parent=1 // pred_check
      _
    $region27: #{ts_model_forward.5} parent=1 // pred_check_branch
      %157 = sbr.rel (0) target = $region29
    $region28: #{ts_model_forward.5} parent=1 // pred_region
      %159 = dma.done [#allocation3], 32
    $region29: #{ts_model_forward.5} parent=1 // pred_fallthru
      _
    %160 = vsyncpa [#allocation3], 1

// kernel: ts_model_forward.4
$region0: #{ts_model_forward.4}
  #allocation0 [shape = 'u32[]', space=smem, size = 0x4, offset = 0x4, fixed_abs, tag = 'smem constant byte address 0x4 - core index']
  #allocation1 [shape = 'u32[72,128]{1,0:T(1,128)}', space=vmem, size = 0x9000, scoped, tag = 'internal scratch']
  %s0 = inlined_call_operand.vmem [shape: f32[2,17,128], index: 0, kind: input, shape index: {}]
  %s1 = inlined_call_operand.vmem [shape: f32[2,1,128], index: 1, kind: input, shape index: {}]
  %s2 = inlined_call_operand.vmem [shape: f32[2,1,128], index: 2, kind: input, shape index: {}]
  %s3 = inlined_call_operand.vmem [shape: bf16[2,128,384], index: 3, kind: input, shape index: {}]
  %s4 = inlined_call_operand.vmem [shape: f32[2,1,384], index: 4, kind: input, shape index: {}]
  %s5 = inlined_call_operand.vmem [shape: bf16[2,128,128], index: 5, kind: input, shape index: {}]
  %s6 = inlined_call_operand.vmem [shape: f32[2,1,128], index: 6, kind: input, shape index: {}]
  %s7 = inlined_call_operand.vmem [shape: f32[2,1,128], index: 7, kind: input, shape index: {}]
  %s8 = inlined_call_operand.vmem [shape: f32[2,1,128], index: 8, kind: input, shape index: {}]
  %s9 = inlined_call_operand.vmem [shape: bf16[2,128,512], index: 9, kind: input, shape index: {}]
  %s10 = inlined_call_operand.vmem [shape: f32[2,1,512], index: 10, kind: input, shape index: {}]
  %s11 = inlined_call_operand.vmem [shape: bf16[2,512,128], index: 11, kind: input, shape index: {}]
  %s12 = inlined_call_operand.vmem [shape: f32[2,1,128], index: 12, kind: input, shape index: {}]
  %s13 = inlined_call_operand.vmem [shape: f32[2,17,128], index: 13, kind: output, shape index: {}]
  %s14 = sld [smem:[#allocation0]]
  $region89: #{ts_model_forward.4} parent=0
    _
  %s16 = ssub.s32 1, %s14
  %s17 = scalar_select 0, %s16, %s14
  loop: start=0, step=1, limit=6
  $region2: #{ts_model_forward.4} parent=0 // loop_pre_header
    _
  $region3: #{ts_model_forward.4} parent=0 // loop_header
    %s19 = sphi 0, %s23
    %p20 = scmp.ge.s32.totalorder %s19, 6
    %s26 = sphi 0, %s38
    %s27 = sphi 0, %s34
    %s28 = sphi 0, %s26
    %s29 = sphi 0, %s27
    %s30 = sphi 0, %s28
    %s31 = sphi 0, %s29
    %s41 = sphi 0, %s43
    %s44 = sphi 0, %s41
    %s45 = sphi 0, %s44
    %s61 = sphi 0, %s45
    %s67 = sphi 0, %s69
    %s70 = sphi 0, %s67
    %s71 = sphi 0, %s70
    %s87 = sphi 0, %s71
    %s93 = sphi 0, %s95
    %s96 = sphi 0, %s93
    %s97 = sphi 0, %s96
    %s113 = sphi 0, %s97
    %s119 = sphi 0, %s121
    %s122 = sphi 0, %s119
    %s123 = sphi 0, %s122
    %s139 = sphi 0, %s123
    %s145 = sphi 0, %s147
    %s148 = sphi 0, %s145
    %s149 = sphi 0, %s148
    %s165 = sphi 0, %s149
    %s171 = sphi 0, %s173
    %s174 = sphi 0, %s171
    %s175 = sphi 0, %s174
    %s191 = sphi 0, %s175
    %s197 = sphi 0, %s199
    %s200 = sphi 0, %s197
    %s201 = sphi 0, %s200
    %s217 = sphi 0, %s201
    %s223 = sphi 0, %s225
    %s226 = sphi 0, %s223
    %s227 = sphi 0, %s226
    %s243 = sphi 0, %s227
    %s249 = sphi 0, %s251
    %s252 = sphi 0, %s249
    %s253 = sphi 0, %s252
    %s269 = sphi 0, %s253
    %s275 = sphi 0, %s277
    %s278 = sphi 0, %s275
    %s279 = sphi 0, %s278
    %s295 = sphi 0, %s279
    %s301 = sphi 0, %s303
    %s304 = sphi 0, %s301
    %s305 = sphi 0, %s304
    %s321 = sphi 0, %s305
    %s327 = sphi 0, %s329
    %s330 = sphi 0, %s327
    %s331 = sphi 0, %s330
    %s347 = sphi 0, %s331
    %s353 = sphi 0, %s355
    %s356 = sphi 0, %s353
    %s357 = sphi 0, %s356
    %s373 = sphi 0, %s357
    %s379 = sphi 0, %s381
    %s382 = sphi 0, %s379
    %s383 = sphi 0, %s382
    %s399 = sphi 0, %s383
  $region4: #{ts_model_forward.4} parent=0 // loop_header_branch
    %22 = sbr.rel (%p20) target = $region8
  $region5: #{ts_model_forward.4} parent=0 // loop_body
    %s24 = ssub.s32 %s19, 1
    %s25 = ssub.s32 %s19, 2
    %s32 = sadd.s32 1, %s27
    %p33 = scmp.ge.s32.totalorder %s32, 2
    %s34 = scalar_select %p33, 0, %s32
    %s35 = sadd.s32 1, %s26
    %s36 = scalar_select %p33, %s35, %s26
    %p37 = scmp.ge.s32.totalorder %s36, 2
    %s38 = scalar_select %p37, 0, %s36
    %s39 = ssub.s32 %s26, %s38
    %p40 = scmp.eq.s32.totalorder %s39, 0
    %s42 = sadd.s32 %s41, 1
    %s43 = scalar_select %p40, %s41, %s42
    %p46 = pneg %p40
    %p47 = scmp.eq.s32.totalorder %s19, 3
    %p48 = por %p46, %p47
    %p49 = scmp.ne.s32.totalorder %s41, %s44
    %p50 = scmp.eq.s32.totalorder %s19, 0
    %p51 = por %p49, %p50
    %p52 = scmp.ne.s32.totalorder %s41, %s44
    %p53 = scmp.eq.s32.totalorder %s24, 3
    %p54 = por %p52, %p53
    %p55 = scmp.ne.s32.totalorder %s44, %s45
    %p56 = scmp.eq.s32.totalorder %s24, 0
    %p57 = por %p55, %p56
    %p58 = scmp.ne.s32.totalorder %s44, %s45
    %p59 = scmp.eq.s32.totalorder %s25, 3
    %p60 = por %p58, %p59
    %p62 = scmp.ne.s32.totalorder %s45, %s61
    %p63 = scmp.eq.s32.totalorder %s25, 0
    %p64 = por %p62, %p63
    %s65 = ssub.s32 %s27, %s34
    %p66 = scmp.eq.s32.totalorder %s65, 0
    %s68 = sadd.s32 %s67, 1
    %s69 = scalar_select %p66, %s67, %s68
    %p72 = pneg %p66
    %p73 = scmp.eq.s32.totalorder %s19, 3
    %p74 = por %p72, %p73
    %p75 = scmp.ne.s32.totalorder %s67, %s70
    %p76 = scmp.eq.s32.totalorder %s19, 0
    %p77 = por %p75, %p76
    %p78 = scmp.ne.s32.totalorder %s67, %s70
    %p79 = scmp.eq.s32.totalorder %s24, 3
    %p80 = por %p78, %p79
    %p81 = scmp.ne.s32.totalorder %s70, %s71
    %p82 = scmp.eq.s32.totalorder %s24, 0
    %p83 = por %p81, %p82
    %p84 = scmp.ne.s32.totalorder %s70, %s71
    %p85 = scmp.eq.s32.totalorder %s25, 3
    %p86 = por %p84, %p85
    %p88 = scmp.ne.s32.totalorder %s71, %s87
    %p89 = scmp.eq.s32.totalorder %s25, 0
    %p90 = por %p88, %p89
    %s91 = ssub.s32 %s27, %s34
    %p92 = scmp.eq.s32.totalorder %s91, 0
    %s94 = sadd.s32 %s93, 1
    %s95 = scalar_select %p92, %s93, %s94
    %p98 = pneg %p92
    %p99 = scmp.eq.s32.totalorder %s19, 3
    %p100 = por %p98, %p99
    %p101 = scmp.ne.s32.totalorder %s93, %s96
    %p102 = scmp.eq.s32.totalorder %s19, 0
    %p103 = por %p101, %p102
    %p104 = scmp.ne.s32.totalorder %s93, %s96
    %p105 = scmp.eq.s32.totalorder %s24, 3
    %p106 = por %p104, %p105
    %p107 = scmp.ne.s32.totalorder %s96, %s97
    %p108 = scmp.eq.s32.totalorder %s24, 0
    %p109 = por %p107, %p108
    %p110 = scmp.ne.s32.totalorder %s96, %s97
    %p111 = scmp.eq.s32.totalorder %s25, 3
    %p112 = por %p110, %p111
    %p114 = scmp.ne.s32.totalorder %s97, %s113
    %p115 = scmp.eq.s32.totalorder %s25, 0
    %p116 = por %p114, %p115
    %s117 = ssub.s32 %s27, %s34
    %p118 = scmp.eq.s32.totalorder %s117, 0
    %s120 = sadd.s32 %s119, 1
    %s121 = scalar_select %p118, %s119, %s120
    %p124 = pneg %p118
    %p125 = scmp.eq.s32.totalorder %s19, 3
    %p126 = por %p124, %p125
    %p127 = scmp.ne.s32.totalorder %s119, %s122
    %p128 = scmp.eq.s32.totalorder %s19, 0
    %p129 = por %p127, %p128
    %p130 = scmp.ne.s32.totalorder %s119, %s122
    %p131 = scmp.eq.s32.totalorder %s24, 3
    %p132 = por %p130, %p131
    %p133 = scmp.ne.s32.totalorder %s122, %s123
    %p134 = scmp.eq.s32.totalorder %s24, 0
    %p135 = por %p133, %p134
    %p136 = scmp.ne.s32.totalorder %s122, %s123
    %p137 = scmp.eq.s32.totalorder %s25, 3
    %p138 = por %p136, %p137
    %p140 = scmp.ne.s32.totalorder %s123, %s139
    %p141 = scmp.eq.s32.totalorder %s25, 0
    %p142 = por %p140, %p141
    %s143 = ssub.s32 %s27, %s34
    %p144 = scmp.eq.s32.totalorder %s143, 0
    %s146 = sadd.s32 %s145, 1
    %s147 = scalar_select %p144, %s145, %s146
    %p150 = pneg %p144
    %p151 = scmp.eq.s32.totalorder %s19, 3
    %p152 = por %p150, %p151
    %p153 = scmp.ne.s32.totalorder %s145, %s148
    %p154 = scmp.eq.s32.totalorder %s19, 0
    %p155 = por %p153, %p154
    %p156 = scmp.ne.s32.totalorder %s145, %s148
    %p157 = scmp.eq.s32.totalorder %s24, 3
    %p158 = por %p156, %p157
    %p159 = scmp.ne.s32.totalorder %s148, %s149
    %p160 = scmp.eq.s32.totalorder %s24, 0
    %p161 = por %p159, %p160
    %p162 = scmp.ne.s32.totalorder %s148, %s149
    %p163 = scmp.eq.s32.totalorder %s25, 3
    %p164 = por %p162, %p163
    %p166 = scmp.ne.s32.totalorder %s149, %s165
    %p167 = scmp.eq.s32.totalorder %s25, 0
    %p168 = por %p166, %p167
    %s169 = ssub.s32 %s27, %s34
    %p170 = scmp.eq.s32.totalorder %s169, 0
    %s172 = sadd.s32 %s171, 1
    %s173 = scalar_select %p170, %s171, %s172
    %p176 = pneg %p170
    %p177 = scmp.eq.s32.totalorder %s19, 3
    %p178 = por %p176, %p177
    %p179 = scmp.ne.s32.totalorder %s171, %s174
    %p180 = scmp.eq.s32.totalorder %s19, 0
    %p181 = por %p179, %p180
    %p182 = scmp.ne.s32.totalorder %s171, %s174
    %p183 = scmp.eq.s32.totalorder %s24, 3
    %p184 = por %p182, %p183
    %p185 = scmp.ne.s32.totalorder %s174, %s175
    %p186 = scmp.eq.s32.totalorder %s24, 0
    %p187 = por %p185, %p186
    %p188 = scmp.ne.s32.totalorder %s174, %s175
    %p189 = scmp.eq.s32.totalorder %s25, 3
    %p190 = por %p188, %p189
    %p192 = scmp.ne.s32.totalorder %s175, %s191
    %p193 = scmp.eq.s32.totalorder %s25, 0
    %p194 = por %p192, %p193
    %s195 = ssub.s32 %s27, %s34
    %p196 = scmp.eq.s32.totalorder %s195, 0
    %s198 = sadd.s32 %s197, 1
    %s199 = scalar_select %p196, %s197, %s198
    %p202 = pneg %p196
    %p203 = scmp.eq.s32.totalorder %s19, 3
    %p204 = por %p202, %p203
    %p205 = scmp.ne.s32.totalorder %s197, %s200
    %p206 = scmp.eq.s32.totalorder %s19, 0
    %p207 = por %p205, %p206
    %p208 = scmp.ne.s32.totalorder %s197, %s200
    %p209 = scmp.eq.s32.totalorder %s24, 3
    %p210 = por %p208, %p209
    %p211 = scmp.ne.s32.totalorder %s200, %s201
    %p212 = scmp.eq.s32.totalorder %s24, 0
    %p213 = por %p211, %p212
    %p214 = scmp.ne.s32.totalorder %s200, %s201
    %p215 = scmp.eq.s32.totalorder %s25, 3
    %p216 = por %p214, %p215
    %p218 = scmp.ne.s32.totalorder %s201, %s217
    %p219 = scmp.eq.s32.totalorder %s25, 0
    %p220 = por %p218, %p219
    %s221 = ssub.s32 %s27, %s34
    %p222 = scmp.eq.s32.totalorder %s221, 0
    %s224 = sadd.s32 %s223, 1
    %s225 = scalar_select %p222, %s223, %s224
    %p228 = pneg %p222
    %p229 = scmp.eq.s32.totalorder %s19, 3
    %p230 = por %p228, %p229
    %p231 = scmp.ne.s32.totalorder %s223, %s226
    %p232 = scmp.eq.s32.totalorder %s19, 0
    %p233 = por %p231, %p232
    %p234 = scmp.ne.s32.totalorder %s223, %s226
    %p235 = scmp.eq.s32.totalorder %s24, 3
    %p236 = por %p234, %p235
    %p237 = scmp.ne.s32.totalorder %s226, %s227
    %p238 = scmp.eq.s32.totalorder %s24, 0
    %p239 = por %p237, %p238
    %p240 = scmp.ne.s32.totalorder %s226, %s227
    %p241 = scmp.eq.s32.totalorder %s25, 3
    %p242 = por %p240, %p241
    %p244 = scmp.ne.s32.totalorder %s227, %s243
    %p245 = scmp.eq.s32.totalorder %s25, 0
    %p246 = por %p244, %p245
    %s247 = ssub.s32 %s27, %s34
    %p248 = scmp.eq.s32.totalorder %s247, 0
    %s250 = sadd.s32 %s249, 1
    %s251 = scalar_select %p248, %s249, %s250
    %p254 = pneg %p248
    %p255 = scmp.eq.s32.totalorder %s19, 3
    %p256 = por %p254, %p255
    %p257 = scmp.ne.s32.totalorder %s249, %s252
    %p258 = scmp.eq.s32.totalorder %s19, 0
    %p259 = por %p257, %p258
    %p260 = scmp.ne.s32.totalorder %s249, %s252
    %p261 = scmp.eq.s32.totalorder %s24, 3
    %p262 = por %p260, %p261
    %p263 = scmp.ne.s32.totalorder %s252, %s253
    %p264 = scmp.eq.s32.totalorder %s24, 0
    %p265 = por %p263, %p264
    %p266 = scmp.ne.s32.totalorder %s252, %s253
    %p267 = scmp.eq.s32.totalorder %s25, 3
    %p268 = por %p266, %p267
    %p270 = scmp.ne.s32.totalorder %s253, %s269
    %p271 = scmp.eq.s32.totalorder %s25, 0
    %p272 = por %p270, %p271
    %s273 = ssub.s32 %s27, %s34
    %p274 = scmp.eq.s32.totalorder %s273, 0
    %s276 = sadd.s32 %s275, 1
    %s277 = scalar_select %p274, %s275, %s276
    %p280 = pneg %p274
    %p281 = scmp.eq.s32.totalorder %s19, 3
    %p282 = por %p280, %p281
    %p283 = scmp.ne.s32.totalorder %s275, %s278
    %p284 = scmp.eq.s32.totalorder %s19, 0
    %p285 = por %p283, %p284
    %p286 = scmp.ne.s32.totalorder %s275, %s278
    %p287 = scmp.eq.s32.totalorder %s24, 3
    %p288 = por %p286, %p287
    %p289 = scmp.ne.s32.totalorder %s278, %s279
    %p290 = scmp.eq.s32.totalorder %s24, 0
    %p291 = por %p289, %p290
    %p292 = scmp.ne.s32.totalorder %s278, %s279
    %p293 = scmp.eq.s32.totalorder %s25, 3
    %p294 = por %p292, %p293
    %p296 = scmp.ne.s32.totalorder %s279, %s295
    %p297 = scmp.eq.s32.totalorder %s25, 0
    %p298 = por %p296, %p297
    %s299 = ssub.s32 %s27, %s34
    %p300 = scmp.eq.s32.totalorder %s299, 0
    %s302 = sadd.s32 %s301, 1
    %s303 = scalar_select %p300, %s301, %s302
    %p306 = pneg %p300
    %p307 = scmp.eq.s32.totalorder %s19, 3
    %p308 = por %p306, %p307
    %p309 = scmp.ne.s32.totalorder %s301, %s304
    %p310 = scmp.eq.s32.totalorder %s19, 0
    %p311 = por %p309, %p310
    %p312 = scmp.ne.s32.totalorder %s301, %s304
    %p313 = scmp.eq.s32.totalorder %s24, 3
    %p314 = por %p312, %p313
    %p315 = scmp.ne.s32.totalorder %s304, %s305
    %p316 = scmp.eq.s32.totalorder %s24, 0
    %p317 = por %p315, %p316
    %p318 = scmp.ne.s32.totalorder %s304, %s305
    %p319 = scmp.eq.s32.totalorder %s25, 3
    %p320 = por %p318, %p319
    %p322 = scmp.ne.s32.totalorder %s305, %s321
    %p323 = scmp.eq.s32.totalorder %s25, 0
    %p324 = por %p322, %p323
    %s325 = ssub.s32 %s27, %s34
    %p326 = scmp.eq.s32.totalorder %s325, 0
    %s328 = sadd.s32 %s327, 1
    %s329 = scalar_select %p326, %s327, %s328
    %p332 = pneg %p326
    %p333 = scmp.eq.s32.totalorder %s19, 3
    %p334 = por %p332, %p333
    %p335 = scmp.ne.s32.totalorder %s327, %s330
    %p336 = scmp.eq.s32.totalorder %s19, 0
    %p337 = por %p335, %p336
    %p338 = scmp.ne.s32.totalorder %s327, %s330
    %p339 = scmp.eq.s32.totalorder %s24, 3
    %p340 = por %p338, %p339
    %p341 = scmp.ne.s32.totalorder %s330, %s331
    %p342 = scmp.eq.s32.totalorder %s24, 0
    %p343 = por %p341, %p342
    %p344 = scmp.ne.s32.totalorder %s330, %s331
    %p345 = scmp.eq.s32.totalorder %s25, 3
    %p346 = por %p344, %p345
    %p348 = scmp.ne.s32.totalorder %s331, %s347
    %p349 = scmp.eq.s32.totalorder %s25, 0
    %p350 = por %p348, %p349
    %s351 = ssub.s32 %s27, %s34
    %p352 = scmp.eq.s32.totalorder %s351, 0
    %s354 = sadd.s32 %s353, 1
    %s355 = scalar_select %p352, %s353, %s354
    %p358 = pneg %p352
    %p359 = scmp.eq.s32.totalorder %s19, 3
    %p360 = por %p358, %p359
    %p361 = scmp.ne.s32.totalorder %s353, %s356
    %p362 = scmp.eq.s32.totalorder %s19, 0
    %p363 = por %p361, %p362
    %p364 = scmp.ne.s32.totalorder %s353, %s356
    %p365 = scmp.eq.s32.totalorder %s24, 3
    %p366 = por %p364, %p365
    %p367 = scmp.ne.s32.totalorder %s356, %s357
    %p368 = scmp.eq.s32.totalorder %s24, 0
    %p369 = por %p367, %p368
    %p370 = scmp.ne.s32.totalorder %s356, %s357
    %p371 = scmp.eq.s32.totalorder %s25, 3
    %p372 = por %p370, %p371
    %p374 = scmp.ne.s32.totalorder %s357, %s373
    %p375 = scmp.eq.s32.totalorder %s25, 0
    %p376 = por %p374, %p375
    %s377 = ssub.s32 %s26, %s38
    %p378 = scmp.eq.s32.totalorder %s377, 0
    %s380 = sadd.s32 %s379, 1
    %s381 = scalar_select %p378, %s379, %s380
    %p384 = pneg %p378
    %p385 = scmp.eq.s32.totalorder %s19, 3
    %p386 = por %p384, %p385
    %p387 = scmp.ne.s32.totalorder %s379, %s382
    %p388 = scmp.eq.s32.totalorder %s19, 0
    %p389 = por %p387, %p388
    %p390 = scmp.ne.s32.totalorder %s379, %s382
    %p391 = scmp.eq.s32.totalorder %s24, 3
    %p392 = por %p390, %p391
    %p393 = scmp.ne.s32.totalorder %s382, %s383
    %p394 = scmp.eq.s32.totalorder %s24, 0
    %p395 = por %p393, %p394
    %p396 = scmp.ne.s32.totalorder %s382, %s383
    %p397 = scmp.eq.s32.totalorder %s25, 3
    %p398 = por %p396, %p397
    %p400 = scmp.ne.s32.totalorder %s383, %s399
    %p401 = scmp.eq.s32.totalorder %s25, 0
    %p402 = por %p400, %p401
    %p403 = scmp.le.s32.totalorder 1, %s19
    %p404 = scmp.lt.s32.totalorder %s19, 5
    %p405 = pnand %p403, %p404
    %p406 = pneg %p405
    // Predicated region
    $region9: #{ts_model_forward.4} parent=5 // pred_check
      _
    $region10: #{ts_model_forward.4} parent=5 // pred_check_branch
      %408 = sbr.rel (%p405) target = $region12
    $region11: #{ts_model_forward.4} parent=5 // pred_region
      %s409 = ssub.s32 %s19, 1
    $region12: #{ts_model_forward.4} parent=5 // pred_fallthru
      _
    %p410 = scmp.lt.s32.totalorder %s19, 4
    // Predicated region
    $region13: #{ts_model_forward.4} parent=5 // pred_check
      %p411 = pneg %p410
    $region14: #{ts_model_forward.4} parent=5 // pred_check_branch
      %413 = sbr.rel (%p411) target = $region16
    $region15: #{ts_model_forward.4} parent=5 // pred_region
      // Predicated region
      $region17: #{ts_model_forward.4} parent=15 // pred_check
        %p414 = pneg %p51
      $region18: #{ts_model_forward.4} parent=15 // pred_check_branch
        %416 = sbr.rel (%p414) target = $region20
      $region19: #{ts_model_forward.4} parent=15 // pred_region
        %p417 = scmp.lt.s32.totalorder %s26, 1
        %s418 = scalar_select %p417, %s26, 1
        %s419 = smul.addr %s418, 3
        %s420 = smul.addr %s419, 8
        %s421 = scalar_lea.vmem %s0, %s420
      $region20: #{ts_model_forward.4} parent=15 // pred_fallthru
        _
      // Predicated region
      $region21: #{ts_model_forward.4} parent=15 // pred_check
        %p422 = pneg %p77
      $region22: #{ts_model_forward.4} parent=15 // pred_check_branch
        %424 = sbr.rel (%p422) target = $region24
      $region23: #{ts_model_forward.4} parent=15 // pred_region
        %p425 = scmp.lt.s32.totalorder %s27, 1
        %s426 = scalar_select %p425, %s27, 1
        %s427 = scalar_lea.vmem %s1, %s426
      $region24: #{ts_model_forward.4} parent=15 // pred_fallthru
        _
      // Predicated region
      $region25: #{ts_model_forward.4} parent=15 // pred_check
        %p428 = pneg %p103
      $region26: #{ts_model_forward.4} parent=15 // pred_check_branch
        %430 = sbr.rel (%p428) target = $region28
      $region27: #{ts_model_forward.4} parent=15 // pred_region
        %p431 = scmp.lt.s32.totalorder %s27, 1
        %s432 = scalar_select %p431, %s27, 1
        %s433 = scalar_lea.vmem %s2, %s432
      $region28: #{ts_model_forward.4} parent=15 // pred_fallthru
        _
      // Predicated region
      $region29: #{ts_model_forward.4} parent=15 // pred_check
        %p434 = pneg %p129
      $region30: #{ts_model_forward.4} parent=15 // pred_check_branch
        %436 = sbr.rel (%p434) target = $region32
      $region31: #{ts_model_forward.4} parent=15 // pred_region
        %p437 = scmp.lt.s32.totalorder %s27, 1
        %s438 = scalar_select %p437, %s27, 1
        %s439 = smul.addr %s438, 48
        %s440 = smul.addr %s439, 4
        %s441 = scalar_lea.vmem %s3, %s440
      $region32: #{ts_model_forward.4} parent=15 // pred_fallthru
        _
      // Predicated region
      $region33: #{ts_model_forward.4} parent=15 // pred_check
        %p442 = pneg %p155
      $region34: #{ts_model_forward.4} parent=15 // pred_check_branch
        %444 = sbr.rel (%p442) target = $region36
      $region35: #{ts_model_forward.4} parent=15 // pred_region
        %p445 = scmp.lt.s32.totalorder %s27, 1
        %s446 = scalar_select %p445, %s27, 1
        %s447 = smul.addr %s446, 3
        %s448 = scalar_lea.vmem %s4, %s447
      $region36: #{ts_model_forward.4} parent=15 // pred_fallthru
        _
      // Predicated region
      $region37: #{ts_model_forward.4} parent=15 // pred_check
        %p449 = pneg %p181
      $region38: #{ts_model_forward.4} parent=15 // pred_check_branch
        %451 = sbr.rel (%p449) target = $region40
      $region39: #{ts_model_forward.4} parent=15 // pred_region
        %p452 = scmp.lt.s32.totalorder %s27, 1
        %s453 = scalar_select %p452, %s27, 1
        %s454 = smul.addr %s453, 16
        %s455 = smul.addr %s454, 4
        %s456 = scalar_lea.vmem %s5, %s455
      $region40: #{ts_model_forward.4} parent=15 // pred_fallthru
        _
      // Predicated region
      $region41: #{ts_model_forward.4} parent=15 // pred_check
        %p457 = pneg %p207
      $region42: #{ts_model_forward.4} parent=15 // pred_check_branch
        %459 = sbr.rel (%p457) target = $region44
      $region43: #{ts_model_forward.4} parent=15 // pred_region
        %p460 = scmp.lt.s32.totalorder %s27, 1
        %s461 = scalar_select %p460, %s27, 1
        %s462 = scalar_lea.vmem %s6, %s461
      $region44: #{ts_model_forward.4} parent=15 // pred_fallthru
        _
      // Predicated region
      $region45: #{ts_model_forward.4} parent=15 // pred_check
        %p463 = pneg %p233
      $region46: #{ts_model_forward.4} parent=15 // pred_check_branch
        %465 = sbr.rel (%p463) target = $region48
      $region47: #{ts_model_forward.4} parent=15 // pred_region
        %p466 = scmp.lt.s32.totalorder %s27, 1
        %s467 = scalar_select %p466, %s27, 1
        %s468 = scalar_lea.vmem %s7, %s467
      $region48: #{ts_model_forward.4} parent=15 // pred_fallthru
        _
      // Predicated region
      $region49: #{ts_model_forward.4} parent=15 // pred_check
        %p469 = pneg %p259
      $region50: #{ts_model_forward.4} parent=15 // pred_check_branch
        %471 = sbr.rel (%p469) target = $region52
      $region51: #{ts_model_forward.4} parent=15 // pred_region
        %p472 = scmp.lt.s32.totalorder %s27, 1
        %s473 = scalar_select %p472, %s27, 1
        %s474 = scalar_lea.vmem %s8, %s473
      $region52: #{ts_model_forward.4} parent=15 // pred_fallthru
        _
      // Predicated region
      $region53: #{ts_model_forward.4} parent=15 // pred_check
        %p475 = pneg %p285
      $region54: #{ts_model_forward.4} parent=15 // pred_check_branch
        %477 = sbr.rel (%p475) target = $region56
      $region55: #{ts_model_forward.4} parent=15 // pred_region
        %p478 = scmp.lt.s32.totalorder %s27, 1
        %s479 = scalar_select %p478, %s27, 1
        %s480 = smul.addr %s479, 64
        %s481 = smul.addr %s480, 4
        %s482 = scalar_lea.vmem %s9, %s481
      $region56: #{ts_model_forward.4} parent=15 // pred_fallthru
        _
      // Predicated region
      $region57: #{ts_model_forward.4} parent=15 // pred_check
        %p483 = pneg %p311
      $region58: #{ts_model_forward.4} parent=15 // pred_check_branch
        %485 = sbr.rel (%p483) target = $region60
      $region59: #{ts_model_forward.4} parent=15 // pred_region
        %p486 = scmp.lt.s32.totalorder %s27, 1
        %s487 = scalar_select %p486, %s27, 1
        %s488 = smul.addr %s487, 4
        %s489 = scalar_lea.vmem %s10, %s488
      $region60: #{ts_model_forward.4} parent=15 // pred_fallthru
        _
      // Predicated region
      $region61: #{ts_model_forward.4} parent=15 // pred_check
        %p490 = pneg %p337
      $region62: #{ts_model_forward.4} parent=15 // pred_check_branch
        %492 = sbr.rel (%p490) target = $region64
      $region63: #{ts_model_forward.4} parent=15 // pred_region
        %p493 = scmp.lt.s32.totalorder %s27, 1
        %s494 = scalar_select %p493, %s27, 1
        %s495 = smul.addr %s494, 64
        %s496 = smul.addr %s495, 4
        %s497 = scalar_lea.vmem %s11, %s496
      $region64: #{ts_model_forward.4} parent=15 // pred_fallthru
        _
      // Predicated region
      $region65: #{ts_model_forward.4} parent=15 // pred_check
        %p498 = pneg %p363
      $region66: #{ts_model_forward.4} parent=15 // pred_check_branch
        %500 = sbr.rel (%p498) target = $region68
      $region67: #{ts_model_forward.4} parent=15 // pred_region
        %p501 = scmp.lt.s32.totalorder %s27, 1
        %s502 = scalar_select %p501, %s27, 1
        %s503 = scalar_lea.vmem %s12, %s502
      $region68: #{ts_model_forward.4} parent=15 // pred_fallthru
        _
    $region16: #{ts_model_forward.4} parent=5 // pred_fallthru
      _
    %p504 = scmp.le.s32.totalorder 1, %s19
    %p505 = scmp.lt.s32.totalorder %s19, 5
    %p506 = pnand %p504, %p505
    %p507 = pneg %p506
    // Predicated region
    $region69: #{ts_model_forward.4} parent=5 // pred_check
      _
    $region70: #{ts_model_forward.4} parent=5 // pred_check_branch
      %509 = sbr.rel (%p506) target = $region72
    $region71: #{ts_model_forward.4} parent=5 // pred_region
      %s510 = ssub.s32 %s19, 1
      %p511 = scmp.lt.s32.totalorder %s28, 1
      %s512 = scalar_select %p511, %s28, 1
      %s513 = smul.addr %s512, 3
      %s514 = smul.addr %s513, 8
      %s515 = scalar_lea.vmem %s0, %s514
      %p516 = pneg %p57
      %p517 = pneg %p54
      %p518 = scmp.lt.s32.totalorder %s29, 1
      %s519 = scalar_select %p518, %s29, 1
      %s520 = scalar_lea.vmem %s1, %s519
      %p521 = pneg %p83
      %p522 = pneg %p80
      %p523 = scmp.lt.s32.totalorder %s29, 1
      %s524 = scalar_select %p523, %s29, 1
      %s525 = scalar_lea.vmem %s2, %s524
      %p526 = pneg %p109
      %p527 = pneg %p106
      %p528 = scmp.lt.s32.totalorder %s29, 1
      %s529 = scalar_select %p528, %s29, 1
      %s530 = smul.addr %s529, 48
      %s531 = smul.addr %s530, 4
      %s532 = scalar_lea.vmem %s3, %s531
      %p533 = pneg %p135
      %p534 = pneg %p132
      %p535 = scmp.lt.s32.totalorder %s29, 1
      %s536 = scalar_select %p535, %s29, 1
      %s537 = smul.addr %s536, 3
      %s538 = scalar_lea.vmem %s4, %s537
      %p539 = pneg %p161
      %p540 = pneg %p158
      %p541 = scmp.lt.s32.totalorder %s29, 1
      %s542 = scalar_select %p541, %s29, 1
      %s543 = smul.addr %s542, 16
      %s544 = smul.addr %s543, 4
      %s545 = scalar_lea.vmem %s5, %s544
      %p546 = pneg %p187
      %p547 = pneg %p184
      %p548 = scmp.lt.s32.totalorder %s29, 1
      %s549 = scalar_select %p548, %s29, 1
      %s550 = scalar_lea.vmem %s6, %s549
      %p551 = pneg %p213
      %p552 = pneg %p210
      %p553 = scmp.lt.s32.totalorder %s29, 1
      %s554 = scalar_select %p553, %s29, 1
      %s555 = scalar_lea.vmem %s7, %s554
      %p556 = pneg %p239
      %p557 = pneg %p236
      %p558 = scmp.lt.s32.totalorder %s29, 1
      %s559 = scalar_select %p558, %s29, 1
      %s560 = scalar_lea.vmem %s8, %s559
      %p561 = pneg %p265
      %p562 = pneg %p262
      %p563 = scmp.lt.s32.totalorder %s29, 1
      %s564 = scalar_select %p563, %s29, 1
      %s565 = smul.addr %s564, 64
      %s566 = smul.addr %s565, 4
      %s567 = scalar_lea.vmem %s9, %s566
      %p568 = pneg %p291
      %p569 = pneg %p288
      %p570 = scmp.lt.s32.totalorder %s29, 1
      %s571 = scalar_select %p570, %s29, 1
      %s572 = smul.addr %s571, 4
      %s573 = scalar_lea.vmem %s10, %s572
      %p574 = pneg %p317
      %p575 = pneg %p314
      %p576 = scmp.lt.s32.totalorder %s29, 1
      %s577 = scalar_select %p576, %s29, 1
      %s578 = smul.addr %s577, 64
      %s579 = smul.addr %s578, 4
      %s580 = scalar_lea.vmem %s11, %s579
      %p581 = pneg %p343
      %p582 = pneg %p340
      %p583 = scmp.lt.s32.totalorder %s29, 1
      %s584 = scalar_select %p583, %s29, 1
      %s585 = scalar_lea.vmem %s12, %s584
      %p586 = pneg %p369
      %p587 = pneg %p366
      %p588 = pneg %p395
      %p589 = pneg %p392
      %p590 = scmp.lt.s32.totalorder %s28, 1
      %s591 = scalar_select %p590, %s28, 1
      %s592 = smul.addr %s591, 3
      %s593 = smul.addr %s592, 8
      %s594 = scalar_lea.vmem %s13, %s593
      %p595 = scmp.lt.s32.totalorder %s28, 1
      %s596 = scalar_select %p595, %s28, 1
      %s597 = smul.addr %s596, 3
      %s598 = smul.addr %s597, 8
      %s599 = scalar_lea.vmem %s0, %s598
      %p600 = scmp.lt.s32.totalorder %s29, 1
      %s601 = scalar_select %p600, %s29, 1
      %s602 = scalar_lea.vmem %s1, %s601
      %p603 = scmp.lt.s32.totalorder %s29, 1
      %s604 = scalar_select %p603, %s29, 1
      %s605 = scalar_lea.vmem %s2, %s604
      %p606 = scmp.lt.s32.totalorder %s29, 1
      %s607 = scalar_select %p606, %s29, 1
      %s608 = smul.addr %s607, 48
      %s609 = smul.addr %s608, 4
      %s610 = scalar_lea.vmem %s3, %s609
      %p611 = scmp.lt.s32.totalorder %s29, 1
      %s612 = scalar_select %p611, %s29, 1
      %s613 = smul.addr %s612, 3
      %s614 = scalar_lea.vmem %s4, %s613
      %p615 = scmp.lt.s32.totalorder %s29, 1
      %s616 = scalar_select %p615, %s29, 1
      %s617 = smul.addr %s616, 16
      %s618 = smul.addr %s617, 4
      %s619 = scalar_lea.vmem %s5, %s618
      %p620 = scmp.lt.s32.totalorder %s29, 1
      %s621 = scalar_select %p620, %s29, 1
      %s622 = scalar_lea.vmem %s6, %s621
      %p623 = scmp.lt.s32.totalorder %s29, 1
      %s624 = scalar_select %p623, %s29, 1
      %s625 = scalar_lea.vmem %s7, %s624
      %p626 = scmp.lt.s32.totalorder %s29, 1
      %s627 = scalar_select %p626, %s29, 1
      %s628 = scalar_lea.vmem %s8, %s627
      %p629 = scmp.lt.s32.totalorder %s29, 1
      %s630 = scalar_select %p629, %s29, 1
      %s631 = smul.addr %s630, 64
      %s632 = smul.addr %s631, 4
      %s633 = scalar_lea.vmem %s9, %s632
      %p634 = scmp.lt.s32.totalorder %s29, 1
      %s635 = scalar_select %p634, %s29, 1
      %s636 = smul.addr %s635, 4
      %s637 = scalar_lea.vmem %s10, %s636
      %p638 = scmp.lt.s32.totalorder %s29, 1
      %s639 = scalar_select %p638, %s29, 1
      %s640 = smul.addr %s639, 64
      %s641 = smul.addr %s640, 4
      %s642 = scalar_lea.vmem %s11, %s641
      %p643 = scmp.lt.s32.totalorder %s29, 1
      %s644 = scalar_select %p643, %s29, 1
      %s645 = scalar_lea.vmem %s12, %s644
      %p646 = scmp.lt.s32.totalorder %s28, 1
      %s647 = scalar_select %p646, %s28, 1
      %s648 = smul.addr %s647, 3
      %s649 = smul.addr %s648, 8
      %s650 = scalar_lea.vmem %s13, %s649
      %p652 = scmp.eq.s32.totalorder %s29, 0
      // Predicated region
      $region73: #{ts_model_forward.4} parent=71 // pred_check
        %p653 = pneg %p652
      $region74: #{ts_model_forward.4} parent=71 // pred_check_branch
        %655 = sbr.rel (%p653) target = $region76
      $region75: #{ts_model_forward.4} parent=71 // pred_region
        %v656 = vld [vmem:[%s599] sm:$0xff]
        %v657 = vld [vmem:[%s599 + $0x8] sm:$0xff]
        %v658 = vld [vmem:[%s599 + $0x10] sm:$0x1]
        %659 = vst [vmem:[%s650] sm:$0xff] %v656
        %660 = vst [vmem:[%s650 + $0x8] sm:$0xff] %v657
        %661 = vst [vmem:[%s650 + $0x10] sm:$0x1] %v658
      $region76: #{ts_model_forward.4} parent=71 // pred_fallthru
        _
      %v662 = vld [vmem:[%s650] sm:$0xff]
      %v663 = vld [vmem:[%s650 + $0x8] sm:$0xff]
      %v664 = vld [vmem:[%s650 + $0x10] sm:$0x1]
      %v665 = vld [vmem:[%s602] sm:$0x1]
      %v666 = vld [vmem:[%s605] sm:$0x1]
      %667 = vadd.xlane.f32.xlu0 %v662
      %v668 = vpop.xlane.xlu0 %667
      %669 = vadd.xlane.f32.xlu0 %v663
      %v670 = vpop.xlane.xlu0 %669
      %vm671 = vcmask 1040384
      %v672 = vsel %vm671, %v664, 0.0
      %673 = vadd.xlane.f32.xlu0 %v672
      %v674 = vpop.xlane.xlu0 %673
      %v675 = vrcp.pop 128.0
      %v676 = vmul.f32 128.0, %v675
      %v677 = vsub.f32 1.0, %v676
      %v678 = vmul.f32 %v675, %v677
      %v679 = vadd.f32 %v675, %v678
      %vm680 = vweird.f32 %v675
      %v681 = vsel %vm680, %v675, %v679
      %v682 = vmul.f32 %v668, %v681
      %v683 = vmul.f32 %v670, %v681
      %v684 = vmul.f32 %v674, %v681
      %v685 = vsub.f32 %v662, %v682
      %v686 = vsub.f32 %v663, %v683
      %v687 = vsub.f32 %v664, %v684
      %v688 = vmul.f32 %v685, %v685
      %v689 = vmul.f32 %v686, %v686
      %v690 = vmul.f32 %v687, %v687
      %691 = vadd.xlane.f32.xlu0 %v688
      %v692 = vpop.xlane.xlu0 %691
      %693 = vadd.xlane.f32.xlu0 %v689
      %v694 = vpop.xlane.xlu0 %693
      %v695 = vsel %vm671, %v690, 0.0
      %696 = vadd.xlane.f32.xlu0 %v695
      %v697 = vpop.xlane.xlu0 %696
      %v698 = vmul.f32 %v692, %v681
      %v699 = vmul.f32 %v694, %v681
      %v700 = vmul.f32 %v697, %v681
      %v701 = vadd.f32 %v698, 1e-05
      %v702 = vadd.f32 %v699, 1e-05
      %v703 = vadd.f32 %v700, 1e-05
      %v704 = vrsqrt.pop %v701
      %v705 = vmul.f32 %v704, %v701
      %v706 = vmul.f32 %v705, %v704
      %v707 = vmul.f32 0.5, %v706
      %v708 = vsub.f32 1.5, %v707
      %v709 = vmul.f32 %v704, %v708
      %vm710 = vweird.f32 %v701
      %vm711 = vweird.f32 %v704
      %vm712 = vmor %vm710, %vm711
      %v713 = vsel %vm712, %v704, %v709
      %v714 = vrsqrt.pop %v702
      %v715 = vmul.f32 %v714, %v702
      %v716 = vmul.f32 %v715, %v714
      %v717 = vmul.f32 0.5, %v716
      %v718 = vsub.f32 1.5, %v717
      %v719 = vmul.f32 %v714, %v718
      %vm720 = vweird.f32 %v702
      %vm721 = vweird.f32 %v714
      %vm722 = vmor %vm720, %vm721
      %v723 = vsel %vm722, %v714, %v719
      %v724 = vrsqrt.pop %v703
      %v725 = vmul.f32 %v724, %v703
      %v726 = vmul.f32 %v725, %v724
      %v727 = vmul.f32 0.5, %v726
      %v728 = vsub.f32 1.5, %v727
      %v729 = vmul.f32 %v724, %v728
      %vm730 = vweird.f32 %v703
      %vm731 = vweird.f32 %v724
      %vm732 = vmor %vm730, %vm731
      %v733 = vsel %vm732, %v724, %v729
      %v734 = vmul.f32 %v685, %v713
      %v735 = vmul.f32 %v686, %v723
      %v736 = vmul.f32 %v687, %v733
      %v738 = vperm.slane %v665, 0
      %v740 = vmul.f32 %v734, %v738
      %v741 = vmul.f32 %v735, %v738
      %v742 = vmul.f32 %v736, %v738
      %v744 = vperm.slane %v666, 0
      %v746 = vadd.f32 %v740, %v744
      %v747 = vadd.f32 %v741, %v744
      %v748 = vadd.f32 %v742, %v744
      %v749 = vpack.c.bf16 %v747, %v746
      %v750 = vpack.c.bf16 %v748, %v748
      %v751 = vld [vmem:[%s610] sm:$0xff]
      %v752 = vld [vmem:[%s610 + $0x8] sm:$0xf]
      %v753 = vld [vmem:[%s610 + $0xc] sm:$0xff]
      %v754 = vld [vmem:[%s610 + $0x14] sm:$0xf]
      %v755 = vld [vmem:[%s610 + $0x18] sm:$0xff]
      %v756 = vld [vmem:[%s610 + $0x20] sm:$0xf]
      %v757 = vld [vmem:[%s610 + $0x24] sm:$0xff]
      %v758 = vld [vmem:[%s610 + $0x2c] sm:$0xf]
      %v759 = vld [vmem:[%s610 + $0x30] sm:$0xff]
      %v760 = vld [vmem:[%s610 + $0x38] sm:$0xf]
      %v761 = vld [vmem:[%s610 + $0x3c] sm:$0xff]
      %v762 = vld [vmem:[%s610 + $0x44] sm:$0xf]
      %v763 = vld [vmem:[%s610 + $0x48] sm:$0xff]
      %v764 = vld [vmem:[%s610 + $0x50] sm:$0xf]
      %v765 = vld [vmem:[%s610 + $0x54] sm:$0xff]
      %v766 = vld [vmem:[%s610 + $0x5c] sm:$0xf]
      %v767 = vld [vmem:[%s610 + $0x60] sm:$0xff]
      %v768 = vld [vmem:[%s610 + $0x68] sm:$0xf]
      %v769 = vld [vmem:[%s610 + $0x6c] sm:$0xff]
      %v770 = vld [vmem:[%s610 + $0x74] sm:$0xf]
      %v771 = vld [vmem:[%s610 + $0x78] sm:$0xff]
      %v772 = vld [vmem:[%s610 + $0x80] sm:$0xf]
      %v773 = vld [vmem:[%s610 + $0x84] sm:$0xff]
      %v774 = vld [vmem:[%s610 + $0x8c] sm:$0xf]
      %v775 = vld [vmem:[%s610 + $0x90] sm:$0xff]
      %v776 = vld [vmem:[%s610 + $0x98] sm:$0xf]
      %v777 = vld [vmem:[%s610 + $0x9c] sm:$0xff]
      %v778 = vld [vmem:[%s610 + $0xa4] sm:$0xf]
      %v779 = vld [vmem:[%s610 + $0xa8] sm:$0xff]
      %v780 = vld [vmem:[%s610 + $0xb0] sm:$0xf]
      %v781 = vld [vmem:[%s610 + $0xb4] sm:$0xff]
      %v782 = vld [vmem:[%s610 + $0xbc] sm:$0xf]
      %v783 = vld [vmem:[%s614] sm:$0x7]
      %v785 = vperm.slane %v783, 0
      %v786 = vperm.slane %v783, 1
      %v787 = vperm.slane %v783, 2
      %v823 = vunpack.c.l.b16 %v751
      %v824 = vunpack.c.h.b16 %v751
      %v825 = vunpack.c.l.b16 %v752
      %v826 = vunpack.c.l.b16 %v753
      %v827 = vunpack.c.h.b16 %v753
      %v828 = vunpack.c.l.b16 %v754
      %v829 = vunpack.c.l.b16 %v755
      %v830 = vunpack.c.h.b16 %v755
      %v831 = vunpack.c.l.b16 %v756
      %v832 = vunpack.c.l.b16 %v757
      %v833 = vunpack.c.h.b16 %v757
      %v834 = vunpack.c.l.b16 %v758
      %v835 = vunpack.c.l.b16 %v759
      %v836 = vunpack.c.h.b16 %v759
      %v837 = vunpack.c.l.b16 %v760
      %v838 = vunpack.c.l.b16 %v761
      %v839 = vunpack.c.h.b16 %v761
      %v840 = vunpack.c.l.b16 %v762
      %v841 = vunpack.c.l.b16 %v763
      %v842 = vunpack.c.h.b16 %v763
      %v843 = vunpack.c.l.b16 %v764
      %v844 = vunpack.c.l.b16 %v765
      %v845 = vunpack.c.h.b16 %v765
      %v846 = vunpack.c.l.b16 %v766
      %v847 = vunpack.c.l.b16 %v767
      %v848 = vunpack.c.h.b16 %v767
      %v849 = vunpack.c.l.b16 %v768
      %v850 = vunpack.c.l.b16 %v769
      %v851 = vunpack.c.h.b16 %v769
      %v852 = vunpack.c.l.b16 %v770
      %v853 = vunpack.c.l.b16 %v771
      %v854 = vunpack.c.h.b16 %v771
      %v855 = vunpack.c.l.b16 %v772
      %v856 = vunpack.c.l.b16 %v773
      %v857 = vunpack.c.h.b16 %v773
      %v858 = vunpack.c.l.b16 %v774
      %v859 = vunpack.c.l.b16 %v775
      %v860 = vunpack.c.h.b16 %v775
      %v861 = vunpack.c.l.b16 %v776
      %v862 = vunpack.c.l.b16 %v777
      %v863 = vunpack.c.h.b16 %v777
      %v864 = vunpack.c.l.b16 %v778
      %v865 = vunpack.c.l.b16 %v779
      %v866 = vunpack.c.h.b16 %v779
      %v867 = vunpack.c.l.b16 %v780
      %v868 = vunpack.c.l.b16 %v781
      %v869 = vunpack.c.h.b16 %v781
      %v870 = vunpack.c.l.b16 %v782
      %v871 = vpack.c.b16 %v826, %v823
      %v872 = vpack.c.b16 %v827, %v824
      %v873 = vpack.c.b16 %v828, %v825
      %v874 = vpack.c.b16 %v832, %v829
      %v875 = vpack.c.b16 %v833, %v830
      %v876 = vpack.c.b16 %v834, %v831
      %v877 = vpack.c.b16 %v838, %v835
      %v878 = vpack.c.b16 %v839, %v836
      %v879 = vpack.c.b16 %v840, %v837
      %v880 = vpack.c.b16 %v844, %v841
      %v881 = vpack.c.b16 %v845, %v842
      %v882 = vpack.c.b16 %v846, %v843
      %v883 = vpack.c.b16 %v850, %v847
      %v884 = vpack.c.b16 %v851, %v848
      %v885 = vpack.c.b16 %v852, %v849
      %v886 = vpack.c.b16 %v856, %v853
      %v887 = vpack.c.b16 %v857, %v854
      %v888 = vpack.c.b16 %v858, %v855
      %v889 = vpack.c.b16 %v862, %v859
      %v890 = vpack.c.b16 %v863, %v860
      %v891 = vpack.c.b16 %v864, %v861
      %v892 = vpack.c.b16 %v868, %v865
      %v893 = vpack.c.b16 %v869, %v866
      %v894 = vpack.c.b16 %v870, %v867
      %919 = vmatpush.bf16.msra.mxu0 %v892
      %920 = vmatpush.bf16.msra.mxu0 %v889
      %921 = vmatpush.bf16.msra.mxu0 %v886
      %922 = vmatpush.bf16.msra.mxu0 %v883
      %923 = vmatpush.bf16.msra.mxu0 %v880
      %924 = vmatpush.bf16.msra.mxu0 %v877
      %925 = vmatpush.bf16.msra.mxu0 %v874
      %926 = vmatpush.bf16.msra.mxu0 %v871
      %927 = vmatmul.bf16.gmra.mxu0 %v749
      %v928 = vpop.f32.mrf.mxu0
      %v929 = vadd.f32 %v785, %v928
      %v930 = vpop.f32.mrf.mxu0
      %v931 = vadd.f32 %v785, %v930
      %932 = vmatmul.bf16.gmra.mxu0 %v750
      %v933 = vpop.f32.mrf.mxu0
      %v934 = vadd.f32 %v785, %v933
      %v935 = vpop.f32.mrf.mxu0
      %936 = vdwg.mxu0
      %937 = vmatpush.bf16.msra.mxu0 %v893
      %938 = vmatpush.bf16.msra.mxu0 %v890
      %939 = vmatpush.bf16.msra.mxu0 %v887
      %940 = vmatpush.bf16.msra.mxu0 %v884
      %941 = vmatpush.bf16.msra.mxu0 %v881
      %942 = vmatpush.bf16.msra.mxu0 %v878
      %943 = vmatpush.bf16.msra.mxu0 %v875
      %944 = vmatpush.bf16.msra.mxu0 %v872
      %945 = vmatmul.bf16.gmra.mxu0 %v749
      %v946 = vpop.f32.mrf.mxu0
      %v947 = vadd.f32 %v786, %v946
      %v948 = vpop.f32.mrf.mxu0
      %v949 = vadd.f32 %v786, %v948
      %950 = vmatmul.bf16.gmra.mxu0 %v750
      %v951 = vpop.f32.mrf.mxu0
      %v952 = vadd.f32 %v786, %v951
      %v953 = vpop.f32.mrf.mxu0
      %954 = vdwg.mxu0
      %955 = vmatpush.bf16.msra.mxu0 %v894
      %956 = vmatpush.bf16.msra.mxu0 %v891
      %957 = vmatpush.bf16.msra.mxu0 %v888
      %958 = vmatpush.bf16.msra.mxu0 %v885
      %959 = vmatpush.bf16.msra.mxu0 %v882
      %960 = vmatpush.bf16.msra.mxu0 %v879
      %961 = vmatpush.bf16.msra.mxu0 %v876
      %962 = vmatpush.bf16.msra.mxu0 %v873
      %963 = vmatmul.bf16.gmra.mxu0 %v749
      %v964 = vpop.f32.mrf.mxu0
      %v965 = vadd.f32 %v787, %v964
      %v966 = vpop.f32.mrf.mxu0
      %v967 = vadd.f32 %v787, %v966
      %968 = vmatmul.bf16.gmra.mxu0 %v750
      %v969 = vpop.f32.mrf.mxu0
      %v970 = vadd.f32 %v787, %v969
      %v971 = vpop.f32.mrf.mxu0
      %972 = vdwg.mxu0
      %v973 = vmul.f32 %v929, 0.17677669
      %v974 = vmul.f32 %v931, 0.17677669
      %v975 = vmul.f32 %v934, 0.17677669
      %v976 = vpack.c.bf16 %v974, %v973
      %v977 = vpack.c.bf16 %v975, %v975
      %v978 = vpack.c.bf16 %v949, %v947
      %v979 = vpack.c.bf16 %v952, %v952
      %v980 = vpack.c.bf16 %v967, %v965
      %v981 = vpack.c.bf16 %v970, %v970
      %vm982 = vcmask 261120
      %v984 = vsel %vm982, %v976, 0
      %v987 = vsel %vm982, %v977, 0
      %v990 = vsel %vm982, %v978, 0
      %v993 = vsel %vm982, %v979, 0
      %995 = vmatpush.bf16.xpose.msra.mxu0 0
      %996 = vmatpush.bf16.xpose.msra.mxu0 0
      %997 = vmatpush.bf16.xpose.msra.mxu0 0
      %998 = vmatpush.bf16.xpose.msra.mxu0 0
      %999 = vmatpush.bf16.xpose.msra.mxu0 0
      %1000 = vmatpush.bf16.xpose.msra.mxu0 0
      %1001 = vmatpush.bf16.xpose.msra.mxu0 %v993
      %1002 = vmatpush.bf16.xpose.msra.mxu0 %v990
      %1003 = vmatmul.bf16.gmra.mxu0 %v984
      %v1004 = vpop.f32.mrf.mxu0
      %v1005 = vadd.f32 0.0, %v1004
      %v1006 = vpop.f32.mrf.mxu0
      %v1007 = vadd.f32 0.0, %v1006
      %1008 = vmatmul.bf16.gmra.mxu0 %v987
      %v1009 = vpop.f32.mrf.mxu0
      %v1010 = vadd.f32 0.0, %v1009
      %v1011 = vpop.f32.mrf.mxu0
      %1012 = vdwg.mxu0
      %vm1013 = vcmask 138240
      %v1014 = vsel %vm1013, %v1005, -inf
      %1015 = vmax.xlane.f32.xlu0 %v1014
      %v1016 = vpop.xlane.xlu0 %1015
      %v1017 = vsel %vm1013, %v1007, -inf
      %1018 = vmax.xlane.f32.xlu0 %v1017
      %v1019 = vpop.xlane.xlu0 %1018
      %vm1020 = vcmask 131072
      %v1021 = vsel %vm1020, %v1010, -inf
      %1022 = vmax.xlane.f32.xlu0 %v1021
      %v1023 = vpop.xlane.xlu0 %1022
      %v1024 = vsub.f32 %v1005, %v1016
      %v1025 = vsub.f32 %v1007, %v1019
      %v1026 = vsub.f32 %v1010, %v1023
      %v1027 = vmul.f32 %v1024, 1.442695
      %v1028 = vpow.pop %v1027
      %v1029 = vmul.f32 %v1025, 1.442695
      %v1030 = vpow.pop %v1029
      %v1031 = vmul.f32 %v1026, 1.442695
      %v1032 = vpow.pop %v1031
      %v1033 = vsel %vm1013, %v1028, 0.0
      %1034 = vadd.xlane.f32.xlu0 %v1033
      %v1035 = vpop.xlane.xlu0 %1034
      %v1036 = vsel %vm1013, %v1030, 0.0
      %1037 = vadd.xlane.f32.xlu0 %v1036
      %v1038 = vpop.xlane.xlu0 %1037
      %v1039 = vsel %vm1020, %v1032, 0.0
      %1040 = vadd.xlane.f32.xlu0 %v1039
      %v1041 = vpop.xlane.xlu0 %1040
      %v1042 = vrcp.pop %v1035
      %v1043 = vrcp.pop %v1038
      %v1044 = vrcp.pop %v1041
      %v1045 = vmul.f32 %v1028, %v1042
      %v1046 = vmul.f32 %v1030, %v1043
      %v1047 = vmul.f32 %v1032, %v1044
      %v1048 = vpack.c.bf16 %v1046, %v1045
      %v1049 = vpack.c.bf16 %v1047, %v1047
      %v1051 = vsel %vm1013, %v1048, 0
      %v1054 = vsel %vm1013, %v1049, 0
      %v1056 = vsel 0, 4294967295, 65535
      %v1057 = vsel %vm671, %v1056, 0
      %v1059 = vand.u32 %v981, %v1057
      %1061 = vmatpush.bf16.msra.mxu0 0
      %1062 = vmatpush.bf16.msra.mxu0 0
      %1063 = vmatpush.bf16.msra.mxu0 0
      %1064 = vmatpush.bf16.msra.mxu0 0
      %1065 = vmatpush.bf16.msra.mxu0 0
      %1066 = vmatpush.bf16.msra.mxu0 0
      %1067 = vmatpush.bf16.msra.mxu0 %v1059
      %1068 = vmatpush.bf16.msra.mxu0 %v980
      %1069 = vmatmul.bf16.gmra.mxu0 %v1051
      %v1070 = vpop.f32.mrf.mxu0
      %v1071 = vadd.f32 0.0, %v1070
      %v1072 = vpop.f32.mrf.mxu0
      %v1073 = vadd.f32 0.0, %v1072
      %1074 = vmatmul.bf16.gmra.mxu0 %v1054
      %v1075 = vpop.f32.mrf.mxu0
      %v1076 = vadd.f32 0.0, %v1075
      %v1077 = vpop.f32.mrf.mxu0
      %1078 = vdwg.mxu0
      %1081 = vrot.lane.b32.xlu0 %v976, 96
      %v1082 = vpop.permute.xlu0 %1081
      %1083 = vrot.lane.b32.xlu0 %v977, 96
      %v1084 = vpop.permute.xlu0 %1083
      %1087 = vrot.lane.b32.xlu0 %v978, 96
      %v1088 = vpop.permute.xlu0 %1087
      %1089 = vrot.lane.b32.xlu0 %v979, 96
      %v1090 = vpop.permute.xlu0 %1089
      %v1092 = vsel %vm982, %v1082, 0
      %v1095 = vsel %vm982, %v1084, 0
      %v1098 = vsel %vm982, %v1088, 0
      %v1101 = vsel %vm982, %v1090, 0
      %1103 = vmatpush.bf16.xpose.msra.mxu0 0
      %1104 = vmatpush.bf16.xpose.msra.mxu0 0
      %1105 = vmatpush.bf16.xpose.msra.mxu0 0
      %1106 = vmatpush.bf16.xpose.msra.mxu0 0
      %1107 = vmatpush.bf16.xpose.msra.mxu0 0
      %1108 = vmatpush.bf16.xpose.msra.mxu0 0
      %1109 = vmatpush.bf16.xpose.msra.mxu0 %v1101
      %1110 = vmatpush.bf16.xpose.msra.mxu0 %v1098
      %1111 = vmatmul.bf16.gmra.mxu0 %v1092
      %v1112 = vpop.f32.mrf.mxu0
      %v1113 = vadd.f32 0.0, %v1112
      %v1114 = vpop.f32.mrf.mxu0
      %v1115 = vadd.f32 0.0, %v1114
      %1116 = vmatmul.bf16.gmra.mxu0 %v1095
      %v1117 = vpop.f32.mrf.mxu0
      %v1118 = vadd.f32 0.0, %v1117
      %v1119 = vpop.f32.mrf.mxu0
      %1120 = vdwg.mxu0
      %v1121 = vsel %vm1013, %v1113, -inf
      %1122 = vmax.xlane.f32.xlu0 %v1121
      %v1123 = vpop.xlane.xlu0 %1122
      %v1124 = vsel %vm1013, %v1115, -inf
      %1125 = vmax.xlane.f32.xlu0 %v1124
      %v1126 = vpop.xlane.xlu0 %1125
      %v1127 = vsel %vm1020, %v1118, -inf
      %1128 = vmax.xlane.f32.xlu0 %v1127
      %v1129 = vpop.xlane.xlu0 %1128
      %v1130 = vsub.f32 %v1113, %v1123
      %v1131 = vsub.f32 %v1115, %v1126
      %v1132 = vsub.f32 %v1118, %v1129
      %v1133 = vmul.f32 %v1130, 1.442695
      %v1134 = vpow.pop %v1133
      %v1135 = vmul.f32 %v1131, 1.442695
      %v1136 = vpow.pop %v1135
      %v1137 = vmul.f32 %v1132, 1.442695
      %v1138 = vpow.pop %v1137
      %v1139 = vsel %vm1013, %v1134, 0.0
      %1140 = vadd.xlane.f32.xlu0 %v1139
      %v1141 = vpop.xlane.xlu0 %1140
      %v1142 = vsel %vm1013, %v1136, 0.0
      %1143 = vadd.xlane.f32.xlu0 %v1142
      %v1144 = vpop.xlane.xlu0 %1143
      %v1145 = vsel %vm1020, %v1138, 0.0
      %1146 = vadd.xlane.f32.xlu0 %v1145
      %v1147 = vpop.xlane.xlu0 %1146
      %v1148 = vrcp.pop %v1141
      %v1149 = vrcp.pop %v1144
      %v1150 = vrcp.pop %v1147
      %v1151 = vmul.f32 %v1134, %v1148
      %v1152 = vmul.f32 %v1136, %v1149
      %v1153 = vmul.f32 %v1138, %v1150
      %v1154 = vpack.c.bf16 %v1152, %v1151
      %v1155 = vpack.c.bf16 %v1153, %v1153
      %1158 = vrot.lane.b32.xlu0 %v980, 96
      %v1159 = vpop.permute.xlu0 %1158
      %1160 = vrot.lane.b32.xlu0 %v981, 96
      %v1161 = vpop.permute.xlu0 %1160
      %v1164 = vsel %vm1013, %v1154, 0
      %v1167 = vsel %vm1013, %v1155, 0
      %v1170 = vand.u32 %v1161, %v1057
      %1172 = vmatpush.bf16.msra.mxu0 0
      %1173 = vmatpush.bf16.msra.mxu0 0
      %1174 = vmatpush.bf16.msra.mxu0 0
      %1175 = vmatpush.bf16.msra.mxu0 0
      %1176 = vmatpush.bf16.msra.mxu0 0
      %1177 = vmatpush.bf16.msra.mxu0 0
      %1178 = vmatpush.bf16.msra.mxu0 %v1170
      %1179 = vmatpush.bf16.msra.mxu0 %v1159
      %1180 = vmatmul.bf16.gmra.mxu0 %v1164
      %v1181 = vpop.f32.mrf.mxu0
      %v1182 = vadd.f32 0.0, %v1181
      %v1183 = vpop.f32.mrf.mxu0
      %v1184 = vadd.f32 0.0, %v1183
      %1185 = vmatmul.bf16.gmra.mxu0 %v1167
      %v1186 = vpop.f32.mrf.mxu0
      %v1187 = vadd.f32 0.0, %v1186
      %v1188 = vpop.f32.mrf.mxu0
      %1189 = vdwg.mxu0
      %1190 = vrot.lane.b32.xlu0 %v976, 64
      %v1191 = vpop.permute.xlu0 %1190
      %1192 = vrot.lane.b32.xlu0 %v977, 64
      %v1193 = vpop.permute.xlu0 %1192
      %1194 = vrot.lane.b32.xlu0 %v978, 64
      %v1195 = vpop.permute.xlu0 %1194
      %1196 = vrot.lane.b32.xlu0 %v979, 64
      %v1197 = vpop.permute.xlu0 %1196
      %v1199 = vsel %vm982, %v1191, 0
      %v1202 = vsel %vm982, %v1193, 0
      %v1205 = vsel %vm982, %v1195, 0
      %v1208 = vsel %vm982, %v1197, 0
      %1210 = vmatpush.bf16.xpose.msra.mxu0 0
      %1211 = vmatpush.bf16.xpose.msra.mxu0 0
      %1212 = vmatpush.bf16.xpose.msra.mxu0 0
      %1213 = vmatpush.bf16.xpose.msra.mxu0 0
      %1214 = vmatpush.bf16.xpose.msra.mxu0 0
      %1215 = vmatpush.bf16.xpose.msra.mxu0 0
      %1216 = vmatpush.bf16.xpose.msra.mxu0 %v1208
      %1217 = vmatpush.bf16.xpose.msra.mxu0 %v1205
      %1218 = vmatmul.bf16.gmra.mxu0 %v1199
      %v1219 = vpop.f32.mrf.mxu0
      %v1220 = vadd.f32 0.0, %v1219
      %v1221 = vpop.f32.mrf.mxu0
      %v1222 = vadd.f32 0.0, %v1221
      %1223 = vmatmul.bf16.gmra.mxu0 %v1202
      %v1224 = vpop.f32.mrf.mxu0
      %v1225 = vadd.f32 0.0, %v1224
      %v1226 = vpop.f32.mrf.mxu0
      %1227 = vdwg.mxu0
      %v1228 = vsel %vm1013, %v1220, -inf
      %1229 = vmax.xlane.f32.xlu0 %v1228
      %v1230 = vpop.xlane.xlu0 %1229
      %v1231 = vsel %vm1013, %v1222, -inf
      %1232 = vmax.xlane.f32.xlu0 %v1231
      %v1233 = vpop.xlane.xlu0 %1232
      %v1234 = vsel %vm1020, %v1225, -inf
      %1235 = vmax.xlane.f32.xlu0 %v1234
      %v1236 = vpop.xlane.xlu0 %1235
      %v1237 = vsub.f32 %v1220, %v1230
      %v1238 = vsub.f32 %v1222, %v1233
      %v1239 = vsub.f32 %v1225, %v1236
      %v1240 = vmul.f32 %v1237, 1.442695
      %v1241 = vpow.pop %v1240
      %v1242 = vmul.f32 %v1238, 1.442695
      %v1243 = vpow.pop %v1242
      %v1244 = vmul.f32 %v1239, 1.442695
      %v1245 = vpow.pop %v1244
      %v1246 = vsel %vm1013, %v1241, 0.0
      %1247 = vadd.xlane.f32.xlu0 %v1246
      %v1248 = vpop.xlane.xlu0 %1247
      %v1249 = vsel %vm1013, %v1243, 0.0
      %1250 = vadd.xlane.f32.xlu0 %v1249
      %v1251 = vpop.xlane.xlu0 %1250
      %v1252 = vsel %vm1020, %v1245, 0.0
      %1253 = vadd.xlane.f32.xlu0 %v1252
      %v1254 = vpop.xlane.xlu0 %1253
      %v1255 = vrcp.pop %v1248
      %v1256 = vrcp.pop %v1251
      %v1257 = vrcp.pop %v1254
      %v1258 = vmul.f32 %v1241, %v1255
      %v1259 = vmul.f32 %v1243, %v1256
      %v1260 = vmul.f32 %v1245, %v1257
      %v1261 = vpack.c.bf16 %v1259, %v1258
      %v1262 = vpack.c.bf16 %v1260, %v1260
      %1263 = vrot.lane.b32.xlu0 %v980, 64
      %v1264 = vpop.permute.xlu0 %1263
      %1265 = vrot.lane.b32.xlu0 %v981, 64
      %v1266 = vpop.permute.xlu0 %1265
      %v1269 = vsel %vm1013, %v1261, 0
      %v1272 = vsel %vm1013, %v1262, 0
      %v1275 = vand.u32 %v1266, %v1057
      %1277 = vmatpush.bf16.msra.mxu0 0
      %1278 = vmatpush.bf16.msra.mxu0 0
      %1279 = vmatpush.bf16.msra.mxu0 0
      %1280 = vmatpush.bf16.msra.mxu0 0
      %1281 = vmatpush.bf16.msra.mxu0 0
      %1282 = vmatpush.bf16.msra.mxu0 0
      %1283 = vmatpush.bf16.msra.mxu0 %v1275
      %1284 = vmatpush.bf16.msra.mxu0 %v1264
      %1285 = vmatmul.bf16.gmra.mxu0 %v1269
      %v1286 = vpop.f32.mrf.mxu0
      %v1287 = vadd.f32 0.0, %v1286
      %v1288 = vpop.f32.mrf.mxu0
      %v1289 = vadd.f32 0.0, %v1288
      %1290 = vmatmul.bf16.gmra.mxu0 %v1272
      %v1291 = vpop.f32.mrf.mxu0
      %v1292 = vadd.f32 0.0, %v1291
      %v1293 = vpop.f32.mrf.mxu0
      %1294 = vdwg.mxu0
      %1295 = vrot.lane.b32.xlu0 %v976, 32
      %v1296 = vpop.permute.xlu0 %1295
      %1297 = vrot.lane.b32.xlu0 %v977, 32
      %v1298 = vpop.permute.xlu0 %1297
      %1299 = vrot.lane.b32.xlu0 %v978, 32
      %v1300 = vpop.permute.xlu0 %1299
      %1301 = vrot.lane.b32.xlu0 %v979, 32
      %v1302 = vpop.permute.xlu0 %1301
      %v1304 = vsel %vm982, %v1296, 0
      %v1307 = vsel %vm982, %v1298, 0
      %v1310 = vsel %vm982, %v1300, 0
      %v1313 = vsel %vm982, %v1302, 0
      %1315 = vmatpush.bf16.xpose.msra.mxu0 0
      %1316 = vmatpush.bf16.xpose.msra.mxu0 0
      %1317 = vmatpush.bf16.xpose.msra.mxu0 0
      %1318 = vmatpush.bf16.xpose.msra.mxu0 0
      %1319 = vmatpush.bf16.xpose.msra.mxu0 0
      %1320 = vmatpush.bf16.xpose.msra.mxu0 0
      %1321 = vmatpush.bf16.xpose.msra.mxu0 %v1313
      %1322 = vmatpush.bf16.xpose.msra.mxu0 %v1310
      %1323 = vmatmul.bf16.gmra.mxu0 %v1304
      %v1324 = vpop.f32.mrf.mxu0
      %v1325 = vadd.f32 0.0, %v1324
      %v1326 = vpop.f32.mrf.mxu0
      %v1327 = vadd.f32 0.0, %v1326
      %1328 = vmatmul.bf16.gmra.mxu0 %v1307
      %v1329 = vpop.f32.mrf.mxu0
      %v1330 = vadd.f32 0.0, %v1329
      %v1331 = vpop.f32.mrf.mxu0
      %1332 = vdwg.mxu0
      %v1333 = vsel %vm1013, %v1325, -inf
      %1334 = vmax.xlane.f32.xlu0 %v1333
      %v1335 = vpop.xlane.xlu0 %1334
      %v1336 = vsel %vm1013, %v1327, -inf
      %1337 = vmax.xlane.f32.xlu0 %v1336
      %v1338 = vpop.xlane.xlu0 %1337
      %v1339 = vsel %vm1020, %v1330, -inf
      %1340 = vmax.xlane.f32.xlu0 %v1339
      %v1341 = vpop.xlane.xlu0 %1340
      %v1342 = vsub.f32 %v1325, %v1335
      %v1343 = vsub.f32 %v1327, %v1338
      %v1344 = vsub.f32 %v1330, %v1341
      %v1345 = vmul.f32 %v1342, 1.442695
      %v1346 = vpow.pop %v1345
      %v1347 = vmul.f32 %v1343, 1.442695
      %v1348 = vpow.pop %v1347
      %v1349 = vmul.f32 %v1344, 1.442695
      %v1350 = vpow.pop %v1349
      %v1351 = vsel %vm1013, %v1346, 0.0
      %1352 = vadd.xlane.f32.xlu0 %v1351
      %v1353 = vpop.xlane.xlu0 %1352
      %v1354 = vsel %vm1013, %v1348, 0.0
      %1355 = vadd.xlane.f32.xlu0 %v1354
      %v1356 = vpop.xlane.xlu0 %1355
      %v1357 = vsel %vm1020, %v1350, 0.0
      %1358 = vadd.xlane.f32.xlu0 %v1357
      %v1359 = vpop.xlane.xlu0 %1358
      %v1360 = vrcp.pop %v1353
      %v1361 = vrcp.pop %v1356
      %v1362 = vrcp.pop %v1359
      %v1363 = vmul.f32 %v1346, %v1360
      %v1364 = vmul.f32 %v1348, %v1361
      %v1365 = vmul.f32 %v1350, %v1362
      %v1366 = vpack.c.bf16 %v1364, %v1363
      %v1367 = vpack.c.bf16 %v1365, %v1365
      %1368 = vrot.lane.b32.xlu0 %v980, 32
      %v1369 = vpop.permute.xlu0 %1368
      %1370 = vrot.lane.b32.xlu0 %v981, 32
      %v1371 = vpop.permute.xlu0 %1370
      %v1374 = vsel %vm1013, %v1366, 0
      %v1377 = vsel %vm1013, %v1367, 0
      %v1380 = vand.u32 %v1371, %v1057
      %1382 = vmatpush.bf16.msra.mxu0 0
      %1383 = vmatpush.bf16.msra.mxu0 0
      %1384 = vmatpush.bf16.msra.mxu0 0
      %1385 = vmatpush.bf16.msra.mxu0 0
      %1386 = vmatpush.bf16.msra.mxu0 0
      %1387 = vmatpush.bf16.msra.mxu0 0
      %1388 = vmatpush.bf16.msra.mxu0 %v1380
      %1389 = vmatpush.bf16.msra.mxu0 %v1369
      %1390 = vmatmul.bf16.gmra.mxu0 %v1374
      %v1391 = vpop.f32.mrf.mxu0
      %v1392 = vadd.f32 0.0, %v1391
      %v1393 = vpop.f32.mrf.mxu0
      %v1394 = vadd.f32 0.0, %v1393
      %1395 = vmatmul.bf16.gmra.mxu0 %v1377
      %v1396 = vpop.f32.mrf.mxu0
      %v1397 = vadd.f32 0.0, %v1396
      %v1398 = vpop.f32.mrf.mxu0
      %1399 = vdwg.mxu0
      %1403 = vrot.lane.b32.xlu0 %v1182, 32
      %v1404 = vpop.permute.xlu0 %1403
      %1405 = vrot.lane.b32.xlu0 %v1184, 32
      %v1406 = vpop.permute.xlu0 %1405
      %1407 = vrot.lane.b32.xlu0 %v1187, 32
      %v1408 = vpop.permute.xlu0 %1407
      %1415 = vrot.lane.b32.xlu0 %v1287, 64
      %v1416 = vpop.permute.xlu0 %1415
      %1417 = vrot.lane.b32.xlu0 %v1289, 64
      %v1418 = vpop.permute.xlu0 %1417
      %1419 = vrot.lane.b32.xlu0 %v1292, 64
      %v1420 = vpop.permute.xlu0 %1419
      %1427 = vrot.lane.b32.xlu0 %v1392, 96
      %v1428 = vpop.permute.xlu0 %1427
      %1429 = vrot.lane.b32.xlu0 %v1394, 96
      %v1430 = vpop.permute.xlu0 %1429
      %1431 = vrot.lane.b32.xlu0 %v1397, 96
      %v1432 = vpop.permute.xlu0 %1431
      %v1436 = vsel %vm982, %v1071, %v1404
      %v1437 = vsel %vm982, %v1073, %v1406
      %v1438 = vsel %vm982, %v1076, %v1408
      %vm1439 = vcmask 523264
      %v1440 = vsel %vm1439, %v1436, %v1416
      %v1441 = vsel %vm1439, %v1437, %v1418
      %v1442 = vsel %vm1439, %v1438, %v1420
      %vm1443 = vcmask 785408
      %v1444 = vsel %vm1443, %v1440, %v1428
      %v1445 = vsel %vm1443, %v1441, %v1430
      %v1446 = vsel %vm1443, %v1442, %v1432
      %v1447 = vpack.c.bf16 %v1445, %v1444
      %v1448 = vpack.c.bf16 %v1446, %v1446
      %v1449 = vld [vmem:[%s619] sm:$0xf]
      %v1450 = vld [vmem:[%s619 + $0x4] sm:$0xf]
      %v1451 = vld [vmem:[%s619 + $0x8] sm:$0xf]
      %v1452 = vld [vmem:[%s619 + $0xc] sm:$0xf]
      %v1453 = vld [vmem:[%s619 + $0x10] sm:$0xf]
      %v1454 = vld [vmem:[%s619 + $0x14] sm:$0xf]
      %v1455 = vld [vmem:[%s619 + $0x18] sm:$0xf]
      %v1456 = vld [vmem:[%s619 + $0x1c] sm:$0xf]
      %v1457 = vld [vmem:[%s619 + $0x20] sm:$0xf]
      %v1458 = vld [vmem:[%s619 + $0x24] sm:$0xf]
      %v1459 = vld [vmem:[%s619 + $0x28] sm:$0xf]
      %v1460 = vld [vmem:[%s619 + $0x2c] sm:$0xf]
      %v1461 = vld [vmem:[%s619 + $0x30] sm:$0xf]
      %v1462 = vld [vmem:[%s619 + $0x34] sm:$0xf]
      %v1463 = vld [vmem:[%s619 + $0x38] sm:$0xf]
      %v1464 = vld [vmem:[%s619 + $0x3c] sm:$0xf]
      %v1465 = vld [vmem:[%s622] sm:$0x1]
      %v1467 = vperm.slane %v1465, 0
      %v1485 = vunpack.c.l.b16 %v1449
      %v1486 = vunpack.c.l.b16 %v1450
      %v1487 = vunpack.c.l.b16 %v1451
      %v1488 = vunpack.c.l.b16 %v1452
      %v1489 = vunpack.c.l.b16 %v1453
      %v1490 = vunpack.c.l.b16 %v1454
      %v1491 = vunpack.c.l.b16 %v1455
      %v1492 = vunpack.c.l.b16 %v1456
      %v1493 = vunpack.c.l.b16 %v1457
      %v1494 = vunpack.c.l.b16 %v1458
      %v1495 = vunpack.c.l.b16 %v1459
      %v1496 = vunpack.c.l.b16 %v1460
      %v1497 = vunpack.c.l.b16 %v1461
      %v1498 = vunpack.c.l.b16 %v1462
      %v1499 = vunpack.c.l.b16 %v1463
      %v1500 = vunpack.c.l.b16 %v1464
      %v1501 = vpack.c.b16 %v1486, %v1485
      %v1502 = vpack.c.b16 %v1488, %v1487
      %v1503 = vpack.c.b16 %v1490, %v1489
      %v1504 = vpack.c.b16 %v1492, %v1491
      %v1505 = vpack.c.b16 %v1494, %v1493
      %v1506 = vpack.c.b16 %v1496, %v1495
      %v1507 = vpack.c.b16 %v1498, %v1497
      %v1508 = vpack.c.b16 %v1500, %v1499
      %1517 = vmatpush.bf16.msra.mxu0 %v1508
      %1518 = vmatpush.bf16.msra.mxu0 %v1507
      %1519 = vmatpush.bf16.msra.mxu0 %v1506
      %1520 = vmatpush.bf16.msra.mxu0 %v1505
      %1521 = vmatpush.bf16.msra.mxu0 %v1504
      %1522 = vmatpush.bf16.msra.mxu0 %v1503
      %1523 = vmatpush.bf16.msra.mxu0 %v1502
      %1524 = vmatpush.bf16.msra.mxu0 %v1501
      %1525 = vmatmul.bf16.gmra.mxu0 %v1447
      %v1526 = vpop.f32.mrf.mxu0
      %v1527 = vadd.f32 %v1467, %v1526
      %v1528 = vpop.f32.mrf.mxu0
      %v1529 = vadd.f32 %v1467, %v1528
      %1530 = vmatmul.bf16.gmra.mxu0 %v1448
      %v1531 = vpop.f32.mrf.mxu0
      %v1532 = vadd.f32 %v1467, %v1531
      %v1533 = vpop.f32.mrf.mxu0
      %1534 = vdwg.mxu0
      %v1535 = vadd.f32 %v662, %v1527
      %v1536 = vadd.f32 %v663, %v1529
      %v1537 = vadd.f32 %v664, %v1532
      %v1538 = vld [vmem:[%s625] sm:$0x1]
      %v1539 = vld [vmem:[%s628] sm:$0x1]
      %1540 = vadd.xlane.f32.xlu0 %v1535
      %v1541 = vpop.xlane.xlu0 %1540
      %1542 = vadd.xlane.f32.xlu0 %v1536
      %v1543 = vpop.xlane.xlu0 %1542
      %v1544 = vsel %vm671, %v1537, 0.0
      %1545 = vadd.xlane.f32.xlu0 %v1544
      %v1546 = vpop.xlane.xlu0 %1545
      %v1547 = vmul.f32 %v1541, %v681
      %v1548 = vmul.f32 %v1543, %v681
      %v1549 = vmul.f32 %v1546, %v681
      %v1550 = vsub.f32 %v1535, %v1547
      %v1551 = vsub.f32 %v1536, %v1548
      %v1552 = vsub.f32 %v1537, %v1549
      %v1553 = vmul.f32 %v1550, %v1550
      %v1554 = vmul.f32 %v1551, %v1551
      %v1555 = vmul.f32 %v1552, %v1552
      %1556 = vadd.xlane.f32.xlu0 %v1553
      %v1557 = vpop.xlane.xlu0 %1556
      %1558 = vadd.xlane.f32.xlu0 %v1554
      %v1559 = vpop.xlane.xlu0 %1558
      %v1560 = vsel %vm671, %v1555, 0.0
      %1561 = vadd.xlane.f32.xlu0 %v1560
      %v1562 = vpop.xlane.xlu0 %1561
      %v1563 = vmul.f32 %v1557, %v681
      %v1564 = vmul.f32 %v1559, %v681
      %v1565 = vmul.f32 %v1562, %v681
      %v1566 = vadd.f32 %v1563, 1e-05
      %v1567 = vadd.f32 %v1564, 1e-05
      %v1568 = vadd.f32 %v1565, 1e-05
      %v1569 = vrsqrt.pop %v1566
      %v1570 = vmul.f32 %v1569, %v1566
      %v1571 = vmul.f32 %v1570, %v1569
      %v1572 = vmul.f32 0.5, %v1571
      %v1573 = vsub.f32 1.5, %v1572
      %v1574 = vmul.f32 %v1569, %v1573
      %vm1575 = vweird.f32 %v1566
      %vm1576 = vweird.f32 %v1569
      %vm1577 = vmor %vm1575, %vm1576
      %v1578 = vsel %vm1577, %v1569, %v1574
      %v1579 = vrsqrt.pop %v1567
      %v1580 = vmul.f32 %v1579, %v1567
      %v1581 = vmul.f32 %v1580, %v1579
      %v1582 = vmul.f32 0.5, %v1581
      %v1583 = vsub.f32 1.5, %v1582
      %v1584 = vmul.f32 %v1579, %v1583
      %vm1585 = vweird.f32 %v1567
      %vm1586 = vweird.f32 %v1579
      %vm1587 = vmor %vm1585, %vm1586
      %v1588 = vsel %vm1587, %v1579, %v1584
      %v1589 = vrsqrt.pop %v1568
      %v1590 = vmul.f32 %v1589, %v1568
      %v1591 = vmul.f32 %v1590, %v1589
      %v1592 = vmul.f32 0.5, %v1591
      %v1593 = vsub.f32 1.5, %v1592
      %v1594 = vmul.f32 %v1589, %v1593
      %vm1595 = vweird.f32 %v1568
      %vm1596 = vweird.f32 %v1589
      %vm1597 = vmor %vm1595, %vm1596
      %v1598 = vsel %vm1597, %v1589, %v1594
      %v1599 = vmul.f32 %v1550, %v1578
      %v1600 = vmul.f32 %v1551, %v1588
      %v1601 = vmul.f32 %v1552, %v1598
      %v1603 = vperm.slane %v1538, 0
      %v1605 = vmul.f32 %v1599, %v1603
      %v1606 = vmul.f32 %v1600, %v1603
      %v1607 = vmul.f32 %v1601, %v1603
      %v1609 = vperm.slane %v1539, 0
      %v1611 = vadd.f32 %v1605, %v1609
      %v1612 = vadd.f32 %v1606, %v1609
      %v1613 = vadd.f32 %v1607, %v1609
      %v1614 = vpack.c.bf16 %v1612, %v1611
      %v1615 = vpack.c.bf16 %v1613, %v1613
      %v1616 = vld [vmem:[%s633] sm:$0xff]
      %v1617 = vld [vmem:[%s633 + $0x8] sm:$0xff]
      %v1618 = vld [vmem:[%s633 + $0x10] sm:$0xff]
      %v1619 = vld [vmem:[%s633 + $0x18] sm:$0xff]
      %v1620 = vld [vmem:[%s633 + $0x20] sm:$0xff]
      %v1621 = vld [vmem:[%s633 + $0x28] sm:$0xff]
      %v1622 = vld [vmem:[%s633 + $0x30] sm:$0xff]
      %v1623 = vld [vmem:[%s633 + $0x38] sm:$0xff]
      %v1624 = vld [vmem:[%s633 + $0x40] sm:$0xff]
      %v1625 = vld [vmem:[%s633 + $0x48] sm:$0xff]
      %v1626 = vld [vmem:[%s633 + $0x50] sm:$0xff]
      %v1627 = vld [vmem:[%s633 + $0x58] sm:$0xff]
      %v1628 = vld [vmem:[%s633 + $0x60] sm:$0xff]
      %v1629 = vld [vmem:[%s633 + $0x68] sm:$0xff]
      %v1630 = vld [vmem:[%s633 + $0x70] sm:$0xff]
      %v1631 = vld [vmem:[%s633 + $0x78] sm:$0xff]
      %v1632 = vld [vmem:[%s633 + $0x80] sm:$0xff]
      %v1633 = vld [vmem:[%s633 + $0x88] sm:$0xff]
      %v1634 = vld [vmem:[%s633 + $0x90] sm:$0xff]
      %v1635 = vld [vmem:[%s633 + $0x98] sm:$0xff]
      %v1636 = vld [vmem:[%s633 + $0xa0] sm:$0xff]
      %v1637 = vld [vmem:[%s633 + $0xa8] sm:$0xff]
      %v1638 = vld [vmem:[%s633 + $0xb0] sm:$0xff]
      %v1639 = vld [vmem:[%s633 + $0xb8] sm:$0xff]
      %v1640 = vld [vmem:[%s633 + $0xc0] sm:$0xff]
      %v1641 = vld [vmem:[%s633 + $0xc8] sm:$0xff]
      %v1642 = vld [vmem:[%s633 + $0xd0] sm:$0xff]
      %v1643 = vld [vmem:[%s633 + $0xd8] sm:$0xff]
      %v1644 = vld [vmem:[%s633 + $0xe0] sm:$0xff]
      %v1645 = vld [vmem:[%s633 + $0xe8] sm:$0xff]
      %v1646 = vld [vmem:[%s633 + $0xf0] sm:$0xff]
      %v1647 = vld [vmem:[%s633 + $0xf8] sm:$0xff]
      %v1648 = vld [vmem:[%s637] sm:$0xf]
      %v1650 = vperm.slane %v1648, 0
      %v1651 = vperm.slane %v1648, 1
      %v1652 = vperm.slane %v1648, 2
      %v1653 = vperm.slane %v1648, 3
      %v1690 = vunpack.c.l.b16 %v1616
      %v1691 = vunpack.c.h.b16 %v1616
      %v1692 = vunpack.c.l.b16 %v1617
      %v1693 = vunpack.c.h.b16 %v1617
      %v1694 = vunpack.c.l.b16 %v1618
      %v1695 = vunpack.c.h.b16 %v1618
      %v1696 = vunpack.c.l.b16 %v1619
      %v1697 = vunpack.c.h.b16 %v1619
      %v1698 = vunpack.c.l.b16 %v1620
      %v1699 = vunpack.c.h.b16 %v1620
      %v1700 = vunpack.c.l.b16 %v1621
      %v1701 = vunpack.c.h.b16 %v1621
      %v1702 = vunpack.c.l.b16 %v1622
      %v1703 = vunpack.c.h.b16 %v1622
      %v1704 = vunpack.c.l.b16 %v1623
      %v1705 = vunpack.c.h.b16 %v1623
      %v1706 = vunpack.c.l.b16 %v1624
      %v1707 = vunpack.c.h.b16 %v1624
      %v1708 = vunpack.c.l.b16 %v1625
      %v1709 = vunpack.c.h.b16 %v1625
      %v1710 = vunpack.c.l.b16 %v1626
      %v1711 = vunpack.c.h.b16 %v1626
      %v1712 = vunpack.c.l.b16 %v1627
      %v1713 = vunpack.c.h.b16 %v1627
      %v1714 = vunpack.c.l.b16 %v1628
      %v1715 = vunpack.c.h.b16 %v1628
      %v1716 = vunpack.c.l.b16 %v1629
      %v1717 = vunpack.c.h.b16 %v1629
      %v1718 = vunpack.c.l.b16 %v1630
      %v1719 = vunpack.c.h.b16 %v1630
      %v1720 = vunpack.c.l.b16 %v1631
      %v1721 = vunpack.c.h.b16 %v1631
      %v1722 = vunpack.c.l.b16 %v1632
      %v1723 = vunpack.c.h.b16 %v1632
      %v1724 = vunpack.c.l.b16 %v1633
      %v1725 = vunpack.c.h.b16 %v1633
      %v1726 = vunpack.c.l.b16 %v1634
      %v1727 = vunpack.c.h.b16 %v1634
      %v1728 = vunpack.c.l.b16 %v1635
      %v1729 = vunpack.c.h.b16 %v1635
      %v1730 = vunpack.c.l.b16 %v1636
      %v1731 = vunpack.c.h.b16 %v1636
      %v1732 = vunpack.c.l.b16 %v1637
      %v1733 = vunpack.c.h.b16 %v1637
      %v1734 = vunpack.c.l.b16 %v1638
      %v1735 = vunpack.c.h.b16 %v1638
      %v1736 = vunpack.c.l.b16 %v1639
      %v1737 = vunpack.c.h.b16 %v1639
      %v1738 = vunpack.c.l.b16 %v1640
      %v1739 = vunpack.c.h.b16 %v1640
      %v1740 = vunpack.c.l.b16 %v1641
      %v1741 = vunpack.c.h.b16 %v1641
      %v1742 = vunpack.c.l.b16 %v1642
      %v1743 = vunpack.c.h.b16 %v1642
      %v1744 = vunpack.c.l.b16 %v1643
      %v1745 = vunpack.c.h.b16 %v1643
      %v1746 = vunpack.c.l.b16 %v1644
      %v1747 = vunpack.c.h.b16 %v1644
      %v1748 = vunpack.c.l.b16 %v1645
      %v1749 = vunpack.c.h.b16 %v1645
      %v1750 = vunpack.c.l.b16 %v1646
      %v1751 = vunpack.c.h.b16 %v1646
      %v1752 = vunpack.c.l.b16 %v1647
      %v1753 = vunpack.c.h.b16 %v1647
      %v1754 = vpack.c.b16 %v1694, %v1690
      %v1755 = vpack.c.b16 %v1695, %v1691
      %v1756 = vpack.c.b16 %v1696, %v1692
      %v1757 = vpack.c.b16 %v1697, %v1693
      %v1758 = vpack.c.b16 %v1702, %v1698
      %v1759 = vpack.c.b16 %v1703, %v1699
      %v1760 = vpack.c.b16 %v1704, %v1700
      %v1761 = vpack.c.b16 %v1705, %v1701
      %v1762 = vpack.c.b16 %v1710, %v1706
      %v1763 = vpack.c.b16 %v1711, %v1707
      %v1764 = vpack.c.b16 %v1712, %v1708
      %v1765 = vpack.c.b16 %v1713, %v1709
      %v1766 = vpack.c.b16 %v1718, %v1714
      %v1767 = vpack.c.b16 %v1719, %v1715
      %v1768 = vpack.c.b16 %v1720, %v1716
      %v1769 = vpack.c.b16 %v1721, %v1717
      %v1770 = vpack.c.b16 %v1726, %v1722
      %v1771 = vpack.c.b16 %v1727, %v1723
      %v1772 = vpack.c.b16 %v1728, %v1724
      %v1773 = vpack.c.b16 %v1729, %v1725
      %v1774 = vpack.c.b16 %v1734, %v1730
      %v1775 = vpack.c.b16 %v1735, %v1731
      %v1776 = vpack.c.b16 %v1736, %v1732
      %v1777 = vpack.c.b16 %v1737, %v1733
      %v1778 = vpack.c.b16 %v1742, %v1738
      %v1779 = vpack.c.b16 %v1743, %v1739
      %v1780 = vpack.c.b16 %v1744, %v1740
      %v1781 = vpack.c.b16 %v1745, %v1741
      %v1782 = vpack.c.b16 %v1750, %v1746
      %v1783 = vpack.c.b16 %v1751, %v1747
      %v1784 = vpack.c.b16 %v1752, %v1748
      %v1785 = vpack.c.b16 %v1753, %v1749
      %1818 = vmatpush.bf16.msra.mxu0 %v1782
      %1819 = vmatpush.bf16.msra.mxu0 %v1778
      %1820 = vmatpush.bf16.msra.mxu0 %v1774
      %1821 = vmatpush.bf16.msra.mxu0 %v1770
      %1822 = vmatpush.bf16.msra.mxu0 %v1766
      %1823 = vmatpush.bf16.msra.mxu0 %v1762
      %1824 = vmatpush.bf16.msra.mxu0 %v1758
      %1825 = vmatpush.bf16.msra.mxu0 %v1754
      %1826 = vmatmul.bf16.gmra.mxu0 %v1614
      %v1827 = vpop.f32.mrf.mxu0
      %v1828 = vadd.f32 %v1650, %v1827
      %v1829 = vpop.f32.mrf.mxu0
      %v1830 = vadd.f32 %v1650, %v1829
      %1831 = vmatmul.bf16.gmra.mxu0 %v1615
      %v1832 = vpop.f32.mrf.mxu0
      %v1833 = vadd.f32 %v1650, %v1832
      %v1834 = vpop.f32.mrf.mxu0
      %1835 = vdwg.mxu0
      %1836 = vmatpush.bf16.msra.mxu0 %v1783
      %1837 = vmatpush.bf16.msra.mxu0 %v1779
      %1838 = vmatpush.bf16.msra.mxu0 %v1775
      %1839 = vmatpush.bf16.msra.mxu0 %v1771
      %1840 = vmatpush.bf16.msra.mxu0 %v1767
      %1841 = vmatpush.bf16.msra.mxu0 %v1763
      %1842 = vmatpush.bf16.msra.mxu0 %v1759
      %1843 = vmatpush.bf16.msra.mxu0 %v1755
      %1844 = vmatmul.bf16.gmra.mxu0 %v1614
      %v1845 = vpop.f32.mrf.mxu0
      %v1846 = vadd.f32 %v1651, %v1845
      %v1847 = vpop.f32.mrf.mxu0
      %v1848 = vadd.f32 %v1651, %v1847
      %1849 = vmatmul.bf16.gmra.mxu0 %v1615
      %v1850 = vpop.f32.mrf.mxu0
      %v1851 = vadd.f32 %v1651, %v1850
      %v1852 = vpop.f32.mrf.mxu0
      %1853 = vdwg.mxu0
      %1854 = vmatpush.bf16.msra.mxu0 %v1784
      %1855 = vmatpush.bf16.msra.mxu0 %v1780
      %1856 = vmatpush.bf16.msra.mxu0 %v1776
      %1857 = vmatpush.bf16.msra.mxu0 %v1772
      %1858 = vmatpush.bf16.msra.mxu0 %v1768
      %1859 = vmatpush.bf16.msra.mxu0 %v1764
      %1860 = vmatpush.bf16.msra.mxu0 %v1760
      %1861 = vmatpush.bf16.msra.mxu0 %v1756
      %1862 = vmatmul.bf16.gmra.mxu0 %v1614
      %v1863 = vpop.f32.mrf.mxu0
      %v1864 = vadd.f32 %v1652, %v1863
      %v1865 = vpop.f32.mrf.mxu0
      %v1866 = vadd.f32 %v1652, %v1865
      %1867 = vmatmul.bf16.gmra.mxu0 %v1615
      %v1868 = vpop.f32.mrf.mxu0
      %v1869 = vadd.f32 %v1652, %v1868
      %v1870 = vpop.f32.mrf.mxu0
      %1871 = vdwg.mxu0
      %1872 = vmatpush.bf16.msra.mxu0 %v1785
      %1873 = vmatpush.bf16.msra.mxu0 %v1781
      %1874 = vmatpush.bf16.msra.mxu0 %v1777
      %1875 = vmatpush.bf16.msra.mxu0 %v1773
      %1876 = vmatpush.bf16.msra.mxu0 %v1769
      %1877 = vmatpush.bf16.msra.mxu0 %v1765
      %1878 = vmatpush.bf16.msra.mxu0 %v1761
      %1879 = vmatpush.bf16.msra.mxu0 %v1757
      %1880 = vmatmul.bf16.gmra.mxu0 %v1614
      %v1881 = vpop.f32.mrf.mxu0
      %v1882 = vadd.f32 %v1653, %v1881
      %v1883 = vpop.f32.mrf.mxu0
      %v1884 = vadd.f32 %v1653, %v1883
      %1885 = vmatmul.bf16.gmra.mxu0 %v1615
      %v1886 = vpop.f32.mrf.mxu0
      %v1887 = vadd.f32 %v1653, %v1886
      %v1888 = vpop.f32.mrf.mxu0
      %1889 = vdwg.mxu0
      %v1890 = vmul.f32 %v1828, 1.702
      %v1891 = vmul.f32 %v1846, 1.702
      %v1892 = vmul.f32 %v1864, 1.702
      %v1893 = vmul.f32 %v1882, 1.702
      %v1894 = vmul.f32 %v1830, 1.702
      %v1895 = vmul.f32 %v1848, 1.702
      %v1896 = vmul.f32 %v1866, 1.702
      %v1897 = vmul.f32 %v1884, 1.702
      %v1898 = vmul.f32 %v1833, 1.702
      %v1899 = vmul.f32 %v1851, 1.702
      %v1900 = vmul.f32 %v1869, 1.702
      %v1901 = vmul.f32 %v1887, 1.702
      %v1902 = vxor.u32 %v1890, 2147483648
      %v1903 = vxor.u32 %v1891, 2147483648
      %v1904 = vxor.u32 %v1892, 2147483648
      %v1905 = vxor.u32 %v1893, 2147483648
      %v1906 = vxor.u32 %v1894, 2147483648
      %v1907 = vxor.u32 %v1895, 2147483648
      %v1908 = vxor.u32 %v1896, 2147483648
      %v1909 = vxor.u32 %v1897, 2147483648
      %v1910 = vxor.u32 %v1898, 2147483648
      %v1911 = vxor.u32 %v1899, 2147483648
      %v1912 = vxor.u32 %v1900, 2147483648
      %v1913 = vxor.u32 %v1901, 2147483648
      %v1914 = vmul.f32 %v1902, 1.442695
      %v1915 = vpow.pop %v1914
      %v1916 = vmul.f32 %v1903, 1.442695
      %v1917 = vpow.pop %v1916
      %v1918 = vmul.f32 %v1904, 1.442695
      %v1919 = vpow.pop %v1918
      %v1920 = vmul.f32 %v1905, 1.442695
      %v1921 = vpow.pop %v1920
      %v1922 = vmul.f32 %v1906, 1.442695
      %v1923 = vpow.pop %v1922
      %v1924 = vmul.f32 %v1907, 1.442695
      %v1925 = vpow.pop %v1924
      %v1926 = vmul.f32 %v1908, 1.442695
      %v1927 = vpow.pop %v1926
      %v1928 = vmul.f32 %v1909, 1.442695
      %v1929 = vpow.pop %v1928
      %v1930 = vmul.f32 %v1910, 1.442695
      %v1931 = vpow.pop %v1930
      %v1932 = vmul.f32 %v1911, 1.442695
      %v1933 = vpow.pop %v1932
      %v1934 = vmul.f32 %v1912, 1.442695
      %v1935 = vpow.pop %v1934
      %v1936 = vmul.f32 %v1913, 1.442695
      %v1937 = vpow.pop %v1936
      %v1938 = vadd.f32 %v1915, 1.0
      %v1939 = vadd.f32 %v1917, 1.0
      %v1940 = vadd.f32 %v1919, 1.0
      %v1941 = vadd.f32 %v1921, 1.0
      %v1942 = vadd.f32 %v1923, 1.0
      %v1943 = vadd.f32 %v1925, 1.0
      %v1944 = vadd.f32 %v1927, 1.0
      %v1945 = vadd.f32 %v1929, 1.0
      %v1946 = vadd.f32 %v1931, 1.0
      %v1947 = vadd.f32 %v1933, 1.0
      %v1948 = vadd.f32 %v1935, 1.0
      %v1949 = vadd.f32 %v1937, 1.0
      %v1950 = vrcp.pop %v1938
      %v1951 = vmul.f32 %v1938, %v1950
      %v1952 = vsub.f32 1.0, %v1951
      %v1953 = vmul.f32 %v1950, %v1952
      %v1954 = vadd.f32 %v1950, %v1953
      %vm1955 = vweird.f32 %v1938
      %vm1956 = vweird.f32 %v1950
      %vm1957 = vmor %vm1955, %vm1956
      %v1958 = vsel %vm1957, %v1950, %v1954
      %v1959 = vand.u32 2147483647, %v1938
      %vm1960 = vcmp.eq.f32.partialorder %v1959, 8.507059e+37
      %v1961 = vand.u32 %v1938, 2147483648
      %v1962 = vor.u32 1.1754944e-38, %v1961
      %v1963 = vsel %vm1960, %v1962, %v1958
      %v1964 = vmul.f32 1.0, %v1963
      %v1965 = vrcp.pop %v1939
      %v1966 = vmul.f32 %v1939, %v1965
      %v1967 = vsub.f32 1.0, %v1966
      %v1968 = vmul.f32 %v1965, %v1967
      %v1969 = vadd.f32 %v1965, %v1968
      %vm1970 = vweird.f32 %v1939
      %vm1971 = vweird.f32 %v1965
      %vm1972 = vmor %vm1970, %vm1971
      %v1973 = vsel %vm1972, %v1965, %v1969
      %v1974 = vand.u32 2147483647, %v1939
      %vm1975 = vcmp.eq.f32.partialorder %v1974, 8.507059e+37
      %v1976 = vand.u32 %v1939, 2147483648
      %v1977 = vor.u32 1.1754944e-38, %v1976
      %v1978 = vsel %vm1975, %v1977, %v1973
      %v1979 = vmul.f32 1.0, %v1978
      %v1980 = vrcp.pop %v1940
      %v1981 = vmul.f32 %v1940, %v1980
      %v1982 = vsub.f32 1.0, %v1981
      %v1983 = vmul.f32 %v1980, %v1982
      %v1984 = vadd.f32 %v1980, %v1983
      %vm1985 = vweird.f32 %v1940
      %vm1986 = vweird.f32 %v1980
      %vm1987 = vmor %vm1985, %vm1986
      %v1988 = vsel %vm1987, %v1980, %v1984
      %v1989 = vand.u32 2147483647, %v1940
      %vm1990 = vcmp.eq.f32.partialorder %v1989, 8.507059e+37
      %v1991 = vand.u32 %v1940, 2147483648
      %v1992 = vor.u32 1.1754944e-38, %v1991
      %v1993 = vsel %vm1990, %v1992, %v1988
      %v1994 = vmul.f32 1.0, %v1993
      %v1995 = vrcp.pop %v1941
      %v1996 = vmul.f32 %v1941, %v1995
      %v1997 = vsub.f32 1.0, %v1996
      %v1998 = vmul.f32 %v1995, %v1997
      %v1999 = vadd.f32 %v1995, %v1998
      %vm2000 = vweird.f32 %v1941
      %vm2001 = vweird.f32 %v1995
      %vm2002 = vmor %vm2000, %vm2001
      %v2003 = vsel %vm2002, %v1995, %v1999
      %v2004 = vand.u32 2147483647, %v1941
      %vm2005 = vcmp.eq.f32.partialorder %v2004, 8.507059e+37
      %v2006 = vand.u32 %v1941, 2147483648
      %v2007 = vor.u32 1.1754944e-38, %v2006
      %v2008 = vsel %vm2005, %v2007, %v2003
      %v2009 = vmul.f32 1.0, %v2008
      %v2010 = vrcp.pop %v1942
      %v2011 = vmul.f32 %v1942, %v2010
      %v2012 = vsub.f32 1.0, %v2011
      %v2013 = vmul.f32 %v2010, %v2012
      %v2014 = vadd.f32 %v2010, %v2013
      %vm2015 = vweird.f32 %v1942
      %vm2016 = vweird.f32 %v2010
      %vm2017 = vmor %vm2015, %vm2016
      %v2018 = vsel %vm2017, %v2010, %v2014
      %v2019 = vand.u32 2147483647, %v1942
      %vm2020 = vcmp.eq.f32.partialorder %v2019, 8.507059e+37
      %v2021 = vand.u32 %v1942, 2147483648
      %v2022 = vor.u32 1.1754944e-38, %v2021
      %v2023 = vsel %vm2020, %v2022, %v2018
      %v2024 = vmul.f32 1.0, %v2023
      %v2025 = vrcp.pop %v1943
      %v2026 = vmul.f32 %v1943, %v2025
      %v2027 = vsub.f32 1.0, %v2026
      %v2028 = vmul.f32 %v2025, %v2027
      %v2029 = vadd.f32 %v2025, %v2028
      %vm2030 = vweird.f32 %v1943
      %vm2031 = vweird.f32 %v2025
      %vm2032 = vmor %vm2030, %vm2031
      %v2033 = vsel %vm2032, %v2025, %v2029
      %v2034 = vand.u32 2147483647, %v1943
      %vm2035 = vcmp.eq.f32.partialorder %v2034, 8.507059e+37
      %v2036 = vand.u32 %v1943, 2147483648
      %v2037 = vor.u32 1.1754944e-38, %v2036
      %v2038 = vsel %vm2035, %v2037, %v2033
      %v2039 = vmul.f32 1.0, %v2038
      %v2040 = vrcp.pop %v1944
      %v2041 = vmul.f32 %v1944, %v2040
      %v2042 = vsub.f32 1.0, %v2041
      %v2043 = vmul.f32 %v2040, %v2042
      %v2044 = vadd.f32 %v2040, %v2043
      %vm2045 = vweird.f32 %v1944
      %vm2046 = vweird.f32 %v2040
      %vm2047 = vmor %vm2045, %vm2046
      %v2048 = vsel %vm2047, %v2040, %v2044
      %v2049 = vand.u32 2147483647, %v1944
      %vm2050 = vcmp.eq.f32.partialorder %v2049, 8.507059e+37
      %v2051 = vand.u32 %v1944, 2147483648
      %v2052 = vor.u32 1.1754944e-38, %v2051
      %v2053 = vsel %vm2050, %v2052, %v2048
      %v2054 = vmul.f32 1.0, %v2053
      %v2055 = vrcp.pop %v1945
      %v2056 = vmul.f32 %v1945, %v2055
      %v2057 = vsub.f32 1.0, %v2056
      %v2058 = vmul.f32 %v2055, %v2057
      %v2059 = vadd.f32 %v2055, %v2058
      %vm2060 = vweird.f32 %v1945
      %vm2061 = vweird.f32 %v2055
      %vm2062 = vmor %vm2060, %vm2061
      %v2063 = vsel %vm2062, %v2055, %v2059
      %v2064 = vand.u32 2147483647, %v1945
      %vm2065 = vcmp.eq.f32.partialorder %v2064, 8.507059e+37
      %v2066 = vand.u32 %v1945, 2147483648
      %v2067 = vor.u32 1.1754944e-38, %v2066
      %v2068 = vsel %vm2065, %v2067, %v2063
      %v2069 = vmul.f32 1.0, %v2068
      %v2070 = vrcp.pop %v1946
      %v2071 = vmul.f32 %v1946, %v2070
      %v2072 = vsub.f32 1.0, %v2071
      %v2073 = vmul.f32 %v2070, %v2072
      %v2074 = vadd.f32 %v2070, %v2073
      %vm2075 = vweird.f32 %v1946
      %vm2076 = vweird.f32 %v2070
      %vm2077 = vmor %vm2075, %vm2076
      %v2078 = vsel %vm2077, %v2070, %v2074
      %v2079 = vand.u32 2147483647, %v1946
      %vm2080 = vcmp.eq.f32.partialorder %v2079, 8.507059e+37
      %v2081 = vand.u32 %v1946, 2147483648
      %v2082 = vor.u32 1.1754944e-38, %v2081
      %v2083 = vsel %vm2080, %v2082, %v2078
      %v2084 = vmul.f32 1.0, %v2083
      %v2085 = vrcp.pop %v1947
      %v2086 = vmul.f32 %v1947, %v2085
      %v2087 = vsub.f32 1.0, %v2086
      %v2088 = vmul.f32 %v2085, %v2087
      %v2089 = vadd.f32 %v2085, %v2088
      %vm2090 = vweird.f32 %v1947
      %vm2091 = vweird.f32 %v2085
      %vm2092 = vmor %vm2090, %vm2091
      %v2093 = vsel %vm2092, %v2085, %v2089
      %v2094 = vand.u32 2147483647, %v1947
      %vm2095 = vcmp.eq.f32.partialorder %v2094, 8.507059e+37
      %v2096 = vand.u32 %v1947, 2147483648
      %v2097 = vor.u32 1.1754944e-38, %v2096
      %v2098 = vsel %vm2095, %v2097, %v2093
      %v2099 = vmul.f32 1.0, %v2098
      %v2100 = vrcp.pop %v1948
      %v2101 = vmul.f32 %v1948, %v2100
      %v2102 = vsub.f32 1.0, %v2101
      %v2103 = vmul.f32 %v2100, %v2102
      %v2104 = vadd.f32 %v2100, %v2103
      %vm2105 = vweird.f32 %v1948
      %vm2106 = vweird.f32 %v2100
      %vm2107 = vmor %vm2105, %vm2106
      %v2108 = vsel %vm2107, %v2100, %v2104
      %v2109 = vand.u32 2147483647, %v1948
      %vm2110 = vcmp.eq.f32.partialorder %v2109, 8.507059e+37
      %v2111 = vand.u32 %v1948, 2147483648
      %v2112 = vor.u32 1.1754944e-38, %v2111
      %v2113 = vsel %vm2110, %v2112, %v2108
      %v2114 = vmul.f32 1.0, %v2113
      %v2115 = vrcp.pop %v1949
      %v2116 = vmul.f32 %v1949, %v2115
      %v2117 = vsub.f32 1.0, %v2116
      %v2118 = vmul.f32 %v2115, %v2117
      %v2119 = vadd.f32 %v2115, %v2118
      %vm2120 = vweird.f32 %v1949
      %vm2121 = vweird.f32 %v2115
      %vm2122 = vmor %vm2120, %vm2121
      %v2123 = vsel %vm2122, %v2115, %v2119
      %v2124 = vand.u32 2147483647, %v1949
      %vm2125 = vcmp.eq.f32.partialorder %v2124, 8.507059e+37
      %v2126 = vand.u32 %v1949, 2147483648
      %v2127 = vor.u32 1.1754944e-38, %v2126
      %v2128 = vsel %vm2125, %v2127, %v2123
      %v2129 = vmul.f32 1.0, %v2128
      %v2130 = vmul.f32 %v1828, %v1964
      %v2131 = vmul.f32 %v1846, %v1979
      %v2132 = vmul.f32 %v1864, %v1994
      %v2133 = vmul.f32 %v1882, %v2009
      %v2134 = vmul.f32 %v1830, %v2024
      %v2135 = vmul.f32 %v1848, %v2039
      %v2136 = vmul.f32 %v1866, %v2054
      %v2137 = vmul.f32 %v1884, %v2069
      %v2138 = vmul.f32 %v1833, %v2084
      %v2139 = vmul.f32 %v1851, %v2099
      %v2140 = vmul.f32 %v1869, %v2114
      %v2141 = vmul.f32 %v1887, %v2129
      %v2142 = vpack.c.bf16 %v2134, %v2130
      %v2143 = vpack.c.bf16 %v2135, %v2131
      %v2144 = vpack.c.bf16 %v2136, %v2132
      %v2145 = vpack.c.bf16 %v2137, %v2133
      %v2146 = vpack.c.bf16 %v2138, %v2138
      %v2147 = vpack.c.bf16 %v2139, %v2139
      %v2148 = vpack.c.bf16 %v2140, %v2140
      %v2149 = vpack.c.bf16 %v2141, %v2141
      %v2150 = vld [vmem:[%s642] sm:$0xf]
      %v2151 = vld [vmem:[%s642 + $0x4] sm:$0xf]
      %v2152 = vld [vmem:[%s642 + $0x8] sm:$0xf]
      %v2153 = vld [vmem:[%s642 + $0xc] sm:$0xf]
      %v2154 = vld [vmem:[%s642 + $0x10] sm:$0xf]
      %v2155 = vld [vmem:[%s642 + $0x14] sm:$0xf]
      %v2156 = vld [vmem:[%s642 + $0x18] sm:$0xf]
      %v2157 = vld [vmem:[%s642 + $0x1c] sm:$0xf]
      %v2158 = vld [vmem:[%s642 + $0x20] sm:$0xf]
      %v2159 = vld [vmem:[%s642 + $0x24] sm:$0xf]
      %v2160 = vld [vmem:[%s642 + $0x28] sm:$0xf]
      %v2161 = vld [vmem:[%s642 + $0x2c] sm:$0xf]
      %v2162 = vld [vmem:[%s642 + $0x30] sm:$0xf]
      %v2163 = vld [vmem:[%s642 + $0x34] sm:$0xf]
      %v2164 = vld [vmem:[%s642 + $0x38] sm:$0xf]
      %v2165 = vld [vmem:[%s642 + $0x3c] sm:$0xf]
      %v2166 = vld [vmem:[%s642 + $0x40] sm:$0xf]
      %v2167 = vld [vmem:[%s642 + $0x44] sm:$0xf]
      %v2168 = vld [vmem:[%s642 + $0x48] sm:$0xf]
      %v2169 = vld [vmem:[%s642 + $0x4c] sm:$0xf]
      %v2170 = vld [vmem:[%s642 + $0x50] sm:$0xf]
      %v2171 = vld [vmem:[%s642 + $0x54] sm:$0xf]
      %v2172 = vld [vmem:[%s642 + $0x58] sm:$0xf]
      %v2173 = vld [vmem:[%s642 + $0x5c] sm:$0xf]
      %v2174 = vld [vmem:[%s642 + $0x60] sm:$0xf]
      %v2175 = vld [vmem:[%s642 + $0x64] sm:$0xf]
      %v2176 = vld [vmem:[%s642 + $0x68] sm:$0xf]
      %v2177 = vld [vmem:[%s642 + $0x6c] sm:$0xf]
      %v2178 = vld [vmem:[%s642 + $0x70] sm:$0xf]
      %v2179 = vld [vmem:[%s642 + $0x74] sm:$0xf]
      %v2180 = vld [vmem:[%s642 + $0x78] sm:$0xf]
      %v2181 = vld [vmem:[%s642 + $0x7c] sm:$0xf]
      %v2182 = vld [vmem:[%s642 + $0x80] sm:$0xf]
      %v2183 = vld [vmem:[%s642 + $0x84] sm:$0xf]
      %v2184 = vld [vmem:[%s642 + $0x88] sm:$0xf]
      %v2185 = vld [vmem:[%s642 + $0x8c] sm:$0xf]
      %v2186 = vld [vmem:[%s642 + $0x90] sm:$0xf]
      %v2187 = vld [vmem:[%s642 + $0x94] sm:$0xf]
      %v2188 = vld [vmem:[%s642 + $0x98] sm:$0xf]
      %v2189 = vld [vmem:[%s642 + $0x9c] sm:$0xf]
      %v2190 = vld [vmem:[%s642 + $0xa0] sm:$0xf]
      %v2191 = vld [vmem:[%s642 + $0xa4] sm:$0xf]
      %v2192 = vld [vmem:[%s642 + $0xa8] sm:$0xf]
      %v2193 = vld [vmem:[%s642 + $0xac] sm:$0xf]
      %v2194 = vld [vmem:[%s642 + $0xb0] sm:$0xf]
      %v2195 = vld [vmem:[%s642 + $0xb4] sm:$0xf]
      %v2196 = vld [vmem:[%s642 + $0xb8] sm:$0xf]
      %v2197 = vld [vmem:[%s642 + $0xbc] sm:$0xf]
      %v2198 = vld [vmem:[%s642 + $0xc0] sm:$0xf]
      %v2199 = vld [vmem:[%s642 + $0xc4] sm:$0xf]
      %v2200 = vld [vmem:[%s642 + $0xc8] sm:$0xf]
      %v2201 = vld [vmem:[%s642 + $0xcc] sm:$0xf]
      %v2202 = vld [vmem:[%s642 + $0xd0] sm:$0xf]
      %v2203 = vld [vmem:[%s642 + $0xd4] sm:$0xf]
      %v2204 = vld [vmem:[%s642 + $0xd8] sm:$0xf]
      %v2205 = vld [vmem:[%s642 + $0xdc] sm:$0xf]
      %v2206 = vld [vmem:[%s642 + $0xe0] sm:$0xf]
      %v2207 = vld [vmem:[%s642 + $0xe4] sm:$0xf]
      %v2208 = vld [vmem:[%s642 + $0xe8] sm:$0xf]
      %v2209 = vld [vmem:[%s642 + $0xec] sm:$0xf]
      %v2210 = vld [vmem:[%s642 + $0xf0] sm:$0xf]
      %v2211 = vld [vmem:[%s642 + $0xf4] sm:$0xf]
      %v2212 = vld [vmem:[%s642 + $0xf8] sm:$0xf]
      %v2213 = vld [vmem:[%s642 + $0xfc] sm:$0xf]
      %v2214 = vld [vmem:[%s645] sm:$0x1]
      %v2216 = vperm.slane %v2214, 0
      %v2282 = vunpack.c.l.b16 %v2150
      %v2283 = vunpack.c.l.b16 %v2151
      %v2284 = vunpack.c.l.b16 %v2152
      %v2285 = vunpack.c.l.b16 %v2153
      %v2286 = vunpack.c.l.b16 %v2154
      %v2287 = vunpack.c.l.b16 %v2155
      %v2288 = vunpack.c.l.b16 %v2156
      %v2289 = vunpack.c.l.b16 %v2157
      %v2290 = vunpack.c.l.b16 %v2158
      %v2291 = vunpack.c.l.b16 %v2159
      %v2292 = vunpack.c.l.b16 %v2160
      %v2293 = vunpack.c.l.b16 %v2161
      %v2294 = vunpack.c.l.b16 %v2162
      %v2295 = vunpack.c.l.b16 %v2163
      %v2296 = vunpack.c.l.b16 %v2164
      %v2297 = vunpack.c.l.b16 %v2165
      %v2298 = vunpack.c.l.b16 %v2166
      %v2299 = vunpack.c.l.b16 %v2167
      %v2300 = vunpack.c.l.b16 %v2168
      %v2301 = vunpack.c.l.b16 %v2169
      %v2302 = vunpack.c.l.b16 %v2170
      %v2303 = vunpack.c.l.b16 %v2171
      %v2304 = vunpack.c.l.b16 %v2172
      %v2305 = vunpack.c.l.b16 %v2173
      %v2306 = vunpack.c.l.b16 %v2174
      %v2307 = vunpack.c.l.b16 %v2175
      %v2308 = vunpack.c.l.b16 %v2176
      %v2309 = vunpack.c.l.b16 %v2177
      %v2310 = vunpack.c.l.b16 %v2178
      %v2311 = vunpack.c.l.b16 %v2179
      %v2312 = vunpack.c.l.b16 %v2180
      %v2313 = vunpack.c.l.b16 %v2181
      %v2314 = vunpack.c.l.b16 %v2182
      %v2315 = vunpack.c.l.b16 %v2183
      %v2316 = vunpack.c.l.b16 %v2184
      %v2317 = vunpack.c.l.b16 %v2185
      %v2318 = vunpack.c.l.b16 %v2186
      %v2319 = vunpack.c.l.b16 %v2187
      %v2320 = vunpack.c.l.b16 %v2188
      %v2321 = vunpack.c.l.b16 %v2189
      %v2322 = vunpack.c.l.b16 %v2190
      %v2323 = vunpack.c.l.b16 %v2191
      %v2324 = vunpack.c.l.b16 %v2192
      %v2325 = vunpack.c.l.b16 %v2193
      %v2326 = vunpack.c.l.b16 %v2194
      %v2327 = vunpack.c.l.b16 %v2195
      %v2328 = vunpack.c.l.b16 %v2196
      %v2329 = vunpack.c.l.b16 %v2197
      %v2330 = vunpack.c.l.b16 %v2198
      %v2331 = vunpack.c.l.b16 %v2199
      %v2332 = vunpack.c.l.b16 %v2200
      %v2333 = vunpack.c.l.b16 %v2201
      %v2334 = vunpack.c.l.b16 %v2202
      %v2335 = vunpack.c.l.b16 %v2203
      %v2336 = vunpack.c.l.b16 %v2204
      %v2337 = vunpack.c.l.b16 %v2205
      %v2338 = vunpack.c.l.b16 %v2206
      %v2339 = vunpack.c.l.b16 %v2207
      %v2340 = vunpack.c.l.b16 %v2208
      %v2341 = vunpack.c.l.b16 %v2209
      %v2342 = vunpack.c.l.b16 %v2210
      %v2343 = vunpack.c.l.b16 %v2211
      %v2344 = vunpack.c.l.b16 %v2212
      %v2345 = vunpack.c.l.b16 %v2213
      %v2346 = vpack.c.b16 %v2283, %v2282
      %v2347 = vpack.c.b16 %v2285, %v2284
      %v2348 = vpack.c.b16 %v2287, %v2286
      %v2349 = vpack.c.b16 %v2289, %v2288
      %v2350 = vpack.c.b16 %v2291, %v2290
      %v2351 = vpack.c.b16 %v2293, %v2292
      %v2352 = vpack.c.b16 %v2295, %v2294
      %v2353 = vpack.c.b16 %v2297, %v2296
      %v2354 = vpack.c.b16 %v2299, %v2298
      %v2355 = vpack.c.b16 %v2301, %v2300
      %v2356 = vpack.c.b16 %v2303, %v2302
      %v2357 = vpack.c.b16 %v2305, %v2304
      %v2358 = vpack.c.b16 %v2307, %v2306
      %v2359 = vpack.c.b16 %v2309, %v2308
      %v2360 = vpack.c.b16 %v2311, %v2310
      %v2361 = vpack.c.b16 %v2313, %v2312
      %v2362 = vpack.c.b16 %v2315, %v2314
      %v2363 = vpack.c.b16 %v2317, %v2316
      %v2364 = vpack.c.b16 %v2319, %v2318
      %v2365 = vpack.c.b16 %v2321, %v2320
      %v2366 = vpack.c.b16 %v2323, %v2322
      %v2367 = vpack.c.b16 %v2325, %v2324
      %v2368 = vpack.c.b16 %v2327, %v2326
      %v2369 = vpack.c.b16 %v2329, %v2328
      %v2370 = vpack.c.b16 %v2331, %v2330
      %v2371 = vpack.c.b16 %v2333, %v2332
      %v2372 = vpack.c.b16 %v2335, %v2334
      %v2373 = vpack.c.b16 %v2337, %v2336
      %v2374 = vpack.c.b16 %v2339, %v2338
      %v2375 = vpack.c.b16 %v2341, %v2340
      %v2376 = vpack.c.b16 %v2343, %v2342
      %v2377 = vpack.c.b16 %v2345, %v2344
      %2410 = vmatpush.bf16.msra.mxu0 %v2353
      %2411 = vmatpush.bf16.msra.mxu0 %v2352
      %2412 = vmatpush.bf16.msra.mxu0 %v2351
      %2413 = vmatpush.bf16.msra.mxu0 %v2350
      %2414 = vmatpush.bf16.msra.mxu0 %v2349
      %2415 = vmatpush.bf16.msra.mxu0 %v2348
      %2416 = vmatpush.bf16.msra.mxu0 %v2347
      %2417 = vmatpush.bf16.msra.mxu0 %v2346
      %2418 = vmatmul.bf16.gmra.mxu0 %v2142
      %v2419 = vpop.f32.mrf.mxu0
      %v2420 = vadd.f32 %v2216, %v2419
      %v2421 = vpop.f32.mrf.mxu0
      %v2422 = vadd.f32 %v2216, %v2421
      %2423 = vmatmul.bf16.gmra.mxu0 %v2146
      %v2424 = vpop.f32.mrf.mxu0
      %v2425 = vadd.f32 %v2216, %v2424
      %v2426 = vpop.f32.mrf.mxu0
      %2427 = vdwg.mxu0
      %2428 = vmatpush.bf16.msra.mxu0 %v2361
      %2429 = vmatpush.bf16.msra.mxu0 %v2360
      %2430 = vmatpush.bf16.msra.mxu0 %v2359
      %2431 = vmatpush.bf16.msra.mxu0 %v2358
      %2432 = vmatpush.bf16.msra.mxu0 %v2357
      %2433 = vmatpush.bf16.msra.mxu0 %v2356
      %2434 = vmatpush.bf16.msra.mxu0 %v2355
      %2435 = vmatpush.bf16.msra.mxu0 %v2354
      %2436 = vmatmul.bf16.gmra.mxu0 %v2143
      %v2437 = vpop.f32.mrf.mxu0
      %v2438 = vadd.f32 %v2420, %v2437
      %v2439 = vpop.f32.mrf.mxu0
      %v2440 = vadd.f32 %v2422, %v2439
      %2441 = vmatmul.bf16.gmra.mxu0 %v2147
      %v2442 = vpop.f32.mrf.mxu0
      %v2443 = vadd.f32 %v2425, %v2442
      %v2444 = vpop.f32.mrf.mxu0
      %2445 = vdwg.mxu0
      %2446 = vmatpush.bf16.msra.mxu0 %v2369
      %2447 = vmatpush.bf16.msra.mxu0 %v2368
      %2448 = vmatpush.bf16.msra.mxu0 %v2367
      %2449 = vmatpush.bf16.msra.mxu0 %v2366
      %2450 = vmatpush.bf16.msra.mxu0 %v2365
      %2451 = vmatpush.bf16.msra.mxu0 %v2364
      %2452 = vmatpush.bf16.msra.mxu0 %v2363
      %2453 = vmatpush.bf16.msra.mxu0 %v2362
      %2454 = vmatmul.bf16.gmra.mxu0 %v2144
      %v2455 = vpop.f32.mrf.mxu0
      %v2456 = vadd.f32 %v2438, %v2455
      %v2457 = vpop.f32.mrf.mxu0
      %v2458 = vadd.f32 %v2440, %v2457
      %2459 = vmatmul.bf16.gmra.mxu0 %v2148
      %v2460 = vpop.f32.mrf.mxu0
      %v2461 = vadd.f32 %v2443, %v2460
      %v2462 = vpop.f32.mrf.mxu0
      %2463 = vdwg.mxu0
      %2464 = vmatpush.bf16.msra.mxu0 %v2377
      %2465 = vmatpush.bf16.msra.mxu0 %v2376
      %2466 = vmatpush.bf16.msra.mxu0 %v2375
      %2467 = vmatpush.bf16.msra.mxu0 %v2374
      %2468 = vmatpush.bf16.msra.mxu0 %v2373
      %2469 = vmatpush.bf16.msra.mxu0 %v2372
      %2470 = vmatpush.bf16.msra.mxu0 %v2371
      %2471 = vmatpush.bf16.msra.mxu0 %v2370
      %2472 = vmatmul.bf16.gmra.mxu0 %v2145
      %v2473 = vpop.f32.mrf.mxu0
      %v2474 = vadd.f32 %v2456, %v2473
      %v2475 = vpop.f32.mrf.mxu0
      %v2476 = vadd.f32 %v2458, %v2475
      %2477 = vmatmul.bf16.gmra.mxu0 %v2149
      %v2478 = vpop.f32.mrf.mxu0
      %v2479 = vadd.f32 %v2461, %v2478
      %v2480 = vpop.f32.mrf.mxu0
      %2481 = vdwg.mxu0
      %v2482 = vadd.f32 %v1535, %v2474
      %v2483 = vadd.f32 %v1536, %v2476
      %v2484 = vadd.f32 %v1537, %v2479
      %2485 = vst [vmem:[%s650] sm:$0xff] %v2482
      %2486 = vst [vmem:[%s650 + $0x8] sm:$0xff] %v2483
      %2487 = vst [vmem:[%s650 + $0x10] sm:$0x1] %v2484
      %p2488 = scmp.lt.s32.totalorder %s28, 1
      %s2489 = scalar_select %p2488, %s28, 1
      %s2490 = smul.addr %s2489, 3
      %s2491 = smul.addr %s2490, 8
      %s2492 = scalar_lea.vmem %s13, %s2491
      // Predicated region
      $region77: #{ts_model_forward.4} parent=71 // pred_check
        %p2493 = pneg %p392
      $region78: #{ts_model_forward.4} parent=71 // pred_check_branch
        %2495 = sbr.rel (%p2493) target = $region80
      $region79: #{ts_model_forward.4} parent=71 // pred_region
        _
      $region80: #{ts_model_forward.4} parent=71 // pred_fallthru
        _
    $region72: #{ts_model_forward.4} parent=5 // pred_fallthru
      _
    %p2496 = scmp.le.s32.totalorder 2, %s19
    // Predicated region
    $region81: #{ts_model_forward.4} parent=5 // pred_check
      %p2497 = pneg %p2496
    $region82: #{ts_model_forward.4} parent=5 // pred_check_branch
      %2499 = sbr.rel (%p2497) target = $region84
    $region83: #{ts_model_forward.4} parent=5 // pred_region
      %s2500 = ssub.s32 %s19, 2
      // Predicated region
      $region85: #{ts_model_forward.4} parent=83 // pred_check
        %p2501 = pneg %p398
      $region86: #{ts_model_forward.4} parent=83 // pred_check_branch
        %2503 = sbr.rel (%p2501) target = $region88
      $region87: #{ts_model_forward.4} parent=83 // pred_region
        %p2504 = scmp.lt.s32.totalorder %s30, 1
        %s2505 = scalar_select %p2504, %s30, 1
        %s2506 = smul.addr %s2505, 3
        %s2507 = smul.addr %s2506, 8
        %s2508 = scalar_lea.vmem %s13, %s2507
      $region88: #{ts_model_forward.4} parent=83 // pred_fallthru
        _
    $region84: #{ts_model_forward.4} parent=5 // pred_fallthru
      _
  $region6: #{ts_model_forward.4} parent=0 // loop_footer
    %s23 = sadd.s32 1, %s19
  $region7: #{ts_model_forward.4} parent=0 // loop_footer_branch
    %18 = sbr.rel target = $region3
  $region8: #{ts_model_forward.4} parent=0 // loop_exit
    _

</llo_original>
